<compile_context>
chip_gen: v6e
topology: v6e:2x2x1
jax: 0.10.0
libtpu: 0.0.40
codegen_flags: <defaults>
</compile_context>

<pallas_src>
import jax
import jax.numpy as jnp
from jax import lax
from jax.experimental import pallas as pl
from jax.experimental.pallas import tpu as pltpu


# ----------------------------- configuration -------------------------------
class Cfg:
    d_backbone = 32
    title_emb_dim = 16
    cat_emb_dim = 8
    n_categories = 10
    n_subcategories = 20
    n_users = 50
    total_emb_dim = 16 + 2 * 8          # title + category + subcategory
    st_hist_len = 4
    long_term_method = "embedding"
    long_short_term_method = "ini"      # GRU initialised with long-term user emb
    p_dropout = 0.2                     # identity in eval mode
    p_user_dropout = 0.5                # identity in eval mode
    bias = True
    catg_features = ("category_index", "subcategory_index")


TILE_M = 128                            # titles per grid step (title encoder)
TILE_B = 128                            # batch rows per grid step (user/scorer)


def _cdiv(a, b):
    return -(-a // b)


def _const_spec(arr):
    """Full-array block with a grid-invariant index_map (no re-DMA per step)."""
    return pl.BlockSpec(arr.shape, lambda i, _nd=arr.ndim: (0,) * _nd)


# ---------------- kernel 1: batched news-title encoder ---------------------
def _title_kernel(x_ref, len_ref, watt_ref, batt_ref, vatt_ref,
                  whead_ref, bhead_ref, out_ref):
    """Additive-attention pooling over title tokens + linear head for a tile
    of TILE_M titles.

    x_ref:   (TM, T, D)  backbone token embeddings
    len_ref: (TM, 1)     int32 valid-token counts (0 => fully padded title)
    out_ref: (E, TM)     pooled + projected titles, lane-dense (transposed)
    """
    TM, T, D = x_ref.shape

    x = x_ref[...]                                            # (TM, T, D)
    x2 = x.reshape(TM * T, D)                                 # free collapse of leading dims

    # MXU: (TM*T, D) @ (D, Hh)  — M dim = TM*T = 1024 rows per step
    e2 = jnp.tanh(jnp.dot(x2, watt_ref[...],
                          preferred_element_type=jnp.float32) + batt_ref[...])   # (TM*T, Hh)
    # MXU: attention logits via (Hh, 1) column instead of VPU-mul + XLU-reduce
    s = jnp.dot(e2, vatt_ref[...],
                preferred_element_type=jnp.float32).reshape(TM, T)               # (TM, T)

    # rebuild token mask from lengths (no mask DMA)
    lens = len_ref[...]                                       # (TM, 1) int32
    tpos = lax.broadcasted_iota(jnp.int32, (TM, T), 1)
    valid = tpos < lens                                       # (TM, T) bool

    s = jnp.where(valid, s, jnp.float32(-1e9))
    s = s - jnp.max(s, axis=1, keepdims=True)
    p = jnp.exp(s) * valid.astype(jnp.float32)                # fully-masked title -> all zeros
    denom = jnp.maximum(jnp.sum(p, axis=1, keepdims=True), jnp.float32(1e-9))
    p = p * pl.reciprocal(denom, approx=True)                 # (TM, T)

    pooled = jnp.sum(p[:, :, None] * x, axis=1)               # (TM, D)
    out = jnp.dot(pooled, whead_ref[...],
                  preferred_element_type=jnp.float32) + bhead_ref[...]           # (TM, E)
    # one small XLU transpose per tile buys an unmasked, lane-dense store
    out_ref[...] = jnp.transpose(out).astype(out_ref.dtype)   # (E, TM)


def encode_titles(params, title_emb, title_mask):
    """title_emb: (B, N, T, D), title_mask: (B, N, T) -> (B, N, title_emb_dim)."""
    B, N, T, D = title_emb.shape
    E = params["w_head"].shape[1]
    M = B * N

    x = title_emb.reshape(M, T, D).astype(jnp.float32)        # metadata-only reshape
    lens = jnp.sum(title_mask.reshape(M, T), axis=1, keepdims=True).astype(jnp.int32)

    n_steps = _cdiv(M, TILE_M)
    if n_steps > 1 and n_steps % 2:
        n_steps += 1                                          # even step count (v7x dual-TC)
    M_pad = n_steps * TILE_M
    pad = M_pad - M
    if pad:
        x = jnp.pad(x, ((0, pad), (0, 0), (0, 0)))
        lens = jnp.pad(lens, ((0, pad), (0, 0)))

    out_t = pl.pallas_call(
        _title_kernel,
        out_shape=jax.ShapeDtypeStruct((E, M_pad), jnp.float32),
        grid=(n_steps,),
        in_specs=[
            pl.BlockSpec((TILE_M, T, D), lambda i: (i, 0, 0)),
            pl.BlockSpec((TILE_M, 1), lambda i: (i, 0)),
            _const_spec(params["w_att"]), _const_spec(params["b_att"]),
            _const_spec(params["v_att"]),
            _const_spec(params["w_head"]), _const_spec(params["b_head"]),
        ],
        out_specs=pl.BlockSpec((E, TILE_M), lambda i: (0, i)),   # lane-dense (E, 128) blocks
        compiler_params=pltpu.CompilerParams(dimension_semantics=("parallel",)),
    )(x, lens, params["w_att"], params["b_att"], params["v_att"],
      params["w_head"], params["b_head"])
    return jnp.transpose(out_t[:, :M]).reshape(B, N, E)


# ------------- kernel 2: fused user GRU (masked) + dot-product scorer ------
def _user_score_kernel(x_ref, len_ref, h0_ref, wih_ref, whh_ref,
                       bx_ref, bh_ref, c_ref, u_ref, r_ref):
    """Length-gated GRU (pack_padded_sequence final-hidden semantics: each
    sequence runs for its first `len` steps) + candidate dot-product scorer.

    x_ref: (S, TB, E) time-major short-term history embeddings
    len_ref: (TB, 1) f32 short-term lengths
    h0_ref: (TB, H) long-term user embedding (GRU initial hidden, 'ini')
    wih_ref: (E, 3H), whh_ref: (H, 3H); gate order [r, z, n] (PyTorch)
    bx_ref: (1, 3H) r/z input+hidden biases pre-folded; bh_ref: (1, 3H) = [0,0,b_hn]
    c_ref: (TB, Nc, E) candidate news embeddings
    u_ref: (TB, H) final hidden; r_ref: (TB, Nc) scores
    """
    S, TB, E = x_ref.shape
    H = h0_ref.shape[1]

    whh = whh_ref[...]
    bh = bh_ref[...]
    lens = len_ref[...]                                       # (TB, 1)
    h = h0_ref[...]                                           # (TB, H)

    # hoisted input-path matmul: one (S*TB, E) @ (E, 3H) MXU push
    x2 = x_ref[...].reshape(S * TB, E)
    gx_all = jnp.dot(x2, wih_ref[...],
                     preferred_element_type=jnp.float32) + bx_ref[...]   # (S*TB, 3H)

    for t in range(S):                                        # unrolled (S small, static)
        gx = gx_all[t * TB:(t + 1) * TB, :]                   # static, sublane-aligned slice
        gh = jnp.dot(h, whh, preferred_element_type=jnp.float32) + bh     # (TB, 3H)
        r = jax.nn.sigmoid(gx[:, :H] + gh[:, :H])
        z = jax.nn.sigmoid(gx[:, H:2 * H] + gh[:, H:2 * H])
        n = jnp.tanh(gx[:, 2 * H:] + r * gh[:, 2 * H:])       # b_hn already inside gh
        h_new = (1.0 - z) * n + z * h
        m_t = (lens > jnp.float32(t)).astype(jnp.float32)     # run first `len` steps
        h = m_t * h_new + (1.0 - m_t) * h

    u_ref[...] = h.astype(u_ref.dtype)
    c = c_ref[...]                                            # (TB, Nc, E)
    r_ref[...] = jnp.sum(c * h[:, None, :], axis=-1).astype(r_ref.dtype)


def user_score(h_st, gru_lens, h0, wih, whh, bx, bh, cand):
    """h_st: (B, S, E); gru_lens: (B, 1); h0: (B, H); cand: (B, Nc, E)."""
    B, S, E = h_st.shape
    H = h0.shape[1]
    Nc = cand.shape[1]

    if B <= TILE_B:
        B_pad = _cdiv(B, 8) * 8                               # sublane multiple
        tile_b = B_pad
    else:
        B_pad = _cdiv(B, TILE_B) * TILE_B
        tile_b = TILE_B
    padb = B_pad - B

    x_tm = jnp.transpose(h_st, (1, 0, 2)).astype(jnp.float32)  # (S, B, E) time-major (tiny)
    if padb:
        x_tm = jnp.pad(x_tm, ((0, 0), (0, padb), (0, 0)))
        gru_lens = jnp.pad(gru_lens, ((0, padb), (0, 0)))
        h0 = jnp.pad(h0, ((0, padb), (0, 0)))
        cand = jnp.pad(cand, ((0, padb), (0, 0), (0, 0)))

    u, r = pl.pallas_call(
        _user_score_kernel,
        out_shape=(jax.ShapeDtypeStruct((B_pad, H), jnp.float32),
                   jax.ShapeDtypeStruct((B_pad, Nc), jnp.float32)),
        grid=(B_pad // tile_b,),
        in_specs=[
            pl.BlockSpec((S, tile_b, E), lambda i: (0, i, 0)),
            pl.BlockSpec((tile_b, 1), lambda i: (i, 0)),
            pl.BlockSpec((tile_b, H), lambda i: (i, 0)),
            _const_spec(wih), _const_spec(whh), _const_spec(bx), _const_spec(bh),
            pl.BlockSpec((tile_b, Nc, E), lambda i: (i, 0, 0)),
        ],
        out_specs=(pl.BlockSpec((tile_b, H), lambda i: (i, 0)),
                   pl.BlockSpec((tile_b, Nc), lambda i: (i, 0))),
        compiler_params=pltpu.CompilerParams(dimension_semantics=("parallel",)),
    )(x_tm, gru_lens, h0, wih, whh, bx, bh, cand.astype(jnp.float32))
    return u[:B], r[:B]


# ----------------------------- model (glue + kernels) ----------------------
def init_params(key, cfg):
    ks = jax.random.split(key, 16)
    D = cfg.d_backbone
    Ha = cfg.title_emb_dim          # additive-attention hidden size
    Et = cfg.title_emb_dim
    Ec = cfg.cat_emb_dim
    E = cfg.total_emb_dim           # GRU input & hidden ('ini' => hidden == total_emb_dim)

    def nrm(k, shape, scale=0.05):
        return scale * jax.random.normal(k, shape, dtype=jnp.float32)

    user_table = nrm(ks[7], (cfg.n_users + 1, E)).at[0].set(0.0)   # padding_idx=0

    # GRU weights, PyTorch gate order [r, z, n], fused host-side for the kernel.
    w_ih = [nrm(ks[8 + g], (E, E)) for g in range(3)]
    w_hh = [nrm(ks[11 + g], (E, E)) for g in range(3)]
    kb = jax.random.split(ks[14], 6)
    b_ih = [nrm(kb[g], (1, E)) for g in range(3)]
    b_hh = [nrm(kb[3 + g], (1, E)) for g in range(3)]

    return {
        "w_att": nrm(ks[0], (D, Ha)),                          # AdditiveAttention W
        "b_att": nrm(ks[1], (1, Ha)),
        "v_att": nrm(ks[2], (Ha, 1)),                          # attention query (MXU column)
        "w_head": nrm(ks[3], (D, Et)),                         # TextEncoder linear head
        "b_head": nrm(ks[4], (1, Et)),
        "cat_table": nrm(ks[5], (cfg.n_categories + 1, Ec)),
        "subcat_table": nrm(ks[6], (cfg.n_subcategories + 1, Ec)),
        "user_table": user_table,
        "gru_wih": jnp.concatenate(w_ih, axis=1),              # (E, 3H), gates [r,z,n]
        "gru_whh": jnp.concatenate(w_hh, axis=1),              # (H, 3H)
        # r/z input+hidden biases fold together; b_hn must stay on the h-path
        # (PyTorch: n = tanh(W_in x + b_in + r*(W_hn h + b_hn))).
        "gru_bx": jnp.concatenate([b_ih[0] + b_hh[0],
                                   b_ih[1] + b_hh[1],
                                   b_ih[2]], axis=1),          # (1, 3H)
        "gru_bh": jnp.concatenate([jnp.zeros((1, E), jnp.float32),
                                   jnp.zeros((1, E), jnp.float32),
                                   b_hh[2]], axis=1),          # (1, 3H)
    }


def lstur_forward(params, cfg, user_ids,
                  hist_title_emb, hist_title_mask,
                  cand_title_emb, cand_title_mask,
                  hist_cat_idxs, cand_cat_idxs,
                  hist_subcat_idxs, cand_subcat_idxs,
                  return_embeddings=False):
    B = hist_title_emb.shape[0]

    # ---- title encoder: two direct launches, no concat/slice HBM passes ----
    t_hist = encode_titles(params, hist_title_emb, hist_title_mask)      # (B, Nh, Et)
    t_cand = encode_titles(params, cand_title_emb, cand_title_mask)      # (B, Nc, Et)

    # ---- news embeddings: title ++ category ++ subcategory (tiny gathers) --
    h = jnp.concatenate([t_hist,
                         jnp.take(params["cat_table"], hist_cat_idxs, axis=0),
                         jnp.take(params["subcat_table"], hist_subcat_idxs, axis=0)],
                        axis=2)                                          # (B, Nh, E)
    c = jnp.concatenate([t_cand,
                         jnp.take(params["cat_table"], cand_cat_idxs, axis=0),
                         jnp.take(params["subcat_table"], cand_subcat_idxs, axis=0)],
                        axis=2)                                          # (B, Nc, E)

    # ---- user encoder ('embedding' long-term, 'ini' short-term) + scorer --
    hm = (jnp.sum(hist_title_mask, axis=2) > 0).astype(jnp.float32)      # (B, Nh)
    u_lt = jnp.take(params["user_table"], user_ids[:, 0], axis=0)        # (B, E)
    # nn.Dropout(p_user_dropout) -> identity in eval mode
    h_st = h[:, :cfg.st_hist_len].astype(jnp.float32)                    # (B, S, E)
    gru_lens = jnp.sum(hm[:, :cfg.st_hist_len], axis=1, keepdims=True)   # (B, 1)

    # TODO(synk): rec_model is injected externally in the PyTorch module;
    # implemented here as the standard LSTUR dot-product scorer (fused into the GRU kernel).
    u, r = user_score(h_st, gru_lens, u_lt,
                      params["gru_wih"], params["gru_whh"],
                      params["gru_bx"], params["gru_bh"],
                      c.astype(jnp.float32))                             # (B, E), (B, Nc)
    u = u[:, None, :]                                                    # (B, 1, E)

    if return_embeddings:
        return r, u, c
    return r


# ----------------------------------- main -----------------------------------
if __name__ == "__main__":
    cfg = Cfg()
    key = jax.random.PRNGKey(0)
    kp, k1, k2, k3, k4, k5, k6, k7, k8 = jax.random.split(key, 9)
    params = init_params(kp, cfg)

    B, N_hist, N_cand, T = 2, 6, 4, 8
    D = cfg.d_backbone

    hist_title_emb = jax.random.normal(k1, (B, N_hist, T, D), dtype=jnp.float32)
    cand_title_emb = jax.random.normal(k2, (B, N_cand, T, D), dtype=jnp.float32)

    tok = jnp.arange(T)
    hist_tok_lens = jax.random.randint(k3, (B, N_hist), 2, T + 1)
    cand_tok_lens = jax.random.randint(k4, (B, N_cand), 2, T + 1)
    # end-padded history (pack_padded_sequence semantics); short-term lens >= 1
    hist_valid = jnp.array([[1, 1, 1, 1, 1, 0],
                            [1, 1, 1, 0, 0, 0]], dtype=jnp.float32)
    hist_title_mask = (tok[None, None, :] < hist_tok_lens[:, :, None]).astype(jnp.float32)
    hist_title_mask = hist_title_mask * hist_valid[:, :, None]
    cand_title_mask = (tok[None, None, :] < cand_tok_lens[:, :, None]).astype(jnp.float32)

    hist_cat = jax.random.randint(k5, (B, N_hist), 0, cfg.n_categories + 1)
    cand_cat = jax.random.randint(k6, (B, N_cand), 0, cfg.n_categories + 1)
    hist_sub = jax.random.randint(k7, (B, N_hist), 0, cfg.n_subcategories + 1)
    cand_sub = jax.random.randint(k8, (B, N_cand), 0, cfg.n_subcategories + 1)
    user_ids = jnp.array([[3], [7]], dtype=jnp.int32)

    r, u, c = lstur_forward(params, cfg, user_ids,
                            hist_title_emb, hist_title_mask,
                            cand_title_emb, cand_title_mask,
                            hist_cat, cand_cat, hist_sub, cand_sub,
                            return_embeddings=True)
    jax.block_until_ready((r, u, c))
    assert r.shape == (B, N_cand)
    assert u.shape == (B, 1, cfg.total_emb_dim)
    assert c.shape == (B, N_cand, cfg.total_emb_dim)
    assert bool(jnp.all(jnp.isfinite(r)))
    assert bool(jnp.all(jnp.isfinite(u)))
    print("KERNEL_OK")
</pallas_src>

<mosaic_0001>
module attributes {stable_mosaic.version = 11 : i64} {
  func.func @_title_kernel(%arg0: i32, %arg1: memref<128x8x32xf32, #tpu.memory_space<vmem>>, %arg2: memref<128x1xi32, #tpu.memory_space<vmem>>, %arg3: memref<32x16xf32, #tpu.memory_space<vmem>>, %arg4: memref<1x16xf32, #tpu.memory_space<vmem>>, %arg5: memref<16x1xf32, #tpu.memory_space<vmem>>, %arg6: memref<32x16xf32, #tpu.memory_space<vmem>>, %arg7: memref<1x16xf32, #tpu.memory_space<vmem>>, %arg8: memref<16x128xf32, #tpu.memory_space<vmem>>) attributes {dimension_semantics = [#tpu.dimension_semantics<parallel>], iteration_bounds = array<i64: 1>, scalar_prefetch = 0 : i64, scratch_operands = 0 : i64, tpu.core_type = #tpu.core_type<tc>, window_params = [{transform_indices = @transform_0, window_bounds = array<i64: 128, 8, 32>}, {transform_indices = @transform_1, window_bounds = array<i64: 128, 1>}, {pipeline_mode = #tpu.pipeline_mode<synchronous>, transform_indices = @transform_2, window_bounds = array<i64: 32, 16>}, {pipeline_mode = #tpu.pipeline_mode<synchronous>, transform_indices = @transform_3, window_bounds = array<i64: 1, 16>}, {pipeline_mode = #tpu.pipeline_mode<synchronous>, transform_indices = @transform_4, window_bounds = array<i64: 16, 1>}, {pipeline_mode = #tpu.pipeline_mode<synchronous>, transform_indices = @transform_5, window_bounds = array<i64: 32, 16>}, {pipeline_mode = #tpu.pipeline_mode<synchronous>, transform_indices = @transform_6, window_bounds = array<i64: 1, 16>}, {transform_indices = @transform_7, window_bounds = array<i64: 16, 128>}]} {
    %c0 = arith.constant 0 : index
    %c0_0 = arith.constant 0 : index
    %c0_1 = arith.constant 0 : index
    %0 = vector.load %arg1[%c0, %c0_0, %c0_1] : memref<128x8x32xf32, #tpu.memory_space<vmem>>, vector<128x8x32xf32>
    %1 = vector.shape_cast %0 : vector<128x8x32xf32> to vector<1024x32xf32>
    %c0_2 = arith.constant 0 : index
    %c0_3 = arith.constant 0 : index
    %2 = vector.load %arg3[%c0_2, %c0_3] : memref<32x16xf32, #tpu.memory_space<vmem>>, vector<32x16xf32>
    %cst = arith.constant dense<0.000000e+00> : vector<1024x16xf32>
    %3 = tpu.matmul %1, %2, %cst {dimension_numbers = #tpu.dot_dimension_numbers<[1], [0], [0], [1], [0, 0, 1, 1], [], []>} : vector<1024x32xf32>, vector<32x16xf32>, vector<1024x16xf32> -> vector<1024x16xf32>
    %c0_4 = arith.constant 0 : index
    %c0_5 = arith.constant 0 : index
    %4 = vector.load %arg4[%c0_4, %c0_5] : memref<1x16xf32, #tpu.memory_space<vmem>>, vector<1x16xf32>
    %5 = vector.broadcast %4 : vector<1x16xf32> to vector<1024x16xf32>
    %6 = arith.addf %3, %5 : vector<1024x16xf32>
    %7 = math.tanh %6 : vector<1024x16xf32>
    %c0_6 = arith.constant 0 : index
    %c0_7 = arith.constant 0 : index
    %8 = vector.load %arg5[%c0_6, %c0_7] : memref<16x1xf32, #tpu.memory_space<vmem>>, vector<16x1xf32>
    %cst_8 = arith.constant dense<0.000000e+00> : vector<1024x1xf32>
    %9 = tpu.matmul %7, %8, %cst_8 {dimension_numbers = #tpu.dot_dimension_numbers<[1], [0], [0], [1], [0, 0, 1, 1], [], []>} : vector<1024x16xf32>, vector<16x1xf32>, vector<1024x1xf32> -> vector<1024x1xf32>
    %10 = vector.shape_cast %9 : vector<1024x1xf32> to vector<128x8xf32>
    %c0_9 = arith.constant 0 : index
    %c0_10 = arith.constant 0 : index
    %11 = vector.load %arg2[%c0_9, %c0_10] : memref<128x1xi32, #tpu.memory_space<vmem>>, vector<128x1xi32>
    %12 = tpu.iota {dimensions = array<i32: 1>} : vector<128x8xi32>
    %13 = vector.broadcast %11 : vector<128x1xi32> to vector<128x8xi32>
    %14 = arith.cmpi slt, %12, %13 : vector<128x8xi32>
    %cst_11 = arith.constant -1.000000e+09 : f32
    %15 = vector.broadcast %cst_11 : f32 to vector<128x8xf32>
    %16 = arith.select %14, %10, %15 : vector<128x8xi1>, vector<128x8xf32>
    %cst_12 = arith.constant dense<0xFF800000> : vector<128xf32>
    %17 = vector.multi_reduction <maximumf>, %16, %cst_12 [1] : vector<128x8xf32> to vector<128xf32>
    %18 = vector.shape_cast %17 : vector<128xf32> to vector<128x1xf32>
    %19 = vector.broadcast %18 : vector<128x1xf32> to vector<128x8xf32>
    %20 = arith.subf %16, %19 : vector<128x8xf32>
    %21 = math.exp %20 : vector<128x8xf32>
    %22 = arith.extui %14 : vector<128x8xi1> to vector<128x8xi32>
    %23 = arith.sitofp %22 : vector<128x8xi32> to vector<128x8xf32>
    %24 = arith.mulf %21, %23 : vector<128x8xf32>
    %cst_13 = arith.constant dense<0.000000e+00> : vector<128xf32>
    %25 = vector.multi_reduction <add>, %24, %cst_13 [1] : vector<128x8xf32> to vector<128xf32>
    %26 = vector.shape_cast %25 : vector<128xf32> to vector<128x1xf32>
    %cst_14 = arith.constant 9.99999971E-10 : f32
    %27 = vector.broadcast %cst_14 : f32 to vector<128x1xf32>
    %28 = arith.maximumf %26, %27 : vector<128x1xf32>
    %29 = tpu.reciprocal %28 {approx = true} : vector<128x1xf32> -> vector<128x1xf32>
    %30 = vector.broadcast %29 : vector<128x1xf32> to vector<128x8xf32>
    %31 = arith.mulf %24, %30 : vector<128x8xf32>
    %32 = vector.shape_cast %31 : vector<128x8xf32> to vector<128x8x1xf32>
    %33 = vector.broadcast %32 : vector<128x8x1xf32> to vector<128x8x32xf32>
    %34 = arith.mulf %33, %0 : vector<128x8x32xf32>
    %cst_15 = arith.constant dense<0.000000e+00> : vector<128x32xf32>
    %35 = vector.multi_reduction <add>, %34, %cst_15 [1] : vector<128x8x32xf32> to vector<128x32xf32>
    %c0_16 = arith.constant 0 : index
    %c0_17 = arith.constant 0 : index
    %36 = vector.load %arg6[%c0_16, %c0_17] : memref<32x16xf32, #tpu.memory_space<vmem>>, vector<32x16xf32>
    %cst_18 = arith.constant dense<0.000000e+00> : vector<128x16xf32>
    %37 = tpu.matmul %35, %36, %cst_18 {dimension_numbers = #tpu.dot_dimension_numbers<[1], [0], [0], [1], [0, 0, 1, 1], [], []>} : vector<128x32xf32>, vector<32x16xf32>, vector<128x16xf32> -> vector<128x16xf32>
    %c0_19 = arith.constant 0 : index
    %c0_20 = arith.constant 0 : index
    %38 = vector.load %arg7[%c0_19, %c0_20] : memref<1x16xf32, #tpu.memory_space<vmem>>, vector<1x16xf32>
    %39 = vector.broadcast %38 : vector<1x16xf32> to vector<128x16xf32>
    %40 = arith.addf %37, %39 : vector<128x16xf32>
    %41 = tpu.transpose %40, [1, 0] : vector<128x16xf32> -> vector<16x128xf32>
    %c0_21 = arith.constant 0 : index
    %c0_22 = arith.constant 0 : index
    %42 = vector.load %arg8[%c0_21, %c0_22] : memref<16x128xf32, #tpu.memory_space<vmem>>, vector<16x128xf32>
    tpu.vector_store %arg8[%c0_21, %c0_22], %41 {strides = array<i32>} : memref<16x128xf32, #tpu.memory_space<vmem>>, vector<16x128xf32>,
    return
  }
  func.func @transform_0(%arg0: i32) -> (i32, i32, i32) {
    %c0_i32 = arith.constant 0 : i32
    %c0_i32_0 = arith.constant 0 : i32
    %c0_i32_1 = arith.constant 0 : i32
    return %arg0, %c0_i32, %c0_i32_0 : i32, i32, i32
  }
  func.func @transform_1(%arg0: i32) -> (i32, i32) {
    %c0_i32 = arith.constant 0 : i32
    %c0_i32_0 = arith.constant 0 : i32
    return %arg0, %c0_i32 : i32, i32
  }
  func.func @transform_2(%arg0: i32) -> (i32, i32) {
    %c0_i32 = arith.constant 0 : i32
    %c0_i32_0 = arith.constant 0 : i32
    %c0_i32_1 = arith.constant 0 : i32
    return %c0_i32, %c0_i32_0 : i32, i32
  }
  func.func @transform_3(%arg0: i32) -> (i32, i32) {
    %c0_i32 = arith.constant 0 : i32
    %c0_i32_0 = arith.constant 0 : i32
    %c0_i32_1 = arith.constant 0 : i32
    return %c0_i32, %c0_i32_0 : i32, i32
  }
  func.func @transform_4(%arg0: i32) -> (i32, i32) {
    %c0_i32 = arith.constant 0 : i32
    %c0_i32_0 = arith.constant 0 : i32
    %c0_i32_1 = arith.constant 0 : i32
    return %c0_i32, %c0_i32_0 : i32, i32
  }
  func.func @transform_5(%arg0: i32) -> (i32, i32) {
    %c0_i32 = arith.constant 0 : i32
    %c0_i32_0 = arith.constant 0 : i32
    %c0_i32_1 = arith.constant 0 : i32
    return %c0_i32, %c0_i32_0 : i32, i32
  }
  func.func @transform_6(%arg0: i32) -> (i32, i32) {
    %c0_i32 = arith.constant 0 : i32
    %c0_i32_0 = arith.constant 0 : i32
    %c0_i32_1 = arith.constant 0 : i32
    return %c0_i32, %c0_i32_0 : i32, i32
  }
  func.func @transform_7(%arg0: i32) -> (i32, i32) {
    %c0_i32 = arith.constant 0 : i32
    %c0_i32_0 = arith.constant 0 : i32
    return %c0_i32, %arg0 : i32, i32
  }
}

</mosaic_0001>

<llo_original>
// kernel: tpu_custom_call.1
$region0: #{tpu_custom_call.1}
  #allocation0 [shape = 'u32[]', space=smem, size = 0x4, offset = 0x4, fixed_abs, tag = 'smem constant byte address 0x4 - core index']
  #allocation1 [shape = 'u32[144,128]{1,0:T(1,128)}', space=vmem, size = 0x12000, scoped, tag = 'internal scratch']
  %s0 = inlined_call_operand.vmem [shape: f32[128,8,32], index: 0, kind: input, shape index: {}]
  %s1 = inlined_call_operand.vmem [shape: s32[128,1], index: 1, kind: input, shape index: {}]
  %s2 = inlined_call_operand.vmem [shape: f32[32,16], index: 2, kind: input, shape index: {}]
  %s3 = inlined_call_operand.vmem [shape: f32[1,16], index: 3, kind: input, shape index: {}]
  %s4 = inlined_call_operand.vmem [shape: f32[16,1], index: 4, kind: input, shape index: {}]
  %s5 = inlined_call_operand.vmem [shape: f32[32,16], index: 5, kind: input, shape index: {}]
  %s6 = inlined_call_operand.vmem [shape: f32[1,16], index: 6, kind: input, shape index: {}]
  %s7 = inlined_call_operand.hbm [shape: f32[16,128], index: 7, kind: output, shape index: {}]
  %s8 = sld [smem:[#allocation0]]
  $region38: #{tpu_custom_call.1} parent=0
    _
  %s10 = ssub.s32 1, %s8
  %s11 = scalar_select 0, %s10, %s8
  $region1: #{tpu_custom_call.1} parent=0
    #allocation2 [shape = 'u8[8192]{0}', space=vmem, size = 0x2000, scoped, tag = 'output window, operand 0, single buffered']
    #allocation3 [shape = 's32[1]{0}', space=sflag, size = 0x4, scoped, tag = 'scoped memory for tpu_custom_call.1']
    %12 = vsyncpa [#allocation3], 0
    // Predicated region
    $region2: #{tpu_custom_call.1} parent=1 // pred_check
      _
    $region3: #{tpu_custom_call.1} parent=1 // pred_check_branch
      %14 = sbr.rel (0) target = $region5
    $region4: #{tpu_custom_call.1} parent=1 // pred_region
      _
    $region5: #{tpu_custom_call.1} parent=1 // pred_fallthru
      _
    // Predicated region
    $region6: #{tpu_custom_call.1} parent=1 // pred_check
      _
    $region7: #{tpu_custom_call.1} parent=1 // pred_check_branch
      %16 = sbr.rel (0) target = $region9
    $region8: #{tpu_custom_call.1} parent=1 // pred_region
      _
    $region9: #{tpu_custom_call.1} parent=1 // pred_fallthru
      _
    // Predicated region
    $region10: #{tpu_custom_call.1} parent=1 // pred_check
      _
    $region11: #{tpu_custom_call.1} parent=1 // pred_check_branch
      %18 = sbr.rel (0) target = $region13
    $region12: #{tpu_custom_call.1} parent=1 // pred_region
      _
    $region13: #{tpu_custom_call.1} parent=1 // pred_fallthru
      _
    // Predicated region
    $region14: #{tpu_custom_call.1} parent=1 // pred_check
      _
    $region15: #{tpu_custom_call.1} parent=1 // pred_check_branch
      %20 = sbr.rel (0) target = $region17
    $region16: #{tpu_custom_call.1} parent=1 // pred_region
      _
    $region17: #{tpu_custom_call.1} parent=1 // pred_fallthru
      _
    // Predicated region
    $region18: #{tpu_custom_call.1} parent=1 // pred_check
      _
    $region19: #{tpu_custom_call.1} parent=1 // pred_check_branch
      %22 = sbr.rel (0) target = $region21
    $region20: #{tpu_custom_call.1} parent=1 // pred_region
      _
    $region21: #{tpu_custom_call.1} parent=1 // pred_fallthru
      _
    // Predicated region
    $region22: #{tpu_custom_call.1} parent=1 // pred_check
      _
    $region23: #{tpu_custom_call.1} parent=1 // pred_check_branch
      %24 = sbr.rel (0) target = $region25
    $region24: #{tpu_custom_call.1} parent=1 // pred_region
      _
    $region25: #{tpu_custom_call.1} parent=1 // pred_fallthru
      _
    // Predicated region
    $region26: #{tpu_custom_call.1} parent=1 // pred_check
      _
    $region27: #{tpu_custom_call.1} parent=1 // pred_check_branch
      %26 = sbr.rel (0) target = $region29
    $region28: #{tpu_custom_call.1} parent=1 // pred_region
      _
    $region29: #{tpu_custom_call.1} parent=1 // pred_fallthru
      _
    %v27 = vld [vmem:[%s0] sm:$0xff]
    %v28 = vld [vmem:[%s0 + $0x8] sm:$0xff]
    %v29 = vld [vmem:[%s0 + $0x10] sm:$0xff]
    %v30 = vld [vmem:[%s0 + $0x18] sm:$0xff]
    %v31 = vld [vmem:[%s0 + $0x20] sm:$0xff]
    %v32 = vld [vmem:[%s0 + $0x28] sm:$0xff]
    %v33 = vld [vmem:[%s0 + $0x30] sm:$0xff]
    %v34 = vld [vmem:[%s0 + $0x38] sm:$0xff]
    %v35 = vld [vmem:[%s0 + $0x40] sm:$0xff]
    %v36 = vld [vmem:[%s0 + $0x48] sm:$0xff]
    %v37 = vld [vmem:[%s0 + $0x50] sm:$0xff]
    %v38 = vld [vmem:[%s0 + $0x58] sm:$0xff]
    %v39 = vld [vmem:[%s0 + $0x60] sm:$0xff]
    %v40 = vld [vmem:[%s0 + $0x68] sm:$0xff]
    %v41 = vld [vmem:[%s0 + $0x70] sm:$0xff]
    %v42 = vld [vmem:[%s0 + $0x78] sm:$0xff]
    %v43 = vld [vmem:[%s0 + $0x80] sm:$0xff]
    %v44 = vld [vmem:[%s0 + $0x88] sm:$0xff]
    %v45 = vld [vmem:[%s0 + $0x90] sm:$0xff]
    %v46 = vld [vmem:[%s0 + $0x98] sm:$0xff]
    %v47 = vld [vmem:[%s0 + $0xa0] sm:$0xff]
    %v48 = vld [vmem:[%s0 + $0xa8] sm:$0xff]
    %v49 = vld [vmem:[%s0 + $0xb0] sm:$0xff]
    %v50 = vld [vmem:[%s0 + $0xb8] sm:$0xff]
    %v51 = vld [vmem:[%s0 + $0xc0] sm:$0xff]
    %v52 = vld [vmem:[%s0 + $0xc8] sm:$0xff]
    %v53 = vld [vmem:[%s0 + $0xd0] sm:$0xff]
    %v54 = vld [vmem:[%s0 + $0xd8] sm:$0xff]
    %v55 = vld [vmem:[%s0 + $0xe0] sm:$0xff]
    %v56 = vld [vmem:[%s0 + $0xe8] sm:$0xff]
    %v57 = vld [vmem:[%s0 + $0xf0] sm:$0xff]
    %v58 = vld [vmem:[%s0 + $0xf8] sm:$0xff]
    %v59 = vld [vmem:[%s0 + $0x100] sm:$0xff]
    %v60 = vld [vmem:[%s0 + $0x108] sm:$0xff]
    %v61 = vld [vmem:[%s0 + $0x110] sm:$0xff]
    %v62 = vld [vmem:[%s0 + $0x118] sm:$0xff]
    %v63 = vld [vmem:[%s0 + $0x120] sm:$0xff]
    %v64 = vld [vmem:[%s0 + $0x128] sm:$0xff]
    %v65 = vld [vmem:[%s0 + $0x130] sm:$0xff]
    %v66 = vld [vmem:[%s0 + $0x138] sm:$0xff]
    %v67 = vld [vmem:[%s0 + $0x140] sm:$0xff]
    %v68 = vld [vmem:[%s0 + $0x148] sm:$0xff]
    %v69 = vld [vmem:[%s0 + $0x150] sm:$0xff]
    %v70 = vld [vmem:[%s0 + $0x158] sm:$0xff]
    %v71 = vld [vmem:[%s0 + $0x160] sm:$0xff]
    %v72 = vld [vmem:[%s0 + $0x168] sm:$0xff]
    %v73 = vld [vmem:[%s0 + $0x170] sm:$0xff]
    %v74 = vld [vmem:[%s0 + $0x178] sm:$0xff]
    %v75 = vld [vmem:[%s0 + $0x180] sm:$0xff]
    %v76 = vld [vmem:[%s0 + $0x188] sm:$0xff]
    %v77 = vld [vmem:[%s0 + $0x190] sm:$0xff]
    %v78 = vld [vmem:[%s0 + $0x198] sm:$0xff]
    %v79 = vld [vmem:[%s0 + $0x1a0] sm:$0xff]
    %v80 = vld [vmem:[%s0 + $0x1a8] sm:$0xff]
    %v81 = vld [vmem:[%s0 + $0x1b0] sm:$0xff]
    %v82 = vld [vmem:[%s0 + $0x1b8] sm:$0xff]
    %v83 = vld [vmem:[%s0 + $0x1c0] sm:$0xff]
    %v84 = vld [vmem:[%s0 + $0x1c8] sm:$0xff]
    %v85 = vld [vmem:[%s0 + $0x1d0] sm:$0xff]
    %v86 = vld [vmem:[%s0 + $0x1d8] sm:$0xff]
    %v87 = vld [vmem:[%s0 + $0x1e0] sm:$0xff]
    %v88 = vld [vmem:[%s0 + $0x1e8] sm:$0xff]
    %v89 = vld [vmem:[%s0 + $0x1f0] sm:$0xff]
    %v90 = vld [vmem:[%s0 + $0x1f8] sm:$0xff]
    %v91 = vld [vmem:[%s0 + $0x200] sm:$0xff]
    %v92 = vld [vmem:[%s0 + $0x208] sm:$0xff]
    %v93 = vld [vmem:[%s0 + $0x210] sm:$0xff]
    %v94 = vld [vmem:[%s0 + $0x218] sm:$0xff]
    %v95 = vld [vmem:[%s0 + $0x220] sm:$0xff]
    %v96 = vld [vmem:[%s0 + $0x228] sm:$0xff]
    %v97 = vld [vmem:[%s0 + $0x230] sm:$0xff]
    %v98 = vld [vmem:[%s0 + $0x238] sm:$0xff]
    %v99 = vld [vmem:[%s0 + $0x240] sm:$0xff]
    %v100 = vld [vmem:[%s0 + $0x248] sm:$0xff]
    %v101 = vld [vmem:[%s0 + $0x250] sm:$0xff]
    %v102 = vld [vmem:[%s0 + $0x258] sm:$0xff]
    %v103 = vld [vmem:[%s0 + $0x260] sm:$0xff]
    %v104 = vld [vmem:[%s0 + $0x268] sm:$0xff]
    %v105 = vld [vmem:[%s0 + $0x270] sm:$0xff]
    %v106 = vld [vmem:[%s0 + $0x278] sm:$0xff]
    %v107 = vld [vmem:[%s0 + $0x280] sm:$0xff]
    %v108 = vld [vmem:[%s0 + $0x288] sm:$0xff]
    %v109 = vld [vmem:[%s0 + $0x290] sm:$0xff]
    %v110 = vld [vmem:[%s0 + $0x298] sm:$0xff]
    %v111 = vld [vmem:[%s0 + $0x2a0] sm:$0xff]
    %v112 = vld [vmem:[%s0 + $0x2a8] sm:$0xff]
    %v113 = vld [vmem:[%s0 + $0x2b0] sm:$0xff]
    %v114 = vld [vmem:[%s0 + $0x2b8] sm:$0xff]
    %v115 = vld [vmem:[%s0 + $0x2c0] sm:$0xff]
    %v116 = vld [vmem:[%s0 + $0x2c8] sm:$0xff]
    %v117 = vld [vmem:[%s0 + $0x2d0] sm:$0xff]
    %v118 = vld [vmem:[%s0 + $0x2d8] sm:$0xff]
    %v119 = vld [vmem:[%s0 + $0x2e0] sm:$0xff]
    %v120 = vld [vmem:[%s0 + $0x2e8] sm:$0xff]
    %v121 = vld [vmem:[%s0 + $0x2f0] sm:$0xff]
    %v122 = vld [vmem:[%s0 + $0x2f8] sm:$0xff]
    %v123 = vld [vmem:[%s0 + $0x300] sm:$0xff]
    %v124 = vld [vmem:[%s0 + $0x308] sm:$0xff]
    %v125 = vld [vmem:[%s0 + $0x310] sm:$0xff]
    %v126 = vld [vmem:[%s0 + $0x318] sm:$0xff]
    %v127 = vld [vmem:[%s0 + $0x320] sm:$0xff]
    %v128 = vld [vmem:[%s0 + $0x328] sm:$0xff]
    %v129 = vld [vmem:[%s0 + $0x330] sm:$0xff]
    %v130 = vld [vmem:[%s0 + $0x338] sm:$0xff]
    %v131 = vld [vmem:[%s0 + $0x340] sm:$0xff]
    %v132 = vld [vmem:[%s0 + $0x348] sm:$0xff]
    %v133 = vld [vmem:[%s0 + $0x350] sm:$0xff]
    %v134 = vld [vmem:[%s0 + $0x358] sm:$0xff]
    %v135 = vld [vmem:[%s0 + $0x360] sm:$0xff]
    %v136 = vld [vmem:[%s0 + $0x368] sm:$0xff]
    %v137 = vld [vmem:[%s0 + $0x370] sm:$0xff]
    %v138 = vld [vmem:[%s0 + $0x378] sm:$0xff]
    %v139 = vld [vmem:[%s0 + $0x380] sm:$0xff]
    %v140 = vld [vmem:[%s0 + $0x388] sm:$0xff]
    %v141 = vld [vmem:[%s0 + $0x390] sm:$0xff]
    %v142 = vld [vmem:[%s0 + $0x398] sm:$0xff]
    %v143 = vld [vmem:[%s0 + $0x3a0] sm:$0xff]
    %v144 = vld [vmem:[%s0 + $0x3a8] sm:$0xff]
    %v145 = vld [vmem:[%s0 + $0x3b0] sm:$0xff]
    %v146 = vld [vmem:[%s0 + $0x3b8] sm:$0xff]
    %v147 = vld [vmem:[%s0 + $0x3c0] sm:$0xff]
    %v148 = vld [vmem:[%s0 + $0x3c8] sm:$0xff]
    %v149 = vld [vmem:[%s0 + $0x3d0] sm:$0xff]
    %v150 = vld [vmem:[%s0 + $0x3d8] sm:$0xff]
    %v151 = vld [vmem:[%s0 + $0x3e0] sm:$0xff]
    %v152 = vld [vmem:[%s0 + $0x3e8] sm:$0xff]
    %v153 = vld [vmem:[%s0 + $0x3f0] sm:$0xff]
    %v154 = vld [vmem:[%s0 + $0x3f8] sm:$0xff]
    %v155 = vld [vmem:[%s2] sm:$0xff]
    %v156 = vld [vmem:[%s2 + $0x8] sm:$0xff]
    %v157 = vld [vmem:[%s2 + $0x10] sm:$0xff]
    %v158 = vld [vmem:[%s2 + $0x18] sm:$0xff]
    %v159 = vld [vmem:[%s3] sm:$0x1]
    %v161 = vlaneseq
    %v162 = vshrl.u32 %v161, 7
    %v163 = vsub.s32 0, %v162
    %v164 = vrot.slane %v159, %v163
    %vm166 = vcmask 261120
    %v168 = vsel %vm166, %v27, 0
    %v171 = vsel %vm166, %v28, 0
    %v174 = vsel %vm166, %v29, 0
    %v177 = vsel %vm166, %v30, 0
    %v180 = vsel %vm166, %v31, 0
    %v183 = vsel %vm166, %v32, 0
    %v186 = vsel %vm166, %v33, 0
    %v189 = vsel %vm166, %v34, 0
    %v192 = vsel %vm166, %v35, 0
    %v195 = vsel %vm166, %v36, 0
    %v198 = vsel %vm166, %v37, 0
    %v201 = vsel %vm166, %v38, 0
    %v204 = vsel %vm166, %v39, 0
    %v207 = vsel %vm166, %v40, 0
    %v210 = vsel %vm166, %v41, 0
    %v213 = vsel %vm166, %v42, 0
    %v216 = vsel %vm166, %v43, 0
    %v219 = vsel %vm166, %v44, 0
    %v222 = vsel %vm166, %v45, 0
    %v225 = vsel %vm166, %v46, 0
    %v228 = vsel %vm166, %v47, 0
    %v231 = vsel %vm166, %v48, 0
    %v234 = vsel %vm166, %v49, 0
    %v237 = vsel %vm166, %v50, 0
    %v240 = vsel %vm166, %v51, 0
    %v243 = vsel %vm166, %v52, 0
    %v246 = vsel %vm166, %v53, 0
    %v249 = vsel %vm166, %v54, 0
    %v252 = vsel %vm166, %v55, 0
    %v255 = vsel %vm166, %v56, 0
    %v258 = vsel %vm166, %v57, 0
    %v261 = vsel %vm166, %v58, 0
    %v264 = vsel %vm166, %v59, 0
    %v267 = vsel %vm166, %v60, 0
    %v270 = vsel %vm166, %v61, 0
    %v273 = vsel %vm166, %v62, 0
    %v276 = vsel %vm166, %v63, 0
    %v279 = vsel %vm166, %v64, 0
    %v282 = vsel %vm166, %v65, 0
    %v285 = vsel %vm166, %v66, 0
    %v288 = vsel %vm166, %v67, 0
    %v291 = vsel %vm166, %v68, 0
    %v294 = vsel %vm166, %v69, 0
    %v297 = vsel %vm166, %v70, 0
    %v300 = vsel %vm166, %v71, 0
    %v303 = vsel %vm166, %v72, 0
    %v306 = vsel %vm166, %v73, 0
    %v309 = vsel %vm166, %v74, 0
    %v312 = vsel %vm166, %v75, 0
    %v315 = vsel %vm166, %v76, 0
    %v318 = vsel %vm166, %v77, 0
    %v321 = vsel %vm166, %v78, 0
    %v324 = vsel %vm166, %v79, 0
    %v327 = vsel %vm166, %v80, 0
    %v330 = vsel %vm166, %v81, 0
    %v333 = vsel %vm166, %v82, 0
    %v336 = vsel %vm166, %v83, 0
    %v339 = vsel %vm166, %v84, 0
    %v342 = vsel %vm166, %v85, 0
    %v345 = vsel %vm166, %v86, 0
    %v348 = vsel %vm166, %v87, 0
    %v351 = vsel %vm166, %v88, 0
    %v354 = vsel %vm166, %v89, 0
    %v357 = vsel %vm166, %v90, 0
    %v360 = vsel %vm166, %v91, 0
    %v363 = vsel %vm166, %v92, 0
    %v366 = vsel %vm166, %v93, 0
    %v369 = vsel %vm166, %v94, 0
    %v372 = vsel %vm166, %v95, 0
    %v375 = vsel %vm166, %v96, 0
    %v378 = vsel %vm166, %v97, 0
    %v381 = vsel %vm166, %v98, 0
    %v384 = vsel %vm166, %v99, 0
    %v387 = vsel %vm166, %v100, 0
    %v390 = vsel %vm166, %v101, 0
    %v393 = vsel %vm166, %v102, 0
    %v396 = vsel %vm166, %v103, 0
    %v399 = vsel %vm166, %v104, 0
    %v402 = vsel %vm166, %v105, 0
    %v405 = vsel %vm166, %v106, 0
    %v408 = vsel %vm166, %v107, 0
    %v411 = vsel %vm166, %v108, 0
    %v414 = vsel %vm166, %v109, 0
    %v417 = vsel %vm166, %v110, 0
    %v420 = vsel %vm166, %v111, 0
    %v423 = vsel %vm166, %v112, 0
    %v426 = vsel %vm166, %v113, 0
    %v429 = vsel %vm166, %v114, 0
    %v432 = vsel %vm166, %v115, 0
    %v435 = vsel %vm166, %v116, 0
    %v438 = vsel %vm166, %v117, 0
    %v441 = vsel %vm166, %v118, 0
    %v444 = vsel %vm166, %v119, 0
    %v447 = vsel %vm166, %v120, 0
    %v450 = vsel %vm166, %v121, 0
    %v453 = vsel %vm166, %v122, 0
    %v456 = vsel %vm166, %v123, 0
    %v459 = vsel %vm166, %v124, 0
    %v462 = vsel %vm166, %v125, 0
    %v465 = vsel %vm166, %v126, 0
    %v468 = vsel %vm166, %v127, 0
    %v471 = vsel %vm166, %v128, 0
    %v474 = vsel %vm166, %v129, 0
    %v477 = vsel %vm166, %v130, 0
    %v480 = vsel %vm166, %v131, 0
    %v483 = vsel %vm166, %v132, 0
    %v486 = vsel %vm166, %v133, 0
    %v489 = vsel %vm166, %v134, 0
    %v492 = vsel %vm166, %v135, 0
    %v495 = vsel %vm166, %v136, 0
    %v498 = vsel %vm166, %v137, 0
    %v501 = vsel %vm166, %v138, 0
    %v504 = vsel %vm166, %v139, 0
    %v507 = vsel %vm166, %v140, 0
    %v510 = vsel %vm166, %v141, 0
    %v513 = vsel %vm166, %v142, 0
    %v516 = vsel %vm166, %v143, 0
    %v519 = vsel %vm166, %v144, 0
    %v522 = vsel %vm166, %v145, 0
    %v525 = vsel %vm166, %v146, 0
    %v528 = vsel %vm166, %v147, 0
    %v531 = vsel %vm166, %v148, 0
    %v534 = vsel %vm166, %v149, 0
    %v537 = vsel %vm166, %v150, 0
    %v540 = vsel %vm166, %v151, 0
    %v543 = vsel %vm166, %v152, 0
    %v546 = vsel %vm166, %v153, 0
    %v549 = vsel %vm166, %v154, 0
    %551 = vmatprep.subr.mxu0 0.0
    %552 = vmatpush1.msra.mxu0 0.0
    %553 = vmatprep.subr.mxu0 0.0
    %554 = vmatpush1.msra.mxu0 0.0
    %555 = vmatprep.subr.mxu0 0.0
    %556 = vmatpush1.msra.mxu0 0.0
    %557 = vmatprep.subr.mxu0 0.0
    %558 = vmatpush1.msra.mxu0 0.0
    %559 = vmatprep.subr.mxu0 0.0
    %560 = vmatpush1.msra.mxu0 0.0
    %561 = vmatprep.subr.mxu0 0.0
    %562 = vmatpush1.msra.mxu0 0.0
    %563 = vmatprep.subr.mxu0 0.0
    %564 = vmatpush1.msra.mxu0 0.0
    %565 = vmatprep.subr.mxu0 0.0
    %566 = vmatpush1.msra.mxu0 0.0
    %567 = vmatprep.subr.mxu0 0.0
    %568 = vmatpush1.msra.mxu0 0.0
    %569 = vmatprep.subr.mxu0 0.0
    %570 = vmatpush1.msra.mxu0 0.0
    %571 = vmatprep.subr.mxu0 0.0
    %572 = vmatpush1.msra.mxu0 0.0
    %573 = vmatprep.subr.mxu0 0.0
    %574 = vmatpush1.msra.mxu0 0.0
    %575 = vmatprep.subr.mxu0 0.0
    %576 = vmatpush1.msra.mxu0 %v158
    %577 = vmatprep.subr.mxu0 0.0
    %578 = vmatpush1.msra.mxu0 %v157
    %579 = vmatprep.subr.mxu0 0.0
    %580 = vmatpush1.msra.mxu0 %v156
    %581 = vmatprep.subr.mxu0 0.0
    %582 = vmatpush1.msra.mxu0 %v155
    %583 = vmatprep.subr.mxu0 0.0
    %584 = vmatpush2.msra.mxu0 0.0
    %585 = vmatprep.subr.mxu0 0.0
    %586 = vmatpush2.msra.mxu0 0.0
    %587 = vmatprep.subr.mxu0 0.0
    %588 = vmatpush2.msra.mxu0 0.0
    %589 = vmatprep.subr.mxu0 0.0
    %590 = vmatpush2.msra.mxu0 0.0
    %591 = vmatprep.subr.mxu0 0.0
    %592 = vmatpush2.msra.mxu0 0.0
    %593 = vmatprep.subr.mxu0 0.0
    %594 = vmatpush2.msra.mxu0 0.0
    %595 = vmatprep.subr.mxu0 0.0
    %596 = vmatpush2.msra.mxu0 0.0
    %597 = vmatprep.subr.mxu0 0.0
    %598 = vmatpush2.msra.mxu0 0.0
    %599 = vmatprep.subr.mxu0 0.0
    %600 = vmatpush2.msra.mxu0 0.0
    %601 = vmatprep.subr.mxu0 0.0
    %602 = vmatpush2.msra.mxu0 0.0
    %603 = vmatprep.subr.mxu0 0.0
    %604 = vmatpush2.msra.mxu0 0.0
    %605 = vmatprep.subr.mxu0 0.0
    %606 = vmatpush2.msra.mxu0 0.0
    %607 = vmatprep.subr.mxu0 0.0
    %608 = vmatpush2.msra.mxu0 0.0
    %609 = vmatprep.subr.mxu0 0.0
    %610 = vmatpush2.msra.mxu0 0.0
    %611 = vmatprep.subr.mxu0 0.0
    %612 = vmatpush2.msra.mxu0 0.0
    %613 = vmatprep.subr.mxu0 0.0
    %614 = vmatpush2.msra.mxu0 0.0
    %615 = vmatprep.mubr.f32.mxu0 0.0
    %616 = vmatmul.mubr.f32.gmra.mxu0 %v168
    %v617 = vpop.f32.mrf.mxu0
    %v618 = vadd.f32 %v164, %v617
    %v619 = vpop.f32.mrf.mxu0
    %620 = vmatprep.mubr.f32.mxu0 0.0
    %621 = vmatmul.mubr.f32.gmra.mxu0 %v171
    %v622 = vpop.f32.mrf.mxu0
    %v623 = vadd.f32 %v164, %v622
    %v624 = vpop.f32.mrf.mxu0
    %625 = vmatprep.mubr.f32.mxu0 0.0
    %626 = vmatmul.mubr.f32.gmra.mxu0 %v174
    %v627 = vpop.f32.mrf.mxu0
    %v628 = vadd.f32 %v164, %v627
    %v629 = vpop.f32.mrf.mxu0
    %630 = vmatprep.mubr.f32.mxu0 0.0
    %631 = vmatmul.mubr.f32.gmra.mxu0 %v177
    %v632 = vpop.f32.mrf.mxu0
    %v633 = vadd.f32 %v164, %v632
    %v634 = vpop.f32.mrf.mxu0
    %635 = vmatprep.mubr.f32.mxu0 0.0
    %636 = vmatmul.mubr.f32.gmra.mxu0 %v180
    %v637 = vpop.f32.mrf.mxu0
    %v638 = vadd.f32 %v164, %v637
    %v639 = vpop.f32.mrf.mxu0
    %640 = vmatprep.mubr.f32.mxu0 0.0
    %641 = vmatmul.mubr.f32.gmra.mxu0 %v183
    %v642 = vpop.f32.mrf.mxu0
    %v643 = vadd.f32 %v164, %v642
    %v644 = vpop.f32.mrf.mxu0
    %645 = vmatprep.mubr.f32.mxu0 0.0
    %646 = vmatmul.mubr.f32.gmra.mxu0 %v186
    %v647 = vpop.f32.mrf.mxu0
    %v648 = vadd.f32 %v164, %v647
    %v649 = vpop.f32.mrf.mxu0
    %650 = vmatprep.mubr.f32.mxu0 0.0
    %651 = vmatmul.mubr.f32.gmra.mxu0 %v189
    %v652 = vpop.f32.mrf.mxu0
    %v653 = vadd.f32 %v164, %v652
    %v654 = vpop.f32.mrf.mxu0
    %655 = vmatprep.mubr.f32.mxu0 0.0
    %656 = vmatmul.mubr.f32.gmra.mxu0 %v192
    %v657 = vpop.f32.mrf.mxu0
    %v658 = vadd.f32 %v164, %v657
    %v659 = vpop.f32.mrf.mxu0
    %660 = vmatprep.mubr.f32.mxu0 0.0
    %661 = vmatmul.mubr.f32.gmra.mxu0 %v195
    %v662 = vpop.f32.mrf.mxu0
    %v663 = vadd.f32 %v164, %v662
    %v664 = vpop.f32.mrf.mxu0
    %665 = vmatprep.mubr.f32.mxu0 0.0
    %666 = vmatmul.mubr.f32.gmra.mxu0 %v198
    %v667 = vpop.f32.mrf.mxu0
    %v668 = vadd.f32 %v164, %v667
    %v669 = vpop.f32.mrf.mxu0
    %670 = vmatprep.mubr.f32.mxu0 0.0
    %671 = vmatmul.mubr.f32.gmra.mxu0 %v201
    %v672 = vpop.f32.mrf.mxu0
    %v673 = vadd.f32 %v164, %v672
    %v674 = vpop.f32.mrf.mxu0
    %675 = vmatprep.mubr.f32.mxu0 0.0
    %676 = vmatmul.mubr.f32.gmra.mxu0 %v204
    %v677 = vpop.f32.mrf.mxu0
    %v678 = vadd.f32 %v164, %v677
    %v679 = vpop.f32.mrf.mxu0
    %680 = vmatprep.mubr.f32.mxu0 0.0
    %681 = vmatmul.mubr.f32.gmra.mxu0 %v207
    %v682 = vpop.f32.mrf.mxu0
    %v683 = vadd.f32 %v164, %v682
    %v684 = vpop.f32.mrf.mxu0
    %685 = vmatprep.mubr.f32.mxu0 0.0
    %686 = vmatmul.mubr.f32.gmra.mxu0 %v210
    %v687 = vpop.f32.mrf.mxu0
    %v688 = vadd.f32 %v164, %v687
    %v689 = vpop.f32.mrf.mxu0
    %690 = vmatprep.mubr.f32.mxu0 0.0
    %691 = vmatmul.mubr.f32.gmra.mxu0 %v213
    %v692 = vpop.f32.mrf.mxu0
    %v693 = vadd.f32 %v164, %v692
    %v694 = vpop.f32.mrf.mxu0
    %695 = vmatprep.mubr.f32.mxu0 0.0
    %696 = vmatmul.mubr.f32.gmra.mxu0 %v216
    %v697 = vpop.f32.mrf.mxu0
    %v698 = vadd.f32 %v164, %v697
    %v699 = vpop.f32.mrf.mxu0
    %700 = vmatprep.mubr.f32.mxu0 0.0
    %701 = vmatmul.mubr.f32.gmra.mxu0 %v219
    %v702 = vpop.f32.mrf.mxu0
    %v703 = vadd.f32 %v164, %v702
    %v704 = vpop.f32.mrf.mxu0
    %705 = vmatprep.mubr.f32.mxu0 0.0
    %706 = vmatmul.mubr.f32.gmra.mxu0 %v222
    %v707 = vpop.f32.mrf.mxu0
    %v708 = vadd.f32 %v164, %v707
    %v709 = vpop.f32.mrf.mxu0
    %710 = vmatprep.mubr.f32.mxu0 0.0
    %711 = vmatmul.mubr.f32.gmra.mxu0 %v225
    %v712 = vpop.f32.mrf.mxu0
    %v713 = vadd.f32 %v164, %v712
    %v714 = vpop.f32.mrf.mxu0
    %715 = vmatprep.mubr.f32.mxu0 0.0
    %716 = vmatmul.mubr.f32.gmra.mxu0 %v228
    %v717 = vpop.f32.mrf.mxu0
    %v718 = vadd.f32 %v164, %v717
    %v719 = vpop.f32.mrf.mxu0
    %720 = vmatprep.mubr.f32.mxu0 0.0
    %721 = vmatmul.mubr.f32.gmra.mxu0 %v231
    %v722 = vpop.f32.mrf.mxu0
    %v723 = vadd.f32 %v164, %v722
    %v724 = vpop.f32.mrf.mxu0
    %725 = vmatprep.mubr.f32.mxu0 0.0
    %726 = vmatmul.mubr.f32.gmra.mxu0 %v234
    %v727 = vpop.f32.mrf.mxu0
    %v728 = vadd.f32 %v164, %v727
    %v729 = vpop.f32.mrf.mxu0
    %730 = vmatprep.mubr.f32.mxu0 0.0
    %731 = vmatmul.mubr.f32.gmra.mxu0 %v237
    %v732 = vpop.f32.mrf.mxu0
    %v733 = vadd.f32 %v164, %v732
    %v734 = vpop.f32.mrf.mxu0
    %735 = vmatprep.mubr.f32.mxu0 0.0
    %736 = vmatmul.mubr.f32.gmra.mxu0 %v240
    %v737 = vpop.f32.mrf.mxu0
    %v738 = vadd.f32 %v164, %v737
    %v739 = vpop.f32.mrf.mxu0
    %740 = vmatprep.mubr.f32.mxu0 0.0
    %741 = vmatmul.mubr.f32.gmra.mxu0 %v243
    %v742 = vpop.f32.mrf.mxu0
    %v743 = vadd.f32 %v164, %v742
    %v744 = vpop.f32.mrf.mxu0
    %745 = vmatprep.mubr.f32.mxu0 0.0
    %746 = vmatmul.mubr.f32.gmra.mxu0 %v246
    %v747 = vpop.f32.mrf.mxu0
    %v748 = vadd.f32 %v164, %v747
    %v749 = vpop.f32.mrf.mxu0
    %750 = vmatprep.mubr.f32.mxu0 0.0
    %751 = vmatmul.mubr.f32.gmra.mxu0 %v249
    %v752 = vpop.f32.mrf.mxu0
    %v753 = vadd.f32 %v164, %v752
    %v754 = vpop.f32.mrf.mxu0
    %755 = vmatprep.mubr.f32.mxu0 0.0
    %756 = vmatmul.mubr.f32.gmra.mxu0 %v252
    %v757 = vpop.f32.mrf.mxu0
    %v758 = vadd.f32 %v164, %v757
    %v759 = vpop.f32.mrf.mxu0
    %760 = vmatprep.mubr.f32.mxu0 0.0
    %761 = vmatmul.mubr.f32.gmra.mxu0 %v255
    %v762 = vpop.f32.mrf.mxu0
    %v763 = vadd.f32 %v164, %v762
    %v764 = vpop.f32.mrf.mxu0
    %765 = vmatprep.mubr.f32.mxu0 0.0
    %766 = vmatmul.mubr.f32.gmra.mxu0 %v258
    %v767 = vpop.f32.mrf.mxu0
    %v768 = vadd.f32 %v164, %v767
    %v769 = vpop.f32.mrf.mxu0
    %770 = vmatprep.mubr.f32.mxu0 0.0
    %771 = vmatmul.mubr.f32.gmra.mxu0 %v261
    %v772 = vpop.f32.mrf.mxu0
    %v773 = vadd.f32 %v164, %v772
    %v774 = vpop.f32.mrf.mxu0
    %775 = vmatprep.mubr.f32.mxu0 0.0
    %776 = vmatmul.mubr.f32.gmra.mxu0 %v264
    %v777 = vpop.f32.mrf.mxu0
    %v778 = vadd.f32 %v164, %v777
    %v779 = vpop.f32.mrf.mxu0
    %780 = vmatprep.mubr.f32.mxu0 0.0
    %781 = vmatmul.mubr.f32.gmra.mxu0 %v267
    %v782 = vpop.f32.mrf.mxu0
    %v783 = vadd.f32 %v164, %v782
    %v784 = vpop.f32.mrf.mxu0
    %785 = vmatprep.mubr.f32.mxu0 0.0
    %786 = vmatmul.mubr.f32.gmra.mxu0 %v270
    %v787 = vpop.f32.mrf.mxu0
    %v788 = vadd.f32 %v164, %v787
    %v789 = vpop.f32.mrf.mxu0
    %790 = vmatprep.mubr.f32.mxu0 0.0
    %791 = vmatmul.mubr.f32.gmra.mxu0 %v273
    %v792 = vpop.f32.mrf.mxu0
    %v793 = vadd.f32 %v164, %v792
    %v794 = vpop.f32.mrf.mxu0
    %795 = vmatprep.mubr.f32.mxu0 0.0
    %796 = vmatmul.mubr.f32.gmra.mxu0 %v276
    %v797 = vpop.f32.mrf.mxu0
    %v798 = vadd.f32 %v164, %v797
    %v799 = vpop.f32.mrf.mxu0
    %800 = vmatprep.mubr.f32.mxu0 0.0
    %801 = vmatmul.mubr.f32.gmra.mxu0 %v279
    %v802 = vpop.f32.mrf.mxu0
    %v803 = vadd.f32 %v164, %v802
    %v804 = vpop.f32.mrf.mxu0
    %805 = vmatprep.mubr.f32.mxu0 0.0
    %806 = vmatmul.mubr.f32.gmra.mxu0 %v282
    %v807 = vpop.f32.mrf.mxu0
    %v808 = vadd.f32 %v164, %v807
    %v809 = vpop.f32.mrf.mxu0
    %810 = vmatprep.mubr.f32.mxu0 0.0
    %811 = vmatmul.mubr.f32.gmra.mxu0 %v285
    %v812 = vpop.f32.mrf.mxu0
    %v813 = vadd.f32 %v164, %v812
    %v814 = vpop.f32.mrf.mxu0
    %815 = vmatprep.mubr.f32.mxu0 0.0
    %816 = vmatmul.mubr.f32.gmra.mxu0 %v288
    %v817 = vpop.f32.mrf.mxu0
    %v818 = vadd.f32 %v164, %v817
    %v819 = vpop.f32.mrf.mxu0
    %820 = vmatprep.mubr.f32.mxu0 0.0
    %821 = vmatmul.mubr.f32.gmra.mxu0 %v291
    %v822 = vpop.f32.mrf.mxu0
    %v823 = vadd.f32 %v164, %v822
    %v824 = vpop.f32.mrf.mxu0
    %825 = vmatprep.mubr.f32.mxu0 0.0
    %826 = vmatmul.mubr.f32.gmra.mxu0 %v294
    %v827 = vpop.f32.mrf.mxu0
    %v828 = vadd.f32 %v164, %v827
    %v829 = vpop.f32.mrf.mxu0
    %830 = vmatprep.mubr.f32.mxu0 0.0
    %831 = vmatmul.mubr.f32.gmra.mxu0 %v297
    %v832 = vpop.f32.mrf.mxu0
    %v833 = vadd.f32 %v164, %v832
    %v834 = vpop.f32.mrf.mxu0
    %835 = vmatprep.mubr.f32.mxu0 0.0
    %836 = vmatmul.mubr.f32.gmra.mxu0 %v300
    %v837 = vpop.f32.mrf.mxu0
    %v838 = vadd.f32 %v164, %v837
    %v839 = vpop.f32.mrf.mxu0
    %840 = vmatprep.mubr.f32.mxu0 0.0
    %841 = vmatmul.mubr.f32.gmra.mxu0 %v303
    %v842 = vpop.f32.mrf.mxu0
    %v843 = vadd.f32 %v164, %v842
    %v844 = vpop.f32.mrf.mxu0
    %845 = vmatprep.mubr.f32.mxu0 0.0
    %846 = vmatmul.mubr.f32.gmra.mxu0 %v306
    %v847 = vpop.f32.mrf.mxu0
    %v848 = vadd.f32 %v164, %v847
    %v849 = vpop.f32.mrf.mxu0
    %850 = vmatprep.mubr.f32.mxu0 0.0
    %851 = vmatmul.mubr.f32.gmra.mxu0 %v309
    %v852 = vpop.f32.mrf.mxu0
    %v853 = vadd.f32 %v164, %v852
    %v854 = vpop.f32.mrf.mxu0
    %855 = vmatprep.mubr.f32.mxu0 0.0
    %856 = vmatmul.mubr.f32.gmra.mxu0 %v312
    %v857 = vpop.f32.mrf.mxu0
    %v858 = vadd.f32 %v164, %v857
    %v859 = vpop.f32.mrf.mxu0
    %860 = vmatprep.mubr.f32.mxu0 0.0
    %861 = vmatmul.mubr.f32.gmra.mxu0 %v315
    %v862 = vpop.f32.mrf.mxu0
    %v863 = vadd.f32 %v164, %v862
    %v864 = vpop.f32.mrf.mxu0
    %865 = vmatprep.mubr.f32.mxu0 0.0
    %866 = vmatmul.mubr.f32.gmra.mxu0 %v318
    %v867 = vpop.f32.mrf.mxu0
    %v868 = vadd.f32 %v164, %v867
    %v869 = vpop.f32.mrf.mxu0
    %870 = vmatprep.mubr.f32.mxu0 0.0
    %871 = vmatmul.mubr.f32.gmra.mxu0 %v321
    %v872 = vpop.f32.mrf.mxu0
    %v873 = vadd.f32 %v164, %v872
    %v874 = vpop.f32.mrf.mxu0
    %875 = vmatprep.mubr.f32.mxu0 0.0
    %876 = vmatmul.mubr.f32.gmra.mxu0 %v324
    %v877 = vpop.f32.mrf.mxu0
    %v878 = vadd.f32 %v164, %v877
    %v879 = vpop.f32.mrf.mxu0
    %880 = vmatprep.mubr.f32.mxu0 0.0
    %881 = vmatmul.mubr.f32.gmra.mxu0 %v327
    %v882 = vpop.f32.mrf.mxu0
    %v883 = vadd.f32 %v164, %v882
    %v884 = vpop.f32.mrf.mxu0
    %885 = vmatprep.mubr.f32.mxu0 0.0
    %886 = vmatmul.mubr.f32.gmra.mxu0 %v330
    %v887 = vpop.f32.mrf.mxu0
    %v888 = vadd.f32 %v164, %v887
    %v889 = vpop.f32.mrf.mxu0
    %890 = vmatprep.mubr.f32.mxu0 0.0
    %891 = vmatmul.mubr.f32.gmra.mxu0 %v333
    %v892 = vpop.f32.mrf.mxu0
    %v893 = vadd.f32 %v164, %v892
    %v894 = vpop.f32.mrf.mxu0
    %895 = vmatprep.mubr.f32.mxu0 0.0
    %896 = vmatmul.mubr.f32.gmra.mxu0 %v336
    %v897 = vpop.f32.mrf.mxu0
    %v898 = vadd.f32 %v164, %v897
    %v899 = vpop.f32.mrf.mxu0
    %900 = vmatprep.mubr.f32.mxu0 0.0
    %901 = vmatmul.mubr.f32.gmra.mxu0 %v339
    %v902 = vpop.f32.mrf.mxu0
    %v903 = vadd.f32 %v164, %v902
    %v904 = vpop.f32.mrf.mxu0
    %905 = vmatprep.mubr.f32.mxu0 0.0
    %906 = vmatmul.mubr.f32.gmra.mxu0 %v342
    %v907 = vpop.f32.mrf.mxu0
    %v908 = vadd.f32 %v164, %v907
    %v909 = vpop.f32.mrf.mxu0
    %910 = vmatprep.mubr.f32.mxu0 0.0
    %911 = vmatmul.mubr.f32.gmra.mxu0 %v345
    %v912 = vpop.f32.mrf.mxu0
    %v913 = vadd.f32 %v164, %v912
    %v914 = vpop.f32.mrf.mxu0
    %915 = vmatprep.mubr.f32.mxu0 0.0
    %916 = vmatmul.mubr.f32.gmra.mxu0 %v348
    %v917 = vpop.f32.mrf.mxu0
    %v918 = vadd.f32 %v164, %v917
    %v919 = vpop.f32.mrf.mxu0
    %920 = vmatprep.mubr.f32.mxu0 0.0
    %921 = vmatmul.mubr.f32.gmra.mxu0 %v351
    %v922 = vpop.f32.mrf.mxu0
    %v923 = vadd.f32 %v164, %v922
    %v924 = vpop.f32.mrf.mxu0
    %925 = vmatprep.mubr.f32.mxu0 0.0
    %926 = vmatmul.mubr.f32.gmra.mxu0 %v354
    %v927 = vpop.f32.mrf.mxu0
    %v928 = vadd.f32 %v164, %v927
    %v929 = vpop.f32.mrf.mxu0
    %930 = vmatprep.mubr.f32.mxu0 0.0
    %931 = vmatmul.mubr.f32.gmra.mxu0 %v357
    %v932 = vpop.f32.mrf.mxu0
    %v933 = vadd.f32 %v164, %v932
    %v934 = vpop.f32.mrf.mxu0
    %935 = vmatprep.mubr.f32.mxu0 0.0
    %936 = vmatmul.mubr.f32.gmra.mxu0 %v360
    %v937 = vpop.f32.mrf.mxu0
    %v938 = vadd.f32 %v164, %v937
    %v939 = vpop.f32.mrf.mxu0
    %940 = vmatprep.mubr.f32.mxu0 0.0
    %941 = vmatmul.mubr.f32.gmra.mxu0 %v363
    %v942 = vpop.f32.mrf.mxu0
    %v943 = vadd.f32 %v164, %v942
    %v944 = vpop.f32.mrf.mxu0
    %945 = vmatprep.mubr.f32.mxu0 0.0
    %946 = vmatmul.mubr.f32.gmra.mxu0 %v366
    %v947 = vpop.f32.mrf.mxu0
    %v948 = vadd.f32 %v164, %v947
    %v949 = vpop.f32.mrf.mxu0
    %950 = vmatprep.mubr.f32.mxu0 0.0
    %951 = vmatmul.mubr.f32.gmra.mxu0 %v369
    %v952 = vpop.f32.mrf.mxu0
    %v953 = vadd.f32 %v164, %v952
    %v954 = vpop.f32.mrf.mxu0
    %955 = vmatprep.mubr.f32.mxu0 0.0
    %956 = vmatmul.mubr.f32.gmra.mxu0 %v372
    %v957 = vpop.f32.mrf.mxu0
    %v958 = vadd.f32 %v164, %v957
    %v959 = vpop.f32.mrf.mxu0
    %960 = vmatprep.mubr.f32.mxu0 0.0
    %961 = vmatmul.mubr.f32.gmra.mxu0 %v375
    %v962 = vpop.f32.mrf.mxu0
    %v963 = vadd.f32 %v164, %v962
    %v964 = vpop.f32.mrf.mxu0
    %965 = vmatprep.mubr.f32.mxu0 0.0
    %966 = vmatmul.mubr.f32.gmra.mxu0 %v378
    %v967 = vpop.f32.mrf.mxu0
    %v968 = vadd.f32 %v164, %v967
    %v969 = vpop.f32.mrf.mxu0
    %970 = vmatprep.mubr.f32.mxu0 0.0
    %971 = vmatmul.mubr.f32.gmra.mxu0 %v381
    %v972 = vpop.f32.mrf.mxu0
    %v973 = vadd.f32 %v164, %v972
    %v974 = vpop.f32.mrf.mxu0
    %975 = vmatprep.mubr.f32.mxu0 0.0
    %976 = vmatmul.mubr.f32.gmra.mxu0 %v384
    %v977 = vpop.f32.mrf.mxu0
    %v978 = vadd.f32 %v164, %v977
    %v979 = vpop.f32.mrf.mxu0
    %980 = vmatprep.mubr.f32.mxu0 0.0
    %981 = vmatmul.mubr.f32.gmra.mxu0 %v387
    %v982 = vpop.f32.mrf.mxu0
    %v983 = vadd.f32 %v164, %v982
    %v984 = vpop.f32.mrf.mxu0
    %985 = vmatprep.mubr.f32.mxu0 0.0
    %986 = vmatmul.mubr.f32.gmra.mxu0 %v390
    %v987 = vpop.f32.mrf.mxu0
    %v988 = vadd.f32 %v164, %v987
    %v989 = vpop.f32.mrf.mxu0
    %990 = vmatprep.mubr.f32.mxu0 0.0
    %991 = vmatmul.mubr.f32.gmra.mxu0 %v393
    %v992 = vpop.f32.mrf.mxu0
    %v993 = vadd.f32 %v164, %v992
    %v994 = vpop.f32.mrf.mxu0
    %995 = vmatprep.mubr.f32.mxu0 0.0
    %996 = vmatmul.mubr.f32.gmra.mxu0 %v396
    %v997 = vpop.f32.mrf.mxu0
    %v998 = vadd.f32 %v164, %v997
    %v999 = vpop.f32.mrf.mxu0
    %1000 = vmatprep.mubr.f32.mxu0 0.0
    %1001 = vmatmul.mubr.f32.gmra.mxu0 %v399
    %v1002 = vpop.f32.mrf.mxu0
    %v1003 = vadd.f32 %v164, %v1002
    %v1004 = vpop.f32.mrf.mxu0
    %1005 = vmatprep.mubr.f32.mxu0 0.0
    %1006 = vmatmul.mubr.f32.gmra.mxu0 %v402
    %v1007 = vpop.f32.mrf.mxu0
    %v1008 = vadd.f32 %v164, %v1007
    %v1009 = vpop.f32.mrf.mxu0
    %1010 = vmatprep.mubr.f32.mxu0 0.0
    %1011 = vmatmul.mubr.f32.gmra.mxu0 %v405
    %v1012 = vpop.f32.mrf.mxu0
    %v1013 = vadd.f32 %v164, %v1012
    %v1014 = vpop.f32.mrf.mxu0
    %1015 = vmatprep.mubr.f32.mxu0 0.0
    %1016 = vmatmul.mubr.f32.gmra.mxu0 %v408
    %v1017 = vpop.f32.mrf.mxu0
    %v1018 = vadd.f32 %v164, %v1017
    %v1019 = vpop.f32.mrf.mxu0
    %1020 = vmatprep.mubr.f32.mxu0 0.0
    %1021 = vmatmul.mubr.f32.gmra.mxu0 %v411
    %v1022 = vpop.f32.mrf.mxu0
    %v1023 = vadd.f32 %v164, %v1022
    %v1024 = vpop.f32.mrf.mxu0
    %1025 = vmatprep.mubr.f32.mxu0 0.0
    %1026 = vmatmul.mubr.f32.gmra.mxu0 %v414
    %v1027 = vpop.f32.mrf.mxu0
    %v1028 = vadd.f32 %v164, %v1027
    %v1029 = vpop.f32.mrf.mxu0
    %1030 = vmatprep.mubr.f32.mxu0 0.0
    %1031 = vmatmul.mubr.f32.gmra.mxu0 %v417
    %v1032 = vpop.f32.mrf.mxu0
    %v1033 = vadd.f32 %v164, %v1032
    %v1034 = vpop.f32.mrf.mxu0
    %1035 = vmatprep.mubr.f32.mxu0 0.0
    %1036 = vmatmul.mubr.f32.gmra.mxu0 %v420
    %v1037 = vpop.f32.mrf.mxu0
    %v1038 = vadd.f32 %v164, %v1037
    %v1039 = vpop.f32.mrf.mxu0
    %1040 = vmatprep.mubr.f32.mxu0 0.0
    %1041 = vmatmul.mubr.f32.gmra.mxu0 %v423
    %v1042 = vpop.f32.mrf.mxu0
    %v1043 = vadd.f32 %v164, %v1042
    %v1044 = vpop.f32.mrf.mxu0
    %1045 = vmatprep.mubr.f32.mxu0 0.0
    %1046 = vmatmul.mubr.f32.gmra.mxu0 %v426
    %v1047 = vpop.f32.mrf.mxu0
    %v1048 = vadd.f32 %v164, %v1047
    %v1049 = vpop.f32.mrf.mxu0
    %1050 = vmatprep.mubr.f32.mxu0 0.0
    %1051 = vmatmul.mubr.f32.gmra.mxu0 %v429
    %v1052 = vpop.f32.mrf.mxu0
    %v1053 = vadd.f32 %v164, %v1052
    %v1054 = vpop.f32.mrf.mxu0
    %1055 = vmatprep.mubr.f32.mxu0 0.0
    %1056 = vmatmul.mubr.f32.gmra.mxu0 %v432
    %v1057 = vpop.f32.mrf.mxu0
    %v1058 = vadd.f32 %v164, %v1057
    %v1059 = vpop.f32.mrf.mxu0
    %1060 = vmatprep.mubr.f32.mxu0 0.0
    %1061 = vmatmul.mubr.f32.gmra.mxu0 %v435
    %v1062 = vpop.f32.mrf.mxu0
    %v1063 = vadd.f32 %v164, %v1062
    %v1064 = vpop.f32.mrf.mxu0
    %1065 = vmatprep.mubr.f32.mxu0 0.0
    %1066 = vmatmul.mubr.f32.gmra.mxu0 %v438
    %v1067 = vpop.f32.mrf.mxu0
    %v1068 = vadd.f32 %v164, %v1067
    %v1069 = vpop.f32.mrf.mxu0
    %1070 = vmatprep.mubr.f32.mxu0 0.0
    %1071 = vmatmul.mubr.f32.gmra.mxu0 %v441
    %v1072 = vpop.f32.mrf.mxu0
    %v1073 = vadd.f32 %v164, %v1072
    %v1074 = vpop.f32.mrf.mxu0
    %1075 = vmatprep.mubr.f32.mxu0 0.0
    %1076 = vmatmul.mubr.f32.gmra.mxu0 %v444
    %v1077 = vpop.f32.mrf.mxu0
    %v1078 = vadd.f32 %v164, %v1077
    %v1079 = vpop.f32.mrf.mxu0
    %1080 = vmatprep.mubr.f32.mxu0 0.0
    %1081 = vmatmul.mubr.f32.gmra.mxu0 %v447
    %v1082 = vpop.f32.mrf.mxu0
    %v1083 = vadd.f32 %v164, %v1082
    %v1084 = vpop.f32.mrf.mxu0
    %1085 = vmatprep.mubr.f32.mxu0 0.0
    %1086 = vmatmul.mubr.f32.gmra.mxu0 %v450
    %v1087 = vpop.f32.mrf.mxu0
    %v1088 = vadd.f32 %v164, %v1087
    %v1089 = vpop.f32.mrf.mxu0
    %1090 = vmatprep.mubr.f32.mxu0 0.0
    %1091 = vmatmul.mubr.f32.gmra.mxu0 %v453
    %v1092 = vpop.f32.mrf.mxu0
    %v1093 = vadd.f32 %v164, %v1092
    %v1094 = vpop.f32.mrf.mxu0
    %1095 = vmatprep.mubr.f32.mxu0 0.0
    %1096 = vmatmul.mubr.f32.gmra.mxu0 %v456
    %v1097 = vpop.f32.mrf.mxu0
    %v1098 = vadd.f32 %v164, %v1097
    %v1099 = vpop.f32.mrf.mxu0
    %1100 = vmatprep.mubr.f32.mxu0 0.0
    %1101 = vmatmul.mubr.f32.gmra.mxu0 %v459
    %v1102 = vpop.f32.mrf.mxu0
    %v1103 = vadd.f32 %v164, %v1102
    %v1104 = vpop.f32.mrf.mxu0
    %1105 = vmatprep.mubr.f32.mxu0 0.0
    %1106 = vmatmul.mubr.f32.gmra.mxu0 %v462
    %v1107 = vpop.f32.mrf.mxu0
    %v1108 = vadd.f32 %v164, %v1107
    %v1109 = vpop.f32.mrf.mxu0
    %1110 = vmatprep.mubr.f32.mxu0 0.0
    %1111 = vmatmul.mubr.f32.gmra.mxu0 %v465
    %v1112 = vpop.f32.mrf.mxu0
    %v1113 = vadd.f32 %v164, %v1112
    %v1114 = vpop.f32.mrf.mxu0
    %1115 = vmatprep.mubr.f32.mxu0 0.0
    %1116 = vmatmul.mubr.f32.gmra.mxu0 %v468
    %v1117 = vpop.f32.mrf.mxu0
    %v1118 = vadd.f32 %v164, %v1117
    %v1119 = vpop.f32.mrf.mxu0
    %1120 = vmatprep.mubr.f32.mxu0 0.0
    %1121 = vmatmul.mubr.f32.gmra.mxu0 %v471
    %v1122 = vpop.f32.mrf.mxu0
    %v1123 = vadd.f32 %v164, %v1122
    %v1124 = vpop.f32.mrf.mxu0
    %1125 = vmatprep.mubr.f32.mxu0 0.0
    %1126 = vmatmul.mubr.f32.gmra.mxu0 %v474
    %v1127 = vpop.f32.mrf.mxu0
    %v1128 = vadd.f32 %v164, %v1127
    %v1129 = vpop.f32.mrf.mxu0
    %1130 = vmatprep.mubr.f32.mxu0 0.0
    %1131 = vmatmul.mubr.f32.gmra.mxu0 %v477
    %v1132 = vpop.f32.mrf.mxu0
    %v1133 = vadd.f32 %v164, %v1132
    %v1134 = vpop.f32.mrf.mxu0
    %1135 = vmatprep.mubr.f32.mxu0 0.0
    %1136 = vmatmul.mubr.f32.gmra.mxu0 %v480
    %v1137 = vpop.f32.mrf.mxu0
    %v1138 = vadd.f32 %v164, %v1137
    %v1139 = vpop.f32.mrf.mxu0
    %1140 = vmatprep.mubr.f32.mxu0 0.0
    %1141 = vmatmul.mubr.f32.gmra.mxu0 %v483
    %v1142 = vpop.f32.mrf.mxu0
    %v1143 = vadd.f32 %v164, %v1142
    %v1144 = vpop.f32.mrf.mxu0
    %1145 = vmatprep.mubr.f32.mxu0 0.0
    %1146 = vmatmul.mubr.f32.gmra.mxu0 %v486
    %v1147 = vpop.f32.mrf.mxu0
    %v1148 = vadd.f32 %v164, %v1147
    %v1149 = vpop.f32.mrf.mxu0
    %1150 = vmatprep.mubr.f32.mxu0 0.0
    %1151 = vmatmul.mubr.f32.gmra.mxu0 %v489
    %v1152 = vpop.f32.mrf.mxu0
    %v1153 = vadd.f32 %v164, %v1152
    %v1154 = vpop.f32.mrf.mxu0
    %1155 = vmatprep.mubr.f32.mxu0 0.0
    %1156 = vmatmul.mubr.f32.gmra.mxu0 %v492
    %v1157 = vpop.f32.mrf.mxu0
    %v1158 = vadd.f32 %v164, %v1157
    %v1159 = vpop.f32.mrf.mxu0
    %1160 = vmatprep.mubr.f32.mxu0 0.0
    %1161 = vmatmul.mubr.f32.gmra.mxu0 %v495
    %v1162 = vpop.f32.mrf.mxu0
    %v1163 = vadd.f32 %v164, %v1162
    %v1164 = vpop.f32.mrf.mxu0
    %1165 = vmatprep.mubr.f32.mxu0 0.0
    %1166 = vmatmul.mubr.f32.gmra.mxu0 %v498
    %v1167 = vpop.f32.mrf.mxu0
    %v1168 = vadd.f32 %v164, %v1167
    %v1169 = vpop.f32.mrf.mxu0
    %1170 = vmatprep.mubr.f32.mxu0 0.0
    %1171 = vmatmul.mubr.f32.gmra.mxu0 %v501
    %v1172 = vpop.f32.mrf.mxu0
    %v1173 = vadd.f32 %v164, %v1172
    %v1174 = vpop.f32.mrf.mxu0
    %1175 = vmatprep.mubr.f32.mxu0 0.0
    %1176 = vmatmul.mubr.f32.gmra.mxu0 %v504
    %v1177 = vpop.f32.mrf.mxu0
    %v1178 = vadd.f32 %v164, %v1177
    %v1179 = vpop.f32.mrf.mxu0
    %1180 = vmatprep.mubr.f32.mxu0 0.0
    %1181 = vmatmul.mubr.f32.gmra.mxu0 %v507
    %v1182 = vpop.f32.mrf.mxu0
    %v1183 = vadd.f32 %v164, %v1182
    %v1184 = vpop.f32.mrf.mxu0
    %1185 = vmatprep.mubr.f32.mxu0 0.0
    %1186 = vmatmul.mubr.f32.gmra.mxu0 %v510
    %v1187 = vpop.f32.mrf.mxu0
    %v1188 = vadd.f32 %v164, %v1187
    %v1189 = vpop.f32.mrf.mxu0
    %1190 = vmatprep.mubr.f32.mxu0 0.0
    %1191 = vmatmul.mubr.f32.gmra.mxu0 %v513
    %v1192 = vpop.f32.mrf.mxu0
    %v1193 = vadd.f32 %v164, %v1192
    %v1194 = vpop.f32.mrf.mxu0
    %1195 = vmatprep.mubr.f32.mxu0 0.0
    %1196 = vmatmul.mubr.f32.gmra.mxu0 %v516
    %v1197 = vpop.f32.mrf.mxu0
    %v1198 = vadd.f32 %v164, %v1197
    %v1199 = vpop.f32.mrf.mxu0
    %1200 = vmatprep.mubr.f32.mxu0 0.0
    %1201 = vmatmul.mubr.f32.gmra.mxu0 %v519
    %v1202 = vpop.f32.mrf.mxu0
    %v1203 = vadd.f32 %v164, %v1202
    %v1204 = vpop.f32.mrf.mxu0
    %1205 = vmatprep.mubr.f32.mxu0 0.0
    %1206 = vmatmul.mubr.f32.gmra.mxu0 %v522
    %v1207 = vpop.f32.mrf.mxu0
    %v1208 = vadd.f32 %v164, %v1207
    %v1209 = vpop.f32.mrf.mxu0
    %1210 = vmatprep.mubr.f32.mxu0 0.0
    %1211 = vmatmul.mubr.f32.gmra.mxu0 %v525
    %v1212 = vpop.f32.mrf.mxu0
    %v1213 = vadd.f32 %v164, %v1212
    %v1214 = vpop.f32.mrf.mxu0
    %1215 = vmatprep.mubr.f32.mxu0 0.0
    %1216 = vmatmul.mubr.f32.gmra.mxu0 %v528
    %v1217 = vpop.f32.mrf.mxu0
    %v1218 = vadd.f32 %v164, %v1217
    %v1219 = vpop.f32.mrf.mxu0
    %1220 = vmatprep.mubr.f32.mxu0 0.0
    %1221 = vmatmul.mubr.f32.gmra.mxu0 %v531
    %v1222 = vpop.f32.mrf.mxu0
    %v1223 = vadd.f32 %v164, %v1222
    %v1224 = vpop.f32.mrf.mxu0
    %1225 = vmatprep.mubr.f32.mxu0 0.0
    %1226 = vmatmul.mubr.f32.gmra.mxu0 %v534
    %v1227 = vpop.f32.mrf.mxu0
    %v1228 = vadd.f32 %v164, %v1227
    %v1229 = vpop.f32.mrf.mxu0
    %1230 = vmatprep.mubr.f32.mxu0 0.0
    %1231 = vmatmul.mubr.f32.gmra.mxu0 %v537
    %v1232 = vpop.f32.mrf.mxu0
    %v1233 = vadd.f32 %v164, %v1232
    %v1234 = vpop.f32.mrf.mxu0
    %1235 = vmatprep.mubr.f32.mxu0 0.0
    %1236 = vmatmul.mubr.f32.gmra.mxu0 %v540
    %v1237 = vpop.f32.mrf.mxu0
    %v1238 = vadd.f32 %v164, %v1237
    %v1239 = vpop.f32.mrf.mxu0
    %1240 = vmatprep.mubr.f32.mxu0 0.0
    %1241 = vmatmul.mubr.f32.gmra.mxu0 %v543
    %v1242 = vpop.f32.mrf.mxu0
    %v1243 = vadd.f32 %v164, %v1242
    %v1244 = vpop.f32.mrf.mxu0
    %1245 = vmatprep.mubr.f32.mxu0 0.0
    %1246 = vmatmul.mubr.f32.gmra.mxu0 %v546
    %v1247 = vpop.f32.mrf.mxu0
    %v1248 = vadd.f32 %v164, %v1247
    %v1249 = vpop.f32.mrf.mxu0
    %1250 = vmatprep.mubr.f32.mxu0 0.0
    %1251 = vmatmul.mubr.f32.gmra.mxu0 %v549
    %v1252 = vpop.f32.mrf.mxu0
    %v1253 = vadd.f32 %v164, %v1252
    %v1254 = vpop.f32.mrf.mxu0
    %1255 = vdwg.mxu0
    %v1256 = vtanh.pop %v618
    %v1257 = vtanh.pop %v623
    %v1258 = vtanh.pop %v628
    %v1259 = vtanh.pop %v633
    %v1260 = vtanh.pop %v638
    %v1261 = vtanh.pop %v643
    %v1262 = vtanh.pop %v648
    %v1263 = vtanh.pop %v653
    %v1264 = vtanh.pop %v658
    %v1265 = vtanh.pop %v663
    %v1266 = vtanh.pop %v668
    %v1267 = vtanh.pop %v673
    %v1268 = vtanh.pop %v678
    %v1269 = vtanh.pop %v683
    %v1270 = vtanh.pop %v688
    %v1271 = vtanh.pop %v693
    %v1272 = vtanh.pop %v698
    %v1273 = vtanh.pop %v703
    %v1274 = vtanh.pop %v708
    %v1275 = vtanh.pop %v713
    %v1276 = vtanh.pop %v718
    %v1277 = vtanh.pop %v723
    %v1278 = vtanh.pop %v728
    %v1279 = vtanh.pop %v733
    %v1280 = vtanh.pop %v738
    %v1281 = vtanh.pop %v743
    %v1282 = vtanh.pop %v748
    %v1283 = vtanh.pop %v753
    %v1284 = vtanh.pop %v758
    %v1285 = vtanh.pop %v763
    %v1286 = vtanh.pop %v768
    %v1287 = vtanh.pop %v773
    %v1288 = vtanh.pop %v778
    %v1289 = vtanh.pop %v783
    %v1290 = vtanh.pop %v788
    %v1291 = vtanh.pop %v793
    %v1292 = vtanh.pop %v798
    %v1293 = vtanh.pop %v803
    %v1294 = vtanh.pop %v808
    %v1295 = vtanh.pop %v813
    %v1296 = vtanh.pop %v818
    %v1297 = vtanh.pop %v823
    %v1298 = vtanh.pop %v828
    %v1299 = vtanh.pop %v833
    %v1300 = vtanh.pop %v838
    %v1301 = vtanh.pop %v843
    %v1302 = vtanh.pop %v848
    %v1303 = vtanh.pop %v853
    %v1304 = vtanh.pop %v858
    %v1305 = vtanh.pop %v863
    %v1306 = vtanh.pop %v868
    %v1307 = vtanh.pop %v873
    %v1308 = vtanh.pop %v878
    %v1309 = vtanh.pop %v883
    %v1310 = vtanh.pop %v888
    %v1311 = vtanh.pop %v893
    %v1312 = vtanh.pop %v898
    %v1313 = vtanh.pop %v903
    %v1314 = vtanh.pop %v908
    %v1315 = vtanh.pop %v913
    %v1316 = vtanh.pop %v918
    %v1317 = vtanh.pop %v923
    %v1318 = vtanh.pop %v928
    %v1319 = vtanh.pop %v933
    %v1320 = vtanh.pop %v938
    %v1321 = vtanh.pop %v943
    %v1322 = vtanh.pop %v948
    %v1323 = vtanh.pop %v953
    %v1324 = vtanh.pop %v958
    %v1325 = vtanh.pop %v963
    %v1326 = vtanh.pop %v968
    %v1327 = vtanh.pop %v973
    %v1328 = vtanh.pop %v978
    %v1329 = vtanh.pop %v983
    %v1330 = vtanh.pop %v988
    %v1331 = vtanh.pop %v993
    %v1332 = vtanh.pop %v998
    %v1333 = vtanh.pop %v1003
    %v1334 = vtanh.pop %v1008
    %v1335 = vtanh.pop %v1013
    %v1336 = vtanh.pop %v1018
    %v1337 = vtanh.pop %v1023
    %v1338 = vtanh.pop %v1028
    %v1339 = vtanh.pop %v1033
    %v1340 = vtanh.pop %v1038
    %v1341 = vtanh.pop %v1043
    %v1342 = vtanh.pop %v1048
    %v1343 = vtanh.pop %v1053
    %v1344 = vtanh.pop %v1058
    %v1345 = vtanh.pop %v1063
    %v1346 = vtanh.pop %v1068
    %v1347 = vtanh.pop %v1073
    %v1348 = vtanh.pop %v1078
    %v1349 = vtanh.pop %v1083
    %v1350 = vtanh.pop %v1088
    %v1351 = vtanh.pop %v1093
    %v1352 = vtanh.pop %v1098
    %v1353 = vtanh.pop %v1103
    %v1354 = vtanh.pop %v1108
    %v1355 = vtanh.pop %v1113
    %v1356 = vtanh.pop %v1118
    %v1357 = vtanh.pop %v1123
    %v1358 = vtanh.pop %v1128
    %v1359 = vtanh.pop %v1133
    %v1360 = vtanh.pop %v1138
    %v1361 = vtanh.pop %v1143
    %v1362 = vtanh.pop %v1148
    %v1363 = vtanh.pop %v1153
    %v1364 = vtanh.pop %v1158
    %v1365 = vtanh.pop %v1163
    %v1366 = vtanh.pop %v1168
    %v1367 = vtanh.pop %v1173
    %v1368 = vtanh.pop %v1178
    %v1369 = vtanh.pop %v1183
    %v1370 = vtanh.pop %v1188
    %v1371 = vtanh.pop %v1193
    %v1372 = vtanh.pop %v1198
    %v1373 = vtanh.pop %v1203
    %v1374 = vtanh.pop %v1208
    %v1375 = vtanh.pop %v1213
    %v1376 = vtanh.pop %v1218
    %v1377 = vtanh.pop %v1223
    %v1378 = vtanh.pop %v1228
    %v1379 = vtanh.pop %v1233
    %v1380 = vtanh.pop %v1238
    %v1381 = vtanh.pop %v1243
    %v1382 = vtanh.pop %v1248
    %v1383 = vtanh.pop %v1253
    %v1384 = vld [vmem:[%s4] sm:$0xff]
    %v1385 = vld [vmem:[%s4 + $0x8] sm:$0xff]
    %vm1386 = vcmask 130048
    %v1388 = vsel %vm1386, %v1256, 0
    %v1391 = vsel %vm1386, %v1257, 0
    %v1394 = vsel %vm1386, %v1258, 0
    %v1397 = vsel %vm1386, %v1259, 0
    %v1400 = vsel %vm1386, %v1260, 0
    %v1403 = vsel %vm1386, %v1261, 0
    %v1406 = vsel %vm1386, %v1262, 0
    %v1409 = vsel %vm1386, %v1263, 0
    %v1412 = vsel %vm1386, %v1264, 0
    %v1415 = vsel %vm1386, %v1265, 0
    %v1418 = vsel %vm1386, %v1266, 0
    %v1421 = vsel %vm1386, %v1267, 0
    %v1424 = vsel %vm1386, %v1268, 0
    %v1427 = vsel %vm1386, %v1269, 0
    %v1430 = vsel %vm1386, %v1270, 0
    %v1433 = vsel %vm1386, %v1271, 0
    %v1436 = vsel %vm1386, %v1272, 0
    %v1439 = vsel %vm1386, %v1273, 0
    %v1442 = vsel %vm1386, %v1274, 0
    %v1445 = vsel %vm1386, %v1275, 0
    %v1448 = vsel %vm1386, %v1276, 0
    %v1451 = vsel %vm1386, %v1277, 0
    %v1454 = vsel %vm1386, %v1278, 0
    %v1457 = vsel %vm1386, %v1279, 0
    %v1460 = vsel %vm1386, %v1280, 0
    %v1463 = vsel %vm1386, %v1281, 0
    %v1466 = vsel %vm1386, %v1282, 0
    %v1469 = vsel %vm1386, %v1283, 0
    %v1472 = vsel %vm1386, %v1284, 0
    %v1475 = vsel %vm1386, %v1285, 0
    %v1478 = vsel %vm1386, %v1286, 0
    %v1481 = vsel %vm1386, %v1287, 0
    %v1484 = vsel %vm1386, %v1288, 0
    %v1487 = vsel %vm1386, %v1289, 0
    %v1490 = vsel %vm1386, %v1290, 0
    %v1493 = vsel %vm1386, %v1291, 0
    %v1496 = vsel %vm1386, %v1292, 0
    %v1499 = vsel %vm1386, %v1293, 0
    %v1502 = vsel %vm1386, %v1294, 0
    %v1505 = vsel %vm1386, %v1295, 0
    %v1508 = vsel %vm1386, %v1296, 0
    %v1511 = vsel %vm1386, %v1297, 0
    %v1514 = vsel %vm1386, %v1298, 0
    %v1517 = vsel %vm1386, %v1299, 0
    %v1520 = vsel %vm1386, %v1300, 0
    %v1523 = vsel %vm1386, %v1301, 0
    %v1526 = vsel %vm1386, %v1302, 0
    %v1529 = vsel %vm1386, %v1303, 0
    %v1532 = vsel %vm1386, %v1304, 0
    %v1535 = vsel %vm1386, %v1305, 0
    %v1538 = vsel %vm1386, %v1306, 0
    %v1541 = vsel %vm1386, %v1307, 0
    %v1544 = vsel %vm1386, %v1308, 0
    %v1547 = vsel %vm1386, %v1309, 0
    %v1550 = vsel %vm1386, %v1310, 0
    %v1553 = vsel %vm1386, %v1311, 0
    %v1556 = vsel %vm1386, %v1312, 0
    %v1559 = vsel %vm1386, %v1313, 0
    %v1562 = vsel %vm1386, %v1314, 0
    %v1565 = vsel %vm1386, %v1315, 0
    %v1568 = vsel %vm1386, %v1316, 0
    %v1571 = vsel %vm1386, %v1317, 0
    %v1574 = vsel %vm1386, %v1318, 0
    %v1577 = vsel %vm1386, %v1319, 0
    %v1580 = vsel %vm1386, %v1320, 0
    %v1583 = vsel %vm1386, %v1321, 0
    %v1586 = vsel %vm1386, %v1322, 0
    %v1589 = vsel %vm1386, %v1323, 0
    %v1592 = vsel %vm1386, %v1324, 0
    %v1595 = vsel %vm1386, %v1325, 0
    %v1598 = vsel %vm1386, %v1326, 0
    %v1601 = vsel %vm1386, %v1327, 0
    %v1604 = vsel %vm1386, %v1328, 0
    %v1607 = vsel %vm1386, %v1329, 0
    %v1610 = vsel %vm1386, %v1330, 0
    %v1613 = vsel %vm1386, %v1331, 0
    %v1616 = vsel %vm1386, %v1332, 0
    %v1619 = vsel %vm1386, %v1333, 0
    %v1622 = vsel %vm1386, %v1334, 0
    %v1625 = vsel %vm1386, %v1335, 0
    %v1628 = vsel %vm1386, %v1336, 0
    %v1631 = vsel %vm1386, %v1337, 0
    %v1634 = vsel %vm1386, %v1338, 0
    %v1637 = vsel %vm1386, %v1339, 0
    %v1640 = vsel %vm1386, %v1340, 0
    %v1643 = vsel %vm1386, %v1341, 0
    %v1646 = vsel %vm1386, %v1342, 0
    %v1649 = vsel %vm1386, %v1343, 0
    %v1652 = vsel %vm1386, %v1344, 0
    %v1655 = vsel %vm1386, %v1345, 0
    %v1658 = vsel %vm1386, %v1346, 0
    %v1661 = vsel %vm1386, %v1347, 0
    %v1664 = vsel %vm1386, %v1348, 0
    %v1667 = vsel %vm1386, %v1349, 0
    %v1670 = vsel %vm1386, %v1350, 0
    %v1673 = vsel %vm1386, %v1351, 0
    %v1676 = vsel %vm1386, %v1352, 0
    %v1679 = vsel %vm1386, %v1353, 0
    %v1682 = vsel %vm1386, %v1354, 0
    %v1685 = vsel %vm1386, %v1355, 0
    %v1688 = vsel %vm1386, %v1356, 0
    %v1691 = vsel %vm1386, %v1357, 0
    %v1694 = vsel %vm1386, %v1358, 0
    %v1697 = vsel %vm1386, %v1359, 0
    %v1700 = vsel %vm1386, %v1360, 0
    %v1703 = vsel %vm1386, %v1361, 0
    %v1706 = vsel %vm1386, %v1362, 0
    %v1709 = vsel %vm1386, %v1363, 0
    %v1712 = vsel %vm1386, %v1364, 0
    %v1715 = vsel %vm1386, %v1365, 0
    %v1718 = vsel %vm1386, %v1366, 0
    %v1721 = vsel %vm1386, %v1367, 0
    %v1724 = vsel %vm1386, %v1368, 0
    %v1727 = vsel %vm1386, %v1369, 0
    %v1730 = vsel %vm1386, %v1370, 0
    %v1733 = vsel %vm1386, %v1371, 0
    %v1736 = vsel %vm1386, %v1372, 0
    %v1739 = vsel %vm1386, %v1373, 0
    %v1742 = vsel %vm1386, %v1374, 0
    %v1745 = vsel %vm1386, %v1375, 0
    %v1748 = vsel %vm1386, %v1376, 0
    %v1751 = vsel %vm1386, %v1377, 0
    %v1754 = vsel %vm1386, %v1378, 0
    %v1757 = vsel %vm1386, %v1379, 0
    %v1760 = vsel %vm1386, %v1380, 0
    %v1763 = vsel %vm1386, %v1381, 0
    %v1766 = vsel %vm1386, %v1382, 0
    %v1769 = vsel %vm1386, %v1383, 0
    %1771 = vmatprep.subr.mxu0 0.0
    %1772 = vmatpush1.msra.mxu0 0.0
    %1773 = vmatprep.subr.mxu0 0.0
    %1774 = vmatpush1.msra.mxu0 0.0
    %1775 = vmatprep.subr.mxu0 0.0
    %1776 = vmatpush1.msra.mxu0 0.0
    %1777 = vmatprep.subr.mxu0 0.0
    %1778 = vmatpush1.msra.mxu0 0.0
    %1779 = vmatprep.subr.mxu0 0.0
    %1780 = vmatpush1.msra.mxu0 0.0
    %1781 = vmatprep.subr.mxu0 0.0
    %1782 = vmatpush1.msra.mxu0 0.0
    %1783 = vmatprep.subr.mxu0 0.0
    %1784 = vmatpush1.msra.mxu0 0.0
    %1785 = vmatprep.subr.mxu0 0.0
    %1786 = vmatpush1.msra.mxu0 0.0
    %1787 = vmatprep.subr.mxu0 0.0
    %1788 = vmatpush1.msra.mxu0 0.0
    %1789 = vmatprep.subr.mxu0 0.0
    %1790 = vmatpush1.msra.mxu0 0.0
    %1791 = vmatprep.subr.mxu0 0.0
    %1792 = vmatpush1.msra.mxu0 0.0
    %1793 = vmatprep.subr.mxu0 0.0
    %1794 = vmatpush1.msra.mxu0 0.0
    %1795 = vmatprep.subr.mxu0 0.0
    %1796 = vmatpush1.msra.mxu0 0.0
    %1797 = vmatprep.subr.mxu0 0.0
    %1798 = vmatpush1.msra.mxu0 0.0
    %1799 = vmatprep.subr.mxu0 0.0
    %1800 = vmatpush1.msra.mxu0 %v1385
    %1801 = vmatprep.subr.mxu0 0.0
    %1802 = vmatpush1.msra.mxu0 %v1384
    %1803 = vmatprep.subr.mxu0 0.0
    %1804 = vmatpush2.msra.mxu0 0.0
    %1805 = vmatprep.subr.mxu0 0.0
    %1806 = vmatpush2.msra.mxu0 0.0
    %1807 = vmatprep.subr.mxu0 0.0
    %1808 = vmatpush2.msra.mxu0 0.0
    %1809 = vmatprep.subr.mxu0 0.0
    %1810 = vmatpush2.msra.mxu0 0.0
    %1811 = vmatprep.subr.mxu0 0.0
    %1812 = vmatpush2.msra.mxu0 0.0
    %1813 = vmatprep.subr.mxu0 0.0
    %1814 = vmatpush2.msra.mxu0 0.0
    %1815 = vmatprep.subr.mxu0 0.0
    %1816 = vmatpush2.msra.mxu0 0.0
    %1817 = vmatprep.subr.mxu0 0.0
    %1818 = vmatpush2.msra.mxu0 0.0
    %1819 = vmatprep.subr.mxu0 0.0
    %1820 = vmatpush2.msra.mxu0 0.0
    %1821 = vmatprep.subr.mxu0 0.0
    %1822 = vmatpush2.msra.mxu0 0.0
    %1823 = vmatprep.subr.mxu0 0.0
    %1824 = vmatpush2.msra.mxu0 0.0
    %1825 = vmatprep.subr.mxu0 0.0
    %1826 = vmatpush2.msra.mxu0 0.0
    %1827 = vmatprep.subr.mxu0 0.0
    %1828 = vmatpush2.msra.mxu0 0.0
    %1829 = vmatprep.subr.mxu0 0.0
    %1830 = vmatpush2.msra.mxu0 0.0
    %1831 = vmatprep.subr.mxu0 0.0
    %1832 = vmatpush2.msra.mxu0 0.0
    %1833 = vmatprep.subr.mxu0 0.0
    %1834 = vmatpush2.msra.mxu0 0.0
    %1835 = vmatprep.mubr.f32.mxu0 0.0
    %1836 = vmatmul.mubr.f32.gmra.mxu0 %v1388
    %v1837 = vpop.f32.mrf.mxu0
    %v1838 = vadd.f32 0.0, %v1837
    %v1839 = vpop.f32.mrf.mxu0
    %1840 = vmatprep.mubr.f32.mxu0 0.0
    %1841 = vmatmul.mubr.f32.gmra.mxu0 %v1391
    %v1842 = vpop.f32.mrf.mxu0
    %v1843 = vadd.f32 0.0, %v1842
    %v1844 = vpop.f32.mrf.mxu0
    %1845 = vmatprep.mubr.f32.mxu0 0.0
    %1846 = vmatmul.mubr.f32.gmra.mxu0 %v1394
    %v1847 = vpop.f32.mrf.mxu0
    %v1848 = vadd.f32 0.0, %v1847
    %v1849 = vpop.f32.mrf.mxu0
    %1850 = vmatprep.mubr.f32.mxu0 0.0
    %1851 = vmatmul.mubr.f32.gmra.mxu0 %v1397
    %v1852 = vpop.f32.mrf.mxu0
    %v1853 = vadd.f32 0.0, %v1852
    %v1854 = vpop.f32.mrf.mxu0
    %1855 = vmatprep.mubr.f32.mxu0 0.0
    %1856 = vmatmul.mubr.f32.gmra.mxu0 %v1400
    %v1857 = vpop.f32.mrf.mxu0
    %v1858 = vadd.f32 0.0, %v1857
    %v1859 = vpop.f32.mrf.mxu0
    %1860 = vmatprep.mubr.f32.mxu0 0.0
    %1861 = vmatmul.mubr.f32.gmra.mxu0 %v1403
    %v1862 = vpop.f32.mrf.mxu0
    %v1863 = vadd.f32 0.0, %v1862
    %v1864 = vpop.f32.mrf.mxu0
    %1865 = vmatprep.mubr.f32.mxu0 0.0
    %1866 = vmatmul.mubr.f32.gmra.mxu0 %v1406
    %v1867 = vpop.f32.mrf.mxu0
    %v1868 = vadd.f32 0.0, %v1867
    %v1869 = vpop.f32.mrf.mxu0
    %1870 = vmatprep.mubr.f32.mxu0 0.0
    %1871 = vmatmul.mubr.f32.gmra.mxu0 %v1409
    %v1872 = vpop.f32.mrf.mxu0
    %v1873 = vadd.f32 0.0, %v1872
    %v1874 = vpop.f32.mrf.mxu0
    %1875 = vmatprep.mubr.f32.mxu0 0.0
    %1876 = vmatmul.mubr.f32.gmra.mxu0 %v1412
    %v1877 = vpop.f32.mrf.mxu0
    %v1878 = vadd.f32 0.0, %v1877
    %v1879 = vpop.f32.mrf.mxu0
    %1880 = vmatprep.mubr.f32.mxu0 0.0
    %1881 = vmatmul.mubr.f32.gmra.mxu0 %v1415
    %v1882 = vpop.f32.mrf.mxu0
    %v1883 = vadd.f32 0.0, %v1882
    %v1884 = vpop.f32.mrf.mxu0
    %1885 = vmatprep.mubr.f32.mxu0 0.0
    %1886 = vmatmul.mubr.f32.gmra.mxu0 %v1418
    %v1887 = vpop.f32.mrf.mxu0
    %v1888 = vadd.f32 0.0, %v1887
    %v1889 = vpop.f32.mrf.mxu0
    %1890 = vmatprep.mubr.f32.mxu0 0.0
    %1891 = vmatmul.mubr.f32.gmra.mxu0 %v1421
    %v1892 = vpop.f32.mrf.mxu0
    %v1893 = vadd.f32 0.0, %v1892
    %v1894 = vpop.f32.mrf.mxu0
    %1895 = vmatprep.mubr.f32.mxu0 0.0
    %1896 = vmatmul.mubr.f32.gmra.mxu0 %v1424
    %v1897 = vpop.f32.mrf.mxu0
    %v1898 = vadd.f32 0.0, %v1897
    %v1899 = vpop.f32.mrf.mxu0
    %1900 = vmatprep.mubr.f32.mxu0 0.0
    %1901 = vmatmul.mubr.f32.gmra.mxu0 %v1427
    %v1902 = vpop.f32.mrf.mxu0
    %v1903 = vadd.f32 0.0, %v1902
    %v1904 = vpop.f32.mrf.mxu0
    %1905 = vmatprep.mubr.f32.mxu0 0.0
    %1906 = vmatmul.mubr.f32.gmra.mxu0 %v1430
    %v1907 = vpop.f32.mrf.mxu0
    %v1908 = vadd.f32 0.0, %v1907
    %v1909 = vpop.f32.mrf.mxu0
    %1910 = vmatprep.mubr.f32.mxu0 0.0
    %1911 = vmatmul.mubr.f32.gmra.mxu0 %v1433
    %v1912 = vpop.f32.mrf.mxu0
    %v1913 = vadd.f32 0.0, %v1912
    %v1914 = vpop.f32.mrf.mxu0
    %1915 = vmatprep.mubr.f32.mxu0 0.0
    %1916 = vmatmul.mubr.f32.gmra.mxu0 %v1436
    %v1917 = vpop.f32.mrf.mxu0
    %v1918 = vadd.f32 0.0, %v1917
    %v1919 = vpop.f32.mrf.mxu0
    %1920 = vmatprep.mubr.f32.mxu0 0.0
    %1921 = vmatmul.mubr.f32.gmra.mxu0 %v1439
    %v1922 = vpop.f32.mrf.mxu0
    %v1923 = vadd.f32 0.0, %v1922
    %v1924 = vpop.f32.mrf.mxu0
    %1925 = vmatprep.mubr.f32.mxu0 0.0
    %1926 = vmatmul.mubr.f32.gmra.mxu0 %v1442
    %v1927 = vpop.f32.mrf.mxu0
    %v1928 = vadd.f32 0.0, %v1927
    %v1929 = vpop.f32.mrf.mxu0
    %1930 = vmatprep.mubr.f32.mxu0 0.0
    %1931 = vmatmul.mubr.f32.gmra.mxu0 %v1445
    %v1932 = vpop.f32.mrf.mxu0
    %v1933 = vadd.f32 0.0, %v1932
    %v1934 = vpop.f32.mrf.mxu0
    %1935 = vmatprep.mubr.f32.mxu0 0.0
    %1936 = vmatmul.mubr.f32.gmra.mxu0 %v1448
    %v1937 = vpop.f32.mrf.mxu0
    %v1938 = vadd.f32 0.0, %v1937
    %v1939 = vpop.f32.mrf.mxu0
    %1940 = vmatprep.mubr.f32.mxu0 0.0
    %1941 = vmatmul.mubr.f32.gmra.mxu0 %v1451
    %v1942 = vpop.f32.mrf.mxu0
    %v1943 = vadd.f32 0.0, %v1942
    %v1944 = vpop.f32.mrf.mxu0
    %1945 = vmatprep.mubr.f32.mxu0 0.0
    %1946 = vmatmul.mubr.f32.gmra.mxu0 %v1454
    %v1947 = vpop.f32.mrf.mxu0
    %v1948 = vadd.f32 0.0, %v1947
    %v1949 = vpop.f32.mrf.mxu0
    %1950 = vmatprep.mubr.f32.mxu0 0.0
    %1951 = vmatmul.mubr.f32.gmra.mxu0 %v1457
    %v1952 = vpop.f32.mrf.mxu0
    %v1953 = vadd.f32 0.0, %v1952
    %v1954 = vpop.f32.mrf.mxu0
    %1955 = vmatprep.mubr.f32.mxu0 0.0
    %1956 = vmatmul.mubr.f32.gmra.mxu0 %v1460
    %v1957 = vpop.f32.mrf.mxu0
    %v1958 = vadd.f32 0.0, %v1957
    %v1959 = vpop.f32.mrf.mxu0
    %1960 = vmatprep.mubr.f32.mxu0 0.0
    %1961 = vmatmul.mubr.f32.gmra.mxu0 %v1463
    %v1962 = vpop.f32.mrf.mxu0
    %v1963 = vadd.f32 0.0, %v1962
    %v1964 = vpop.f32.mrf.mxu0
    %1965 = vmatprep.mubr.f32.mxu0 0.0
    %1966 = vmatmul.mubr.f32.gmra.mxu0 %v1466
    %v1967 = vpop.f32.mrf.mxu0
    %v1968 = vadd.f32 0.0, %v1967
    %v1969 = vpop.f32.mrf.mxu0
    %1970 = vmatprep.mubr.f32.mxu0 0.0
    %1971 = vmatmul.mubr.f32.gmra.mxu0 %v1469
    %v1972 = vpop.f32.mrf.mxu0
    %v1973 = vadd.f32 0.0, %v1972
    %v1974 = vpop.f32.mrf.mxu0
    %1975 = vmatprep.mubr.f32.mxu0 0.0
    %1976 = vmatmul.mubr.f32.gmra.mxu0 %v1472
    %v1977 = vpop.f32.mrf.mxu0
    %v1978 = vadd.f32 0.0, %v1977
    %v1979 = vpop.f32.mrf.mxu0
    %1980 = vmatprep.mubr.f32.mxu0 0.0
    %1981 = vmatmul.mubr.f32.gmra.mxu0 %v1475
    %v1982 = vpop.f32.mrf.mxu0
    %v1983 = vadd.f32 0.0, %v1982
    %v1984 = vpop.f32.mrf.mxu0
    %1985 = vmatprep.mubr.f32.mxu0 0.0
    %1986 = vmatmul.mubr.f32.gmra.mxu0 %v1478
    %v1987 = vpop.f32.mrf.mxu0
    %v1988 = vadd.f32 0.0, %v1987
    %v1989 = vpop.f32.mrf.mxu0
    %1990 = vmatprep.mubr.f32.mxu0 0.0
    %1991 = vmatmul.mubr.f32.gmra.mxu0 %v1481
    %v1992 = vpop.f32.mrf.mxu0
    %v1993 = vadd.f32 0.0, %v1992
    %v1994 = vpop.f32.mrf.mxu0
    %1995 = vmatprep.mubr.f32.mxu0 0.0
    %1996 = vmatmul.mubr.f32.gmra.mxu0 %v1484
    %v1997 = vpop.f32.mrf.mxu0
    %v1998 = vadd.f32 0.0, %v1997
    %v1999 = vpop.f32.mrf.mxu0
    %2000 = vmatprep.mubr.f32.mxu0 0.0
    %2001 = vmatmul.mubr.f32.gmra.mxu0 %v1487
    %v2002 = vpop.f32.mrf.mxu0
    %v2003 = vadd.f32 0.0, %v2002
    %v2004 = vpop.f32.mrf.mxu0
    %2005 = vmatprep.mubr.f32.mxu0 0.0
    %2006 = vmatmul.mubr.f32.gmra.mxu0 %v1490
    %v2007 = vpop.f32.mrf.mxu0
    %v2008 = vadd.f32 0.0, %v2007
    %v2009 = vpop.f32.mrf.mxu0
    %2010 = vmatprep.mubr.f32.mxu0 0.0
    %2011 = vmatmul.mubr.f32.gmra.mxu0 %v1493
    %v2012 = vpop.f32.mrf.mxu0
    %v2013 = vadd.f32 0.0, %v2012
    %v2014 = vpop.f32.mrf.mxu0
    %2015 = vmatprep.mubr.f32.mxu0 0.0
    %2016 = vmatmul.mubr.f32.gmra.mxu0 %v1496
    %v2017 = vpop.f32.mrf.mxu0
    %v2018 = vadd.f32 0.0, %v2017
    %v2019 = vpop.f32.mrf.mxu0
    %2020 = vmatprep.mubr.f32.mxu0 0.0
    %2021 = vmatmul.mubr.f32.gmra.mxu0 %v1499
    %v2022 = vpop.f32.mrf.mxu0
    %v2023 = vadd.f32 0.0, %v2022
    %v2024 = vpop.f32.mrf.mxu0
    %2025 = vmatprep.mubr.f32.mxu0 0.0
    %2026 = vmatmul.mubr.f32.gmra.mxu0 %v1502
    %v2027 = vpop.f32.mrf.mxu0
    %v2028 = vadd.f32 0.0, %v2027
    %v2029 = vpop.f32.mrf.mxu0
    %2030 = vmatprep.mubr.f32.mxu0 0.0
    %2031 = vmatmul.mubr.f32.gmra.mxu0 %v1505
    %v2032 = vpop.f32.mrf.mxu0
    %v2033 = vadd.f32 0.0, %v2032
    %v2034 = vpop.f32.mrf.mxu0
    %2035 = vmatprep.mubr.f32.mxu0 0.0
    %2036 = vmatmul.mubr.f32.gmra.mxu0 %v1508
    %v2037 = vpop.f32.mrf.mxu0
    %v2038 = vadd.f32 0.0, %v2037
    %v2039 = vpop.f32.mrf.mxu0
    %2040 = vmatprep.mubr.f32.mxu0 0.0
    %2041 = vmatmul.mubr.f32.gmra.mxu0 %v1511
    %v2042 = vpop.f32.mrf.mxu0
    %v2043 = vadd.f32 0.0, %v2042
    %v2044 = vpop.f32.mrf.mxu0
    %2045 = vmatprep.mubr.f32.mxu0 0.0
    %2046 = vmatmul.mubr.f32.gmra.mxu0 %v1514
    %v2047 = vpop.f32.mrf.mxu0
    %v2048 = vadd.f32 0.0, %v2047
    %v2049 = vpop.f32.mrf.mxu0
    %2050 = vmatprep.mubr.f32.mxu0 0.0
    %2051 = vmatmul.mubr.f32.gmra.mxu0 %v1517
    %v2052 = vpop.f32.mrf.mxu0
    %v2053 = vadd.f32 0.0, %v2052
    %v2054 = vpop.f32.mrf.mxu0
    %2055 = vmatprep.mubr.f32.mxu0 0.0
    %2056 = vmatmul.mubr.f32.gmra.mxu0 %v1520
    %v2057 = vpop.f32.mrf.mxu0
    %v2058 = vadd.f32 0.0, %v2057
    %v2059 = vpop.f32.mrf.mxu0
    %2060 = vmatprep.mubr.f32.mxu0 0.0
    %2061 = vmatmul.mubr.f32.gmra.mxu0 %v1523
    %v2062 = vpop.f32.mrf.mxu0
    %v2063 = vadd.f32 0.0, %v2062
    %v2064 = vpop.f32.mrf.mxu0
    %2065 = vmatprep.mubr.f32.mxu0 0.0
    %2066 = vmatmul.mubr.f32.gmra.mxu0 %v1526
    %v2067 = vpop.f32.mrf.mxu0
    %v2068 = vadd.f32 0.0, %v2067
    %v2069 = vpop.f32.mrf.mxu0
    %2070 = vmatprep.mubr.f32.mxu0 0.0
    %2071 = vmatmul.mubr.f32.gmra.mxu0 %v1529
    %v2072 = vpop.f32.mrf.mxu0
    %v2073 = vadd.f32 0.0, %v2072
    %v2074 = vpop.f32.mrf.mxu0
    %2075 = vmatprep.mubr.f32.mxu0 0.0
    %2076 = vmatmul.mubr.f32.gmra.mxu0 %v1532
    %v2077 = vpop.f32.mrf.mxu0
    %v2078 = vadd.f32 0.0, %v2077
    %v2079 = vpop.f32.mrf.mxu0
    %2080 = vmatprep.mubr.f32.mxu0 0.0
    %2081 = vmatmul.mubr.f32.gmra.mxu0 %v1535
    %v2082 = vpop.f32.mrf.mxu0
    %v2083 = vadd.f32 0.0, %v2082
    %v2084 = vpop.f32.mrf.mxu0
    %2085 = vmatprep.mubr.f32.mxu0 0.0
    %2086 = vmatmul.mubr.f32.gmra.mxu0 %v1538
    %v2087 = vpop.f32.mrf.mxu0
    %v2088 = vadd.f32 0.0, %v2087
    %v2089 = vpop.f32.mrf.mxu0
    %2090 = vmatprep.mubr.f32.mxu0 0.0
    %2091 = vmatmul.mubr.f32.gmra.mxu0 %v1541
    %v2092 = vpop.f32.mrf.mxu0
    %v2093 = vadd.f32 0.0, %v2092
    %v2094 = vpop.f32.mrf.mxu0
    %2095 = vmatprep.mubr.f32.mxu0 0.0
    %2096 = vmatmul.mubr.f32.gmra.mxu0 %v1544
    %v2097 = vpop.f32.mrf.mxu0
    %v2098 = vadd.f32 0.0, %v2097
    %v2099 = vpop.f32.mrf.mxu0
    %2100 = vmatprep.mubr.f32.mxu0 0.0
    %2101 = vmatmul.mubr.f32.gmra.mxu0 %v1547
    %v2102 = vpop.f32.mrf.mxu0
    %v2103 = vadd.f32 0.0, %v2102
    %v2104 = vpop.f32.mrf.mxu0
    %2105 = vmatprep.mubr.f32.mxu0 0.0
    %2106 = vmatmul.mubr.f32.gmra.mxu0 %v1550
    %v2107 = vpop.f32.mrf.mxu0
    %v2108 = vadd.f32 0.0, %v2107
    %v2109 = vpop.f32.mrf.mxu0
    %2110 = vmatprep.mubr.f32.mxu0 0.0
    %2111 = vmatmul.mubr.f32.gmra.mxu0 %v1553
    %v2112 = vpop.f32.mrf.mxu0
    %v2113 = vadd.f32 0.0, %v2112
    %v2114 = vpop.f32.mrf.mxu0
    %2115 = vmatprep.mubr.f32.mxu0 0.0
    %2116 = vmatmul.mubr.f32.gmra.mxu0 %v1556
    %v2117 = vpop.f32.mrf.mxu0
    %v2118 = vadd.f32 0.0, %v2117
    %v2119 = vpop.f32.mrf.mxu0
    %2120 = vmatprep.mubr.f32.mxu0 0.0
    %2121 = vmatmul.mubr.f32.gmra.mxu0 %v1559
    %v2122 = vpop.f32.mrf.mxu0
    %v2123 = vadd.f32 0.0, %v2122
    %v2124 = vpop.f32.mrf.mxu0
    %2125 = vmatprep.mubr.f32.mxu0 0.0
    %2126 = vmatmul.mubr.f32.gmra.mxu0 %v1562
    %v2127 = vpop.f32.mrf.mxu0
    %v2128 = vadd.f32 0.0, %v2127
    %v2129 = vpop.f32.mrf.mxu0
    %2130 = vmatprep.mubr.f32.mxu0 0.0
    %2131 = vmatmul.mubr.f32.gmra.mxu0 %v1565
    %v2132 = vpop.f32.mrf.mxu0
    %v2133 = vadd.f32 0.0, %v2132
    %v2134 = vpop.f32.mrf.mxu0
    %2135 = vmatprep.mubr.f32.mxu0 0.0
    %2136 = vmatmul.mubr.f32.gmra.mxu0 %v1568
    %v2137 = vpop.f32.mrf.mxu0
    %v2138 = vadd.f32 0.0, %v2137
    %v2139 = vpop.f32.mrf.mxu0
    %2140 = vmatprep.mubr.f32.mxu0 0.0
    %2141 = vmatmul.mubr.f32.gmra.mxu0 %v1571
    %v2142 = vpop.f32.mrf.mxu0
    %v2143 = vadd.f32 0.0, %v2142
    %v2144 = vpop.f32.mrf.mxu0
    %2145 = vmatprep.mubr.f32.mxu0 0.0
    %2146 = vmatmul.mubr.f32.gmra.mxu0 %v1574
    %v2147 = vpop.f32.mrf.mxu0
    %v2148 = vadd.f32 0.0, %v2147
    %v2149 = vpop.f32.mrf.mxu0
    %2150 = vmatprep.mubr.f32.mxu0 0.0
    %2151 = vmatmul.mubr.f32.gmra.mxu0 %v1577
    %v2152 = vpop.f32.mrf.mxu0
    %v2153 = vadd.f32 0.0, %v2152
    %v2154 = vpop.f32.mrf.mxu0
    %2155 = vmatprep.mubr.f32.mxu0 0.0
    %2156 = vmatmul.mubr.f32.gmra.mxu0 %v1580
    %v2157 = vpop.f32.mrf.mxu0
    %v2158 = vadd.f32 0.0, %v2157
    %v2159 = vpop.f32.mrf.mxu0
    %2160 = vmatprep.mubr.f32.mxu0 0.0
    %2161 = vmatmul.mubr.f32.gmra.mxu0 %v1583
    %v2162 = vpop.f32.mrf.mxu0
    %v2163 = vadd.f32 0.0, %v2162
    %v2164 = vpop.f32.mrf.mxu0
    %2165 = vmatprep.mubr.f32.mxu0 0.0
    %2166 = vmatmul.mubr.f32.gmra.mxu0 %v1586
    %v2167 = vpop.f32.mrf.mxu0
    %v2168 = vadd.f32 0.0, %v2167
    %v2169 = vpop.f32.mrf.mxu0
    %2170 = vmatprep.mubr.f32.mxu0 0.0
    %2171 = vmatmul.mubr.f32.gmra.mxu0 %v1589
    %v2172 = vpop.f32.mrf.mxu0
    %v2173 = vadd.f32 0.0, %v2172
    %v2174 = vpop.f32.mrf.mxu0
    %2175 = vmatprep.mubr.f32.mxu0 0.0
    %2176 = vmatmul.mubr.f32.gmra.mxu0 %v1592
    %v2177 = vpop.f32.mrf.mxu0
    %v2178 = vadd.f32 0.0, %v2177
    %v2179 = vpop.f32.mrf.mxu0
    %2180 = vmatprep.mubr.f32.mxu0 0.0
    %2181 = vmatmul.mubr.f32.gmra.mxu0 %v1595
    %v2182 = vpop.f32.mrf.mxu0
    %v2183 = vadd.f32 0.0, %v2182
    %v2184 = vpop.f32.mrf.mxu0
    %2185 = vmatprep.mubr.f32.mxu0 0.0
    %2186 = vmatmul.mubr.f32.gmra.mxu0 %v1598
    %v2187 = vpop.f32.mrf.mxu0
    %v2188 = vadd.f32 0.0, %v2187
    %v2189 = vpop.f32.mrf.mxu0
    %2190 = vmatprep.mubr.f32.mxu0 0.0
    %2191 = vmatmul.mubr.f32.gmra.mxu0 %v1601
    %v2192 = vpop.f32.mrf.mxu0
    %v2193 = vadd.f32 0.0, %v2192
    %v2194 = vpop.f32.mrf.mxu0
    %2195 = vmatprep.mubr.f32.mxu0 0.0
    %2196 = vmatmul.mubr.f32.gmra.mxu0 %v1604
    %v2197 = vpop.f32.mrf.mxu0
    %v2198 = vadd.f32 0.0, %v2197
    %v2199 = vpop.f32.mrf.mxu0
    %2200 = vmatprep.mubr.f32.mxu0 0.0
    %2201 = vmatmul.mubr.f32.gmra.mxu0 %v1607
    %v2202 = vpop.f32.mrf.mxu0
    %v2203 = vadd.f32 0.0, %v2202
    %v2204 = vpop.f32.mrf.mxu0
    %2205 = vmatprep.mubr.f32.mxu0 0.0
    %2206 = vmatmul.mubr.f32.gmra.mxu0 %v1610
    %v2207 = vpop.f32.mrf.mxu0
    %v2208 = vadd.f32 0.0, %v2207
    %v2209 = vpop.f32.mrf.mxu0
    %2210 = vmatprep.mubr.f32.mxu0 0.0
    %2211 = vmatmul.mubr.f32.gmra.mxu0 %v1613
    %v2212 = vpop.f32.mrf.mxu0
    %v2213 = vadd.f32 0.0, %v2212
    %v2214 = vpop.f32.mrf.mxu0
    %2215 = vmatprep.mubr.f32.mxu0 0.0
    %2216 = vmatmul.mubr.f32.gmra.mxu0 %v1616
    %v2217 = vpop.f32.mrf.mxu0
    %v2218 = vadd.f32 0.0, %v2217
    %v2219 = vpop.f32.mrf.mxu0
    %2220 = vmatprep.mubr.f32.mxu0 0.0
    %2221 = vmatmul.mubr.f32.gmra.mxu0 %v1619
    %v2222 = vpop.f32.mrf.mxu0
    %v2223 = vadd.f32 0.0, %v2222
    %v2224 = vpop.f32.mrf.mxu0
    %2225 = vmatprep.mubr.f32.mxu0 0.0
    %2226 = vmatmul.mubr.f32.gmra.mxu0 %v1622
    %v2227 = vpop.f32.mrf.mxu0
    %v2228 = vadd.f32 0.0, %v2227
    %v2229 = vpop.f32.mrf.mxu0
    %2230 = vmatprep.mubr.f32.mxu0 0.0
    %2231 = vmatmul.mubr.f32.gmra.mxu0 %v1625
    %v2232 = vpop.f32.mrf.mxu0
    %v2233 = vadd.f32 0.0, %v2232
    %v2234 = vpop.f32.mrf.mxu0
    %2235 = vmatprep.mubr.f32.mxu0 0.0
    %2236 = vmatmul.mubr.f32.gmra.mxu0 %v1628
    %v2237 = vpop.f32.mrf.mxu0
    %v2238 = vadd.f32 0.0, %v2237
    %v2239 = vpop.f32.mrf.mxu0
    %2240 = vmatprep.mubr.f32.mxu0 0.0
    %2241 = vmatmul.mubr.f32.gmra.mxu0 %v1631
    %v2242 = vpop.f32.mrf.mxu0
    %v2243 = vadd.f32 0.0, %v2242
    %v2244 = vpop.f32.mrf.mxu0
    %2245 = vmatprep.mubr.f32.mxu0 0.0
    %2246 = vmatmul.mubr.f32.gmra.mxu0 %v1634
    %v2247 = vpop.f32.mrf.mxu0
    %v2248 = vadd.f32 0.0, %v2247
    %v2249 = vpop.f32.mrf.mxu0
    %2250 = vmatprep.mubr.f32.mxu0 0.0
    %2251 = vmatmul.mubr.f32.gmra.mxu0 %v1637
    %v2252 = vpop.f32.mrf.mxu0
    %v2253 = vadd.f32 0.0, %v2252
    %v2254 = vpop.f32.mrf.mxu0
    %2255 = vmatprep.mubr.f32.mxu0 0.0
    %2256 = vmatmul.mubr.f32.gmra.mxu0 %v1640
    %v2257 = vpop.f32.mrf.mxu0
    %v2258 = vadd.f32 0.0, %v2257
    %v2259 = vpop.f32.mrf.mxu0
    %2260 = vmatprep.mubr.f32.mxu0 0.0
    %2261 = vmatmul.mubr.f32.gmra.mxu0 %v1643
    %v2262 = vpop.f32.mrf.mxu0
    %v2263 = vadd.f32 0.0, %v2262
    %v2264 = vpop.f32.mrf.mxu0
    %2265 = vmatprep.mubr.f32.mxu0 0.0
    %2266 = vmatmul.mubr.f32.gmra.mxu0 %v1646
    %v2267 = vpop.f32.mrf.mxu0
    %v2268 = vadd.f32 0.0, %v2267
    %v2269 = vpop.f32.mrf.mxu0
    %2270 = vmatprep.mubr.f32.mxu0 0.0
    %2271 = vmatmul.mubr.f32.gmra.mxu0 %v1649
    %v2272 = vpop.f32.mrf.mxu0
    %v2273 = vadd.f32 0.0, %v2272
    %v2274 = vpop.f32.mrf.mxu0
    %2275 = vmatprep.mubr.f32.mxu0 0.0
    %2276 = vmatmul.mubr.f32.gmra.mxu0 %v1652
    %v2277 = vpop.f32.mrf.mxu0
    %v2278 = vadd.f32 0.0, %v2277
    %v2279 = vpop.f32.mrf.mxu0
    %2280 = vmatprep.mubr.f32.mxu0 0.0
    %2281 = vmatmul.mubr.f32.gmra.mxu0 %v1655
    %v2282 = vpop.f32.mrf.mxu0
    %v2283 = vadd.f32 0.0, %v2282
    %v2284 = vpop.f32.mrf.mxu0
    %2285 = vmatprep.mubr.f32.mxu0 0.0
    %2286 = vmatmul.mubr.f32.gmra.mxu0 %v1658
    %v2287 = vpop.f32.mrf.mxu0
    %v2288 = vadd.f32 0.0, %v2287
    %v2289 = vpop.f32.mrf.mxu0
    %2290 = vmatprep.mubr.f32.mxu0 0.0
    %2291 = vmatmul.mubr.f32.gmra.mxu0 %v1661
    %v2292 = vpop.f32.mrf.mxu0
    %v2293 = vadd.f32 0.0, %v2292
    %v2294 = vpop.f32.mrf.mxu0
    %2295 = vmatprep.mubr.f32.mxu0 0.0
    %2296 = vmatmul.mubr.f32.gmra.mxu0 %v1664
    %v2297 = vpop.f32.mrf.mxu0
    %v2298 = vadd.f32 0.0, %v2297
    %v2299 = vpop.f32.mrf.mxu0
    %2300 = vmatprep.mubr.f32.mxu0 0.0
    %2301 = vmatmul.mubr.f32.gmra.mxu0 %v1667
    %v2302 = vpop.f32.mrf.mxu0
    %v2303 = vadd.f32 0.0, %v2302
    %v2304 = vpop.f32.mrf.mxu0
    %2305 = vmatprep.mubr.f32.mxu0 0.0
    %2306 = vmatmul.mubr.f32.gmra.mxu0 %v1670
    %v2307 = vpop.f32.mrf.mxu0
    %v2308 = vadd.f32 0.0, %v2307
    %v2309 = vpop.f32.mrf.mxu0
    %2310 = vmatprep.mubr.f32.mxu0 0.0
    %2311 = vmatmul.mubr.f32.gmra.mxu0 %v1673
    %v2312 = vpop.f32.mrf.mxu0
    %v2313 = vadd.f32 0.0, %v2312
    %v2314 = vpop.f32.mrf.mxu0
    %2315 = vmatprep.mubr.f32.mxu0 0.0
    %2316 = vmatmul.mubr.f32.gmra.mxu0 %v1676
    %v2317 = vpop.f32.mrf.mxu0
    %v2318 = vadd.f32 0.0, %v2317
    %v2319 = vpop.f32.mrf.mxu0
    %2320 = vmatprep.mubr.f32.mxu0 0.0
    %2321 = vmatmul.mubr.f32.gmra.mxu0 %v1679
    %v2322 = vpop.f32.mrf.mxu0
    %v2323 = vadd.f32 0.0, %v2322
    %v2324 = vpop.f32.mrf.mxu0
    %2325 = vmatprep.mubr.f32.mxu0 0.0
    %2326 = vmatmul.mubr.f32.gmra.mxu0 %v1682
    %v2327 = vpop.f32.mrf.mxu0
    %v2328 = vadd.f32 0.0, %v2327
    %v2329 = vpop.f32.mrf.mxu0
    %2330 = vmatprep.mubr.f32.mxu0 0.0
    %2331 = vmatmul.mubr.f32.gmra.mxu0 %v1685
    %v2332 = vpop.f32.mrf.mxu0
    %v2333 = vadd.f32 0.0, %v2332
    %v2334 = vpop.f32.mrf.mxu0
    %2335 = vmatprep.mubr.f32.mxu0 0.0
    %2336 = vmatmul.mubr.f32.gmra.mxu0 %v1688
    %v2337 = vpop.f32.mrf.mxu0
    %v2338 = vadd.f32 0.0, %v2337
    %v2339 = vpop.f32.mrf.mxu0
    %2340 = vmatprep.mubr.f32.mxu0 0.0
    %2341 = vmatmul.mubr.f32.gmra.mxu0 %v1691
    %v2342 = vpop.f32.mrf.mxu0
    %v2343 = vadd.f32 0.0, %v2342
    %v2344 = vpop.f32.mrf.mxu0
    %2345 = vmatprep.mubr.f32.mxu0 0.0
    %2346 = vmatmul.mubr.f32.gmra.mxu0 %v1694
    %v2347 = vpop.f32.mrf.mxu0
    %v2348 = vadd.f32 0.0, %v2347
    %v2349 = vpop.f32.mrf.mxu0
    %2350 = vmatprep.mubr.f32.mxu0 0.0
    %2351 = vmatmul.mubr.f32.gmra.mxu0 %v1697
    %v2352 = vpop.f32.mrf.mxu0
    %v2353 = vadd.f32 0.0, %v2352
    %v2354 = vpop.f32.mrf.mxu0
    %2355 = vmatprep.mubr.f32.mxu0 0.0
    %2356 = vmatmul.mubr.f32.gmra.mxu0 %v1700
    %v2357 = vpop.f32.mrf.mxu0
    %v2358 = vadd.f32 0.0, %v2357
    %v2359 = vpop.f32.mrf.mxu0
    %2360 = vmatprep.mubr.f32.mxu0 0.0
    %2361 = vmatmul.mubr.f32.gmra.mxu0 %v1703
    %v2362 = vpop.f32.mrf.mxu0
    %v2363 = vadd.f32 0.0, %v2362
    %v2364 = vpop.f32.mrf.mxu0
    %2365 = vmatprep.mubr.f32.mxu0 0.0
    %2366 = vmatmul.mubr.f32.gmra.mxu0 %v1706
    %v2367 = vpop.f32.mrf.mxu0
    %v2368 = vadd.f32 0.0, %v2367
    %v2369 = vpop.f32.mrf.mxu0
    %2370 = vmatprep.mubr.f32.mxu0 0.0
    %2371 = vmatmul.mubr.f32.gmra.mxu0 %v1709
    %v2372 = vpop.f32.mrf.mxu0
    %v2373 = vadd.f32 0.0, %v2372
    %v2374 = vpop.f32.mrf.mxu0
    %2375 = vmatprep.mubr.f32.mxu0 0.0
    %2376 = vmatmul.mubr.f32.gmra.mxu0 %v1712
    %v2377 = vpop.f32.mrf.mxu0
    %v2378 = vadd.f32 0.0, %v2377
    %v2379 = vpop.f32.mrf.mxu0
    %2380 = vmatprep.mubr.f32.mxu0 0.0
    %2381 = vmatmul.mubr.f32.gmra.mxu0 %v1715
    %v2382 = vpop.f32.mrf.mxu0
    %v2383 = vadd.f32 0.0, %v2382
    %v2384 = vpop.f32.mrf.mxu0
    %2385 = vmatprep.mubr.f32.mxu0 0.0
    %2386 = vmatmul.mubr.f32.gmra.mxu0 %v1718
    %v2387 = vpop.f32.mrf.mxu0
    %v2388 = vadd.f32 0.0, %v2387
    %v2389 = vpop.f32.mrf.mxu0
    %2390 = vmatprep.mubr.f32.mxu0 0.0
    %2391 = vmatmul.mubr.f32.gmra.mxu0 %v1721
    %v2392 = vpop.f32.mrf.mxu0
    %v2393 = vadd.f32 0.0, %v2392
    %v2394 = vpop.f32.mrf.mxu0
    %2395 = vmatprep.mubr.f32.mxu0 0.0
    %2396 = vmatmul.mubr.f32.gmra.mxu0 %v1724
    %v2397 = vpop.f32.mrf.mxu0
    %v2398 = vadd.f32 0.0, %v2397
    %v2399 = vpop.f32.mrf.mxu0
    %2400 = vmatprep.mubr.f32.mxu0 0.0
    %2401 = vmatmul.mubr.f32.gmra.mxu0 %v1727
    %v2402 = vpop.f32.mrf.mxu0
    %v2403 = vadd.f32 0.0, %v2402
    %v2404 = vpop.f32.mrf.mxu0
    %2405 = vmatprep.mubr.f32.mxu0 0.0
    %2406 = vmatmul.mubr.f32.gmra.mxu0 %v1730
    %v2407 = vpop.f32.mrf.mxu0
    %v2408 = vadd.f32 0.0, %v2407
    %v2409 = vpop.f32.mrf.mxu0
    %2410 = vmatprep.mubr.f32.mxu0 0.0
    %2411 = vmatmul.mubr.f32.gmra.mxu0 %v1733
    %v2412 = vpop.f32.mrf.mxu0
    %v2413 = vadd.f32 0.0, %v2412
    %v2414 = vpop.f32.mrf.mxu0
    %2415 = vmatprep.mubr.f32.mxu0 0.0
    %2416 = vmatmul.mubr.f32.gmra.mxu0 %v1736
    %v2417 = vpop.f32.mrf.mxu0
    %v2418 = vadd.f32 0.0, %v2417
    %v2419 = vpop.f32.mrf.mxu0
    %2420 = vmatprep.mubr.f32.mxu0 0.0
    %2421 = vmatmul.mubr.f32.gmra.mxu0 %v1739
    %v2422 = vpop.f32.mrf.mxu0
    %v2423 = vadd.f32 0.0, %v2422
    %v2424 = vpop.f32.mrf.mxu0
    %2425 = vmatprep.mubr.f32.mxu0 0.0
    %2426 = vmatmul.mubr.f32.gmra.mxu0 %v1742
    %v2427 = vpop.f32.mrf.mxu0
    %v2428 = vadd.f32 0.0, %v2427
    %v2429 = vpop.f32.mrf.mxu0
    %2430 = vmatprep.mubr.f32.mxu0 0.0
    %2431 = vmatmul.mubr.f32.gmra.mxu0 %v1745
    %v2432 = vpop.f32.mrf.mxu0
    %v2433 = vadd.f32 0.0, %v2432
    %v2434 = vpop.f32.mrf.mxu0
    %2435 = vmatprep.mubr.f32.mxu0 0.0
    %2436 = vmatmul.mubr.f32.gmra.mxu0 %v1748
    %v2437 = vpop.f32.mrf.mxu0
    %v2438 = vadd.f32 0.0, %v2437
    %v2439 = vpop.f32.mrf.mxu0
    %2440 = vmatprep.mubr.f32.mxu0 0.0
    %2441 = vmatmul.mubr.f32.gmra.mxu0 %v1751
    %v2442 = vpop.f32.mrf.mxu0
    %v2443 = vadd.f32 0.0, %v2442
    %v2444 = vpop.f32.mrf.mxu0
    %2445 = vmatprep.mubr.f32.mxu0 0.0
    %2446 = vmatmul.mubr.f32.gmra.mxu0 %v1754
    %v2447 = vpop.f32.mrf.mxu0
    %v2448 = vadd.f32 0.0, %v2447
    %v2449 = vpop.f32.mrf.mxu0
    %2450 = vmatprep.mubr.f32.mxu0 0.0
    %2451 = vmatmul.mubr.f32.gmra.mxu0 %v1757
    %v2452 = vpop.f32.mrf.mxu0
    %v2453 = vadd.f32 0.0, %v2452
    %v2454 = vpop.f32.mrf.mxu0
    %2455 = vmatprep.mubr.f32.mxu0 0.0
    %2456 = vmatmul.mubr.f32.gmra.mxu0 %v1760
    %v2457 = vpop.f32.mrf.mxu0
    %v2458 = vadd.f32 0.0, %v2457
    %v2459 = vpop.f32.mrf.mxu0
    %2460 = vmatprep.mubr.f32.mxu0 0.0
    %2461 = vmatmul.mubr.f32.gmra.mxu0 %v1763
    %v2462 = vpop.f32.mrf.mxu0
    %v2463 = vadd.f32 0.0, %v2462
    %v2464 = vpop.f32.mrf.mxu0
    %2465 = vmatprep.mubr.f32.mxu0 0.0
    %2466 = vmatmul.mubr.f32.gmra.mxu0 %v1766
    %v2467 = vpop.f32.mrf.mxu0
    %v2468 = vadd.f32 0.0, %v2467
    %v2469 = vpop.f32.mrf.mxu0
    %2470 = vmatprep.mubr.f32.mxu0 0.0
    %2471 = vmatmul.mubr.f32.gmra.mxu0 %v1769
    %v2472 = vpop.f32.mrf.mxu0
    %v2473 = vadd.f32 0.0, %v2472
    %v2474 = vpop.f32.mrf.mxu0
    %2475 = vdwg.mxu0
    %v2476 = vld [vmem:[%s1] sm:$0xff]
    %v2477 = vld [vmem:[%s1 + $0x8] sm:$0xff]
    %v2478 = vld [vmem:[%s1 + $0x10] sm:$0xff]
    %v2479 = vld [vmem:[%s1 + $0x18] sm:$0xff]
    %v2480 = vld [vmem:[%s1 + $0x20] sm:$0xff]
    %v2481 = vld [vmem:[%s1 + $0x28] sm:$0xff]
    %v2482 = vld [vmem:[%s1 + $0x30] sm:$0xff]
    %v2483 = vld [vmem:[%s1 + $0x38] sm:$0xff]
    %v2484 = vld [vmem:[%s1 + $0x40] sm:$0xff]
    %v2485 = vld [vmem:[%s1 + $0x48] sm:$0xff]
    %v2486 = vld [vmem:[%s1 + $0x50] sm:$0xff]
    %v2487 = vld [vmem:[%s1 + $0x58] sm:$0xff]
    %v2488 = vld [vmem:[%s1 + $0x60] sm:$0xff]
    %v2489 = vld [vmem:[%s1 + $0x68] sm:$0xff]
    %v2490 = vld [vmem:[%s1 + $0x70] sm:$0xff]
    %v2491 = vld [vmem:[%s1 + $0x78] sm:$0xff]
    %v2492 = vlaneseq
    %v2493 = vand.u32 %v2492, 127
    %2494 = vset.pattern.permute.xlu0 0
    %2495 = vperm.xlu0 %2494, %v2476
    %v2496 = vpop.permute.xlu0 %2495
    %2497 = vset.pattern.permute.xlu0 0
    %2498 = vperm.xlu0 %2497, %v2477
    %v2499 = vpop.permute.xlu0 %2498
    %2500 = vset.pattern.permute.xlu0 0
    %2501 = vperm.xlu0 %2500, %v2478
    %v2502 = vpop.permute.xlu0 %2501
    %2503 = vset.pattern.permute.xlu0 0
    %2504 = vperm.xlu0 %2503, %v2479
    %v2505 = vpop.permute.xlu0 %2504
    %2506 = vset.pattern.permute.xlu0 0
    %2507 = vperm.xlu0 %2506, %v2480
    %v2508 = vpop.permute.xlu0 %2507
    %2509 = vset.pattern.permute.xlu0 0
    %2510 = vperm.xlu0 %2509, %v2481
    %v2511 = vpop.permute.xlu0 %2510
    %2512 = vset.pattern.permute.xlu0 0
    %2513 = vperm.xlu0 %2512, %v2482
    %v2514 = vpop.permute.xlu0 %2513
    %2515 = vset.pattern.permute.xlu0 0
    %2516 = vperm.xlu0 %2515, %v2483
    %v2517 = vpop.permute.xlu0 %2516
    %2518 = vset.pattern.permute.xlu0 0
    %2519 = vperm.xlu0 %2518, %v2484
    %v2520 = vpop.permute.xlu0 %2519
    %2521 = vset.pattern.permute.xlu0 0
    %2522 = vperm.xlu0 %2521, %v2485
    %v2523 = vpop.permute.xlu0 %2522
    %2524 = vset.pattern.permute.xlu0 0
    %2525 = vperm.xlu0 %2524, %v2486
    %v2526 = vpop.permute.xlu0 %2525
    %2527 = vset.pattern.permute.xlu0 0
    %2528 = vperm.xlu0 %2527, %v2487
    %v2529 = vpop.permute.xlu0 %2528
    %2530 = vset.pattern.permute.xlu0 0
    %2531 = vperm.xlu0 %2530, %v2488
    %v2532 = vpop.permute.xlu0 %2531
    %2533 = vset.pattern.permute.xlu0 0
    %2534 = vperm.xlu0 %2533, %v2489
    %v2535 = vpop.permute.xlu0 %2534
    %2536 = vset.pattern.permute.xlu0 0
    %2537 = vperm.xlu0 %2536, %v2490
    %v2538 = vpop.permute.xlu0 %2537
    %2539 = vset.pattern.permute.xlu0 0
    %2540 = vperm.xlu0 %2539, %v2491
    %v2541 = vpop.permute.xlu0 %2540
    %vm2542 = vcmp.lt.s32.totalorder %v2493, %v2496
    %vm2543 = vcmp.lt.s32.totalorder %v2493, %v2499
    %vm2544 = vcmp.lt.s32.totalorder %v2493, %v2502
    %vm2545 = vcmp.lt.s32.totalorder %v2493, %v2505
    %vm2546 = vcmp.lt.s32.totalorder %v2493, %v2508
    %vm2547 = vcmp.lt.s32.totalorder %v2493, %v2511
    %vm2548 = vcmp.lt.s32.totalorder %v2493, %v2514
    %vm2549 = vcmp.lt.s32.totalorder %v2493, %v2517
    %vm2550 = vcmp.lt.s32.totalorder %v2493, %v2520
    %vm2551 = vcmp.lt.s32.totalorder %v2493, %v2523
    %vm2552 = vcmp.lt.s32.totalorder %v2493, %v2526
    %vm2553 = vcmp.lt.s32.totalorder %v2493, %v2529
    %vm2554 = vcmp.lt.s32.totalorder %v2493, %v2532
    %vm2555 = vcmp.lt.s32.totalorder %v2493, %v2535
    %vm2556 = vcmp.lt.s32.totalorder %v2493, %v2538
    %vm2557 = vcmp.lt.s32.totalorder %v2493, %v2541
    %2686 = vset.pattern.permute.xlu0 0
    %2687 = vperm.xlu0 %2686, %v1838
    %v2688 = vpop.permute.xlu0 %2687
    %2689 = vset.pattern.permute.xlu0 0
    %2690 = vperm.xlu0 %2689, %v1843
    %v2691 = vpop.permute.xlu0 %2690
    %2692 = vset.pattern.permute.xlu0 0
    %2693 = vperm.xlu0 %2692, %v1848
    %v2694 = vpop.permute.xlu0 %2693
    %2695 = vset.pattern.permute.xlu0 0
    %2696 = vperm.xlu0 %2695, %v1853
    %v2697 = vpop.permute.xlu0 %2696
    %2698 = vset.pattern.permute.xlu0 0
    %2699 = vperm.xlu0 %2698, %v1858
    %v2700 = vpop.permute.xlu0 %2699
    %2701 = vset.pattern.permute.xlu0 0
    %2702 = vperm.xlu0 %2701, %v1863
    %v2703 = vpop.permute.xlu0 %2702
    %2704 = vset.pattern.permute.xlu0 0
    %2705 = vperm.xlu0 %2704, %v1868
    %v2706 = vpop.permute.xlu0 %2705
    %2707 = vset.pattern.permute.xlu0 0
    %2708 = vperm.xlu0 %2707, %v1873
    %v2709 = vpop.permute.xlu0 %2708
    %2710 = vset.pattern.permute.xlu0 0
    %2711 = vperm.xlu0 %2710, %v1878
    %v2712 = vpop.permute.xlu0 %2711
    %2713 = vset.pattern.permute.xlu0 0
    %2714 = vperm.xlu0 %2713, %v1883
    %v2715 = vpop.permute.xlu0 %2714
    %2716 = vset.pattern.permute.xlu0 0
    %2717 = vperm.xlu0 %2716, %v1888
    %v2718 = vpop.permute.xlu0 %2717
    %2719 = vset.pattern.permute.xlu0 0
    %2720 = vperm.xlu0 %2719, %v1893
    %v2721 = vpop.permute.xlu0 %2720
    %2722 = vset.pattern.permute.xlu0 0
    %2723 = vperm.xlu0 %2722, %v1898
    %v2724 = vpop.permute.xlu0 %2723
    %2725 = vset.pattern.permute.xlu0 0
    %2726 = vperm.xlu0 %2725, %v1903
    %v2727 = vpop.permute.xlu0 %2726
    %2728 = vset.pattern.permute.xlu0 0
    %2729 = vperm.xlu0 %2728, %v1908
    %v2730 = vpop.permute.xlu0 %2729
    %2731 = vset.pattern.permute.xlu0 0
    %2732 = vperm.xlu0 %2731, %v1913
    %v2733 = vpop.permute.xlu0 %2732
    %2734 = vset.pattern.permute.xlu0 0
    %2735 = vperm.xlu0 %2734, %v1918
    %v2736 = vpop.permute.xlu0 %2735
    %2737 = vset.pattern.permute.xlu0 0
    %2738 = vperm.xlu0 %2737, %v1923
    %v2739 = vpop.permute.xlu0 %2738
    %2740 = vset.pattern.permute.xlu0 0
    %2741 = vperm.xlu0 %2740, %v1928
    %v2742 = vpop.permute.xlu0 %2741
    %2743 = vset.pattern.permute.xlu0 0
    %2744 = vperm.xlu0 %2743, %v1933
    %v2745 = vpop.permute.xlu0 %2744
    %2746 = vset.pattern.permute.xlu0 0
    %2747 = vperm.xlu0 %2746, %v1938
    %v2748 = vpop.permute.xlu0 %2747
    %2749 = vset.pattern.permute.xlu0 0
    %2750 = vperm.xlu0 %2749, %v1943
    %v2751 = vpop.permute.xlu0 %2750
    %2752 = vset.pattern.permute.xlu0 0
    %2753 = vperm.xlu0 %2752, %v1948
    %v2754 = vpop.permute.xlu0 %2753
    %2755 = vset.pattern.permute.xlu0 0
    %2756 = vperm.xlu0 %2755, %v1953
    %v2757 = vpop.permute.xlu0 %2756
    %2758 = vset.pattern.permute.xlu0 0
    %2759 = vperm.xlu0 %2758, %v1958
    %v2760 = vpop.permute.xlu0 %2759
    %2761 = vset.pattern.permute.xlu0 0
    %2762 = vperm.xlu0 %2761, %v1963
    %v2763 = vpop.permute.xlu0 %2762
    %2764 = vset.pattern.permute.xlu0 0
    %2765 = vperm.xlu0 %2764, %v1968
    %v2766 = vpop.permute.xlu0 %2765
    %2767 = vset.pattern.permute.xlu0 0
    %2768 = vperm.xlu0 %2767, %v1973
    %v2769 = vpop.permute.xlu0 %2768
    %2770 = vset.pattern.permute.xlu0 0
    %2771 = vperm.xlu0 %2770, %v1978
    %v2772 = vpop.permute.xlu0 %2771
    %2773 = vset.pattern.permute.xlu0 0
    %2774 = vperm.xlu0 %2773, %v1983
    %v2775 = vpop.permute.xlu0 %2774
    %2776 = vset.pattern.permute.xlu0 0
    %2777 = vperm.xlu0 %2776, %v1988
    %v2778 = vpop.permute.xlu0 %2777
    %2779 = vset.pattern.permute.xlu0 0
    %2780 = vperm.xlu0 %2779, %v1993
    %v2781 = vpop.permute.xlu0 %2780
    %2782 = vset.pattern.permute.xlu0 0
    %2783 = vperm.xlu0 %2782, %v1998
    %v2784 = vpop.permute.xlu0 %2783
    %2785 = vset.pattern.permute.xlu0 0
    %2786 = vperm.xlu0 %2785, %v2003
    %v2787 = vpop.permute.xlu0 %2786
    %2788 = vset.pattern.permute.xlu0 0
    %2789 = vperm.xlu0 %2788, %v2008
    %v2790 = vpop.permute.xlu0 %2789
    %2791 = vset.pattern.permute.xlu0 0
    %2792 = vperm.xlu0 %2791, %v2013
    %v2793 = vpop.permute.xlu0 %2792
    %2794 = vset.pattern.permute.xlu0 0
    %2795 = vperm.xlu0 %2794, %v2018
    %v2796 = vpop.permute.xlu0 %2795
    %2797 = vset.pattern.permute.xlu0 0
    %2798 = vperm.xlu0 %2797, %v2023
    %v2799 = vpop.permute.xlu0 %2798
    %2800 = vset.pattern.permute.xlu0 0
    %2801 = vperm.xlu0 %2800, %v2028
    %v2802 = vpop.permute.xlu0 %2801
    %2803 = vset.pattern.permute.xlu0 0
    %2804 = vperm.xlu0 %2803, %v2033
    %v2805 = vpop.permute.xlu0 %2804
    %2806 = vset.pattern.permute.xlu0 0
    %2807 = vperm.xlu0 %2806, %v2038
    %v2808 = vpop.permute.xlu0 %2807
    %2809 = vset.pattern.permute.xlu0 0
    %2810 = vperm.xlu0 %2809, %v2043
    %v2811 = vpop.permute.xlu0 %2810
    %2812 = vset.pattern.permute.xlu0 0
    %2813 = vperm.xlu0 %2812, %v2048
    %v2814 = vpop.permute.xlu0 %2813
    %2815 = vset.pattern.permute.xlu0 0
    %2816 = vperm.xlu0 %2815, %v2053
    %v2817 = vpop.permute.xlu0 %2816
    %2818 = vset.pattern.permute.xlu0 0
    %2819 = vperm.xlu0 %2818, %v2058
    %v2820 = vpop.permute.xlu0 %2819
    %2821 = vset.pattern.permute.xlu0 0
    %2822 = vperm.xlu0 %2821, %v2063
    %v2823 = vpop.permute.xlu0 %2822
    %2824 = vset.pattern.permute.xlu0 0
    %2825 = vperm.xlu0 %2824, %v2068
    %v2826 = vpop.permute.xlu0 %2825
    %2827 = vset.pattern.permute.xlu0 0
    %2828 = vperm.xlu0 %2827, %v2073
    %v2829 = vpop.permute.xlu0 %2828
    %2830 = vset.pattern.permute.xlu0 0
    %2831 = vperm.xlu0 %2830, %v2078
    %v2832 = vpop.permute.xlu0 %2831
    %2833 = vset.pattern.permute.xlu0 0
    %2834 = vperm.xlu0 %2833, %v2083
    %v2835 = vpop.permute.xlu0 %2834
    %2836 = vset.pattern.permute.xlu0 0
    %2837 = vperm.xlu0 %2836, %v2088
    %v2838 = vpop.permute.xlu0 %2837
    %2839 = vset.pattern.permute.xlu0 0
    %2840 = vperm.xlu0 %2839, %v2093
    %v2841 = vpop.permute.xlu0 %2840
    %2842 = vset.pattern.permute.xlu0 0
    %2843 = vperm.xlu0 %2842, %v2098
    %v2844 = vpop.permute.xlu0 %2843
    %2845 = vset.pattern.permute.xlu0 0
    %2846 = vperm.xlu0 %2845, %v2103
    %v2847 = vpop.permute.xlu0 %2846
    %2848 = vset.pattern.permute.xlu0 0
    %2849 = vperm.xlu0 %2848, %v2108
    %v2850 = vpop.permute.xlu0 %2849
    %2851 = vset.pattern.permute.xlu0 0
    %2852 = vperm.xlu0 %2851, %v2113
    %v2853 = vpop.permute.xlu0 %2852
    %2854 = vset.pattern.permute.xlu0 0
    %2855 = vperm.xlu0 %2854, %v2118
    %v2856 = vpop.permute.xlu0 %2855
    %2857 = vset.pattern.permute.xlu0 0
    %2858 = vperm.xlu0 %2857, %v2123
    %v2859 = vpop.permute.xlu0 %2858
    %2860 = vset.pattern.permute.xlu0 0
    %2861 = vperm.xlu0 %2860, %v2128
    %v2862 = vpop.permute.xlu0 %2861
    %2863 = vset.pattern.permute.xlu0 0
    %2864 = vperm.xlu0 %2863, %v2133
    %v2865 = vpop.permute.xlu0 %2864
    %2866 = vset.pattern.permute.xlu0 0
    %2867 = vperm.xlu0 %2866, %v2138
    %v2868 = vpop.permute.xlu0 %2867
    %2869 = vset.pattern.permute.xlu0 0
    %2870 = vperm.xlu0 %2869, %v2143
    %v2871 = vpop.permute.xlu0 %2870
    %2872 = vset.pattern.permute.xlu0 0
    %2873 = vperm.xlu0 %2872, %v2148
    %v2874 = vpop.permute.xlu0 %2873
    %2875 = vset.pattern.permute.xlu0 0
    %2876 = vperm.xlu0 %2875, %v2153
    %v2877 = vpop.permute.xlu0 %2876
    %2878 = vset.pattern.permute.xlu0 0
    %2879 = vperm.xlu0 %2878, %v2158
    %v2880 = vpop.permute.xlu0 %2879
    %2881 = vset.pattern.permute.xlu0 0
    %2882 = vperm.xlu0 %2881, %v2163
    %v2883 = vpop.permute.xlu0 %2882
    %2884 = vset.pattern.permute.xlu0 0
    %2885 = vperm.xlu0 %2884, %v2168
    %v2886 = vpop.permute.xlu0 %2885
    %2887 = vset.pattern.permute.xlu0 0
    %2888 = vperm.xlu0 %2887, %v2173
    %v2889 = vpop.permute.xlu0 %2888
    %2890 = vset.pattern.permute.xlu0 0
    %2891 = vperm.xlu0 %2890, %v2178
    %v2892 = vpop.permute.xlu0 %2891
    %2893 = vset.pattern.permute.xlu0 0
    %2894 = vperm.xlu0 %2893, %v2183
    %v2895 = vpop.permute.xlu0 %2894
    %2896 = vset.pattern.permute.xlu0 0
    %2897 = vperm.xlu0 %2896, %v2188
    %v2898 = vpop.permute.xlu0 %2897
    %2899 = vset.pattern.permute.xlu0 0
    %2900 = vperm.xlu0 %2899, %v2193
    %v2901 = vpop.permute.xlu0 %2900
    %2902 = vset.pattern.permute.xlu0 0
    %2903 = vperm.xlu0 %2902, %v2198
    %v2904 = vpop.permute.xlu0 %2903
    %2905 = vset.pattern.permute.xlu0 0
    %2906 = vperm.xlu0 %2905, %v2203
    %v2907 = vpop.permute.xlu0 %2906
    %2908 = vset.pattern.permute.xlu0 0
    %2909 = vperm.xlu0 %2908, %v2208
    %v2910 = vpop.permute.xlu0 %2909
    %2911 = vset.pattern.permute.xlu0 0
    %2912 = vperm.xlu0 %2911, %v2213
    %v2913 = vpop.permute.xlu0 %2912
    %2914 = vset.pattern.permute.xlu0 0
    %2915 = vperm.xlu0 %2914, %v2218
    %v2916 = vpop.permute.xlu0 %2915
    %2917 = vset.pattern.permute.xlu0 0
    %2918 = vperm.xlu0 %2917, %v2223
    %v2919 = vpop.permute.xlu0 %2918
    %2920 = vset.pattern.permute.xlu0 0
    %2921 = vperm.xlu0 %2920, %v2228
    %v2922 = vpop.permute.xlu0 %2921
    %2923 = vset.pattern.permute.xlu0 0
    %2924 = vperm.xlu0 %2923, %v2233
    %v2925 = vpop.permute.xlu0 %2924
    %2926 = vset.pattern.permute.xlu0 0
    %2927 = vperm.xlu0 %2926, %v2238
    %v2928 = vpop.permute.xlu0 %2927
    %2929 = vset.pattern.permute.xlu0 0
    %2930 = vperm.xlu0 %2929, %v2243
    %v2931 = vpop.permute.xlu0 %2930
    %2932 = vset.pattern.permute.xlu0 0
    %2933 = vperm.xlu0 %2932, %v2248
    %v2934 = vpop.permute.xlu0 %2933
    %2935 = vset.pattern.permute.xlu0 0
    %2936 = vperm.xlu0 %2935, %v2253
    %v2937 = vpop.permute.xlu0 %2936
    %2938 = vset.pattern.permute.xlu0 0
    %2939 = vperm.xlu0 %2938, %v2258
    %v2940 = vpop.permute.xlu0 %2939
    %2941 = vset.pattern.permute.xlu0 0
    %2942 = vperm.xlu0 %2941, %v2263
    %v2943 = vpop.permute.xlu0 %2942
    %2944 = vset.pattern.permute.xlu0 0
    %2945 = vperm.xlu0 %2944, %v2268
    %v2946 = vpop.permute.xlu0 %2945
    %2947 = vset.pattern.permute.xlu0 0
    %2948 = vperm.xlu0 %2947, %v2273
    %v2949 = vpop.permute.xlu0 %2948
    %2950 = vset.pattern.permute.xlu0 0
    %2951 = vperm.xlu0 %2950, %v2278
    %v2952 = vpop.permute.xlu0 %2951
    %2953 = vset.pattern.permute.xlu0 0
    %2954 = vperm.xlu0 %2953, %v2283
    %v2955 = vpop.permute.xlu0 %2954
    %2956 = vset.pattern.permute.xlu0 0
    %2957 = vperm.xlu0 %2956, %v2288
    %v2958 = vpop.permute.xlu0 %2957
    %2959 = vset.pattern.permute.xlu0 0
    %2960 = vperm.xlu0 %2959, %v2293
    %v2961 = vpop.permute.xlu0 %2960
    %2962 = vset.pattern.permute.xlu0 0
    %2963 = vperm.xlu0 %2962, %v2298
    %v2964 = vpop.permute.xlu0 %2963
    %2965 = vset.pattern.permute.xlu0 0
    %2966 = vperm.xlu0 %2965, %v2303
    %v2967 = vpop.permute.xlu0 %2966
    %2968 = vset.pattern.permute.xlu0 0
    %2969 = vperm.xlu0 %2968, %v2308
    %v2970 = vpop.permute.xlu0 %2969
    %2971 = vset.pattern.permute.xlu0 0
    %2972 = vperm.xlu0 %2971, %v2313
    %v2973 = vpop.permute.xlu0 %2972
    %2974 = vset.pattern.permute.xlu0 0
    %2975 = vperm.xlu0 %2974, %v2318
    %v2976 = vpop.permute.xlu0 %2975
    %2977 = vset.pattern.permute.xlu0 0
    %2978 = vperm.xlu0 %2977, %v2323
    %v2979 = vpop.permute.xlu0 %2978
    %2980 = vset.pattern.permute.xlu0 0
    %2981 = vperm.xlu0 %2980, %v2328
    %v2982 = vpop.permute.xlu0 %2981
    %2983 = vset.pattern.permute.xlu0 0
    %2984 = vperm.xlu0 %2983, %v2333
    %v2985 = vpop.permute.xlu0 %2984
    %2986 = vset.pattern.permute.xlu0 0
    %2987 = vperm.xlu0 %2986, %v2338
    %v2988 = vpop.permute.xlu0 %2987
    %2989 = vset.pattern.permute.xlu0 0
    %2990 = vperm.xlu0 %2989, %v2343
    %v2991 = vpop.permute.xlu0 %2990
    %2992 = vset.pattern.permute.xlu0 0
    %2993 = vperm.xlu0 %2992, %v2348
    %v2994 = vpop.permute.xlu0 %2993
    %2995 = vset.pattern.permute.xlu0 0
    %2996 = vperm.xlu0 %2995, %v2353
    %v2997 = vpop.permute.xlu0 %2996
    %2998 = vset.pattern.permute.xlu0 0
    %2999 = vperm.xlu0 %2998, %v2358
    %v3000 = vpop.permute.xlu0 %2999
    %3001 = vset.pattern.permute.xlu0 0
    %3002 = vperm.xlu0 %3001, %v2363
    %v3003 = vpop.permute.xlu0 %3002
    %3004 = vset.pattern.permute.xlu0 0
    %3005 = vperm.xlu0 %3004, %v2368
    %v3006 = vpop.permute.xlu0 %3005
    %3007 = vset.pattern.permute.xlu0 0
    %3008 = vperm.xlu0 %3007, %v2373
    %v3009 = vpop.permute.xlu0 %3008
    %3010 = vset.pattern.permute.xlu0 0
    %3011 = vperm.xlu0 %3010, %v2378
    %v3012 = vpop.permute.xlu0 %3011
    %3013 = vset.pattern.permute.xlu0 0
    %3014 = vperm.xlu0 %3013, %v2383
    %v3015 = vpop.permute.xlu0 %3014
    %3016 = vset.pattern.permute.xlu0 0
    %3017 = vperm.xlu0 %3016, %v2388
    %v3018 = vpop.permute.xlu0 %3017
    %3019 = vset.pattern.permute.xlu0 0
    %3020 = vperm.xlu0 %3019, %v2393
    %v3021 = vpop.permute.xlu0 %3020
    %3022 = vset.pattern.permute.xlu0 0
    %3023 = vperm.xlu0 %3022, %v2398
    %v3024 = vpop.permute.xlu0 %3023
    %3025 = vset.pattern.permute.xlu0 0
    %3026 = vperm.xlu0 %3025, %v2403
    %v3027 = vpop.permute.xlu0 %3026
    %3028 = vset.pattern.permute.xlu0 0
    %3029 = vperm.xlu0 %3028, %v2408
    %v3030 = vpop.permute.xlu0 %3029
    %3031 = vset.pattern.permute.xlu0 0
    %3032 = vperm.xlu0 %3031, %v2413
    %v3033 = vpop.permute.xlu0 %3032
    %3034 = vset.pattern.permute.xlu0 0
    %3035 = vperm.xlu0 %3034, %v2418
    %v3036 = vpop.permute.xlu0 %3035
    %3037 = vset.pattern.permute.xlu0 0
    %3038 = vperm.xlu0 %3037, %v2423
    %v3039 = vpop.permute.xlu0 %3038
    %3040 = vset.pattern.permute.xlu0 0
    %3041 = vperm.xlu0 %3040, %v2428
    %v3042 = vpop.permute.xlu0 %3041
    %3043 = vset.pattern.permute.xlu0 0
    %3044 = vperm.xlu0 %3043, %v2433
    %v3045 = vpop.permute.xlu0 %3044
    %3046 = vset.pattern.permute.xlu0 0
    %3047 = vperm.xlu0 %3046, %v2438
    %v3048 = vpop.permute.xlu0 %3047
    %3049 = vset.pattern.permute.xlu0 0
    %3050 = vperm.xlu0 %3049, %v2443
    %v3051 = vpop.permute.xlu0 %3050
    %3052 = vset.pattern.permute.xlu0 0
    %3053 = vperm.xlu0 %3052, %v2448
    %v3054 = vpop.permute.xlu0 %3053
    %3055 = vset.pattern.permute.xlu0 0
    %3056 = vperm.xlu0 %3055, %v2453
    %v3057 = vpop.permute.xlu0 %3056
    %3058 = vset.pattern.permute.xlu0 0
    %3059 = vperm.xlu0 %3058, %v2458
    %v3060 = vpop.permute.xlu0 %3059
    %3061 = vset.pattern.permute.xlu0 0
    %3062 = vperm.xlu0 %3061, %v2463
    %v3063 = vpop.permute.xlu0 %3062
    %3064 = vset.pattern.permute.xlu0 0
    %3065 = vperm.xlu0 %3064, %v2468
    %v3066 = vpop.permute.xlu0 %3065
    %3067 = vset.pattern.permute.xlu0 0
    %3068 = vperm.xlu0 %3067, %v2473
    %v3069 = vpop.permute.xlu0 %3068
    %v3070 = vlaneseq
    %v3071 = vshrl.u32 %v3070, 7
    %v3072 = vsub.s32 %v2493, %v3071
    %v3073 = vrot.slane %v2688, %v3072
    %v3074 = vlaneseq
    %v3075 = vshrl.u32 %v3074, 7
    %v3076 = vsub.s32 %v2493, %v3075
    %v3077 = vrot.slane %v2691, %v3076
    %v3078 = vlaneseq
    %v3079 = vshrl.u32 %v3078, 7
    %v3080 = vsub.s32 %v2493, %v3079
    %v3081 = vrot.slane %v2694, %v3080
    %v3082 = vlaneseq
    %v3083 = vshrl.u32 %v3082, 7
    %v3084 = vsub.s32 %v2493, %v3083
    %v3085 = vrot.slane %v2697, %v3084
    %v3086 = vlaneseq
    %v3087 = vshrl.u32 %v3086, 7
    %v3088 = vsub.s32 %v2493, %v3087
    %v3089 = vrot.slane %v2700, %v3088
    %v3090 = vlaneseq
    %v3091 = vshrl.u32 %v3090, 7
    %v3092 = vsub.s32 %v2493, %v3091
    %v3093 = vrot.slane %v2703, %v3092
    %v3094 = vlaneseq
    %v3095 = vshrl.u32 %v3094, 7
    %v3096 = vsub.s32 %v2493, %v3095
    %v3097 = vrot.slane %v2706, %v3096
    %v3098 = vlaneseq
    %v3099 = vshrl.u32 %v3098, 7
    %v3100 = vsub.s32 %v2493, %v3099
    %v3101 = vrot.slane %v2709, %v3100
    %v3102 = vlaneseq
    %v3103 = vshrl.u32 %v3102, 7
    %v3104 = vsub.s32 %v2493, %v3103
    %v3105 = vrot.slane %v2712, %v3104
    %v3106 = vlaneseq
    %v3107 = vshrl.u32 %v3106, 7
    %v3108 = vsub.s32 %v2493, %v3107
    %v3109 = vrot.slane %v2715, %v3108
    %v3110 = vlaneseq
    %v3111 = vshrl.u32 %v3110, 7
    %v3112 = vsub.s32 %v2493, %v3111
    %v3113 = vrot.slane %v2718, %v3112
    %v3114 = vlaneseq
    %v3115 = vshrl.u32 %v3114, 7
    %v3116 = vsub.s32 %v2493, %v3115
    %v3117 = vrot.slane %v2721, %v3116
    %v3118 = vlaneseq
    %v3119 = vshrl.u32 %v3118, 7
    %v3120 = vsub.s32 %v2493, %v3119
    %v3121 = vrot.slane %v2724, %v3120
    %v3122 = vlaneseq
    %v3123 = vshrl.u32 %v3122, 7
    %v3124 = vsub.s32 %v2493, %v3123
    %v3125 = vrot.slane %v2727, %v3124
    %v3126 = vlaneseq
    %v3127 = vshrl.u32 %v3126, 7
    %v3128 = vsub.s32 %v2493, %v3127
    %v3129 = vrot.slane %v2730, %v3128
    %v3130 = vlaneseq
    %v3131 = vshrl.u32 %v3130, 7
    %v3132 = vsub.s32 %v2493, %v3131
    %v3133 = vrot.slane %v2733, %v3132
    %v3134 = vlaneseq
    %v3135 = vshrl.u32 %v3134, 7
    %v3136 = vsub.s32 %v2493, %v3135
    %v3137 = vrot.slane %v2736, %v3136
    %v3138 = vlaneseq
    %v3139 = vshrl.u32 %v3138, 7
    %v3140 = vsub.s32 %v2493, %v3139
    %v3141 = vrot.slane %v2739, %v3140
    %v3142 = vlaneseq
    %v3143 = vshrl.u32 %v3142, 7
    %v3144 = vsub.s32 %v2493, %v3143
    %v3145 = vrot.slane %v2742, %v3144
    %v3146 = vlaneseq
    %v3147 = vshrl.u32 %v3146, 7
    %v3148 = vsub.s32 %v2493, %v3147
    %v3149 = vrot.slane %v2745, %v3148
    %v3150 = vlaneseq
    %v3151 = vshrl.u32 %v3150, 7
    %v3152 = vsub.s32 %v2493, %v3151
    %v3153 = vrot.slane %v2748, %v3152
    %v3154 = vlaneseq
    %v3155 = vshrl.u32 %v3154, 7
    %v3156 = vsub.s32 %v2493, %v3155
    %v3157 = vrot.slane %v2751, %v3156
    %v3158 = vlaneseq
    %v3159 = vshrl.u32 %v3158, 7
    %v3160 = vsub.s32 %v2493, %v3159
    %v3161 = vrot.slane %v2754, %v3160
    %v3162 = vlaneseq
    %v3163 = vshrl.u32 %v3162, 7
    %v3164 = vsub.s32 %v2493, %v3163
    %v3165 = vrot.slane %v2757, %v3164
    %v3166 = vlaneseq
    %v3167 = vshrl.u32 %v3166, 7
    %v3168 = vsub.s32 %v2493, %v3167
    %v3169 = vrot.slane %v2760, %v3168
    %v3170 = vlaneseq
    %v3171 = vshrl.u32 %v3170, 7
    %v3172 = vsub.s32 %v2493, %v3171
    %v3173 = vrot.slane %v2763, %v3172
    %v3174 = vlaneseq
    %v3175 = vshrl.u32 %v3174, 7
    %v3176 = vsub.s32 %v2493, %v3175
    %v3177 = vrot.slane %v2766, %v3176
    %v3178 = vlaneseq
    %v3179 = vshrl.u32 %v3178, 7
    %v3180 = vsub.s32 %v2493, %v3179
    %v3181 = vrot.slane %v2769, %v3180
    %v3182 = vlaneseq
    %v3183 = vshrl.u32 %v3182, 7
    %v3184 = vsub.s32 %v2493, %v3183
    %v3185 = vrot.slane %v2772, %v3184
    %v3186 = vlaneseq
    %v3187 = vshrl.u32 %v3186, 7
    %v3188 = vsub.s32 %v2493, %v3187
    %v3189 = vrot.slane %v2775, %v3188
    %v3190 = vlaneseq
    %v3191 = vshrl.u32 %v3190, 7
    %v3192 = vsub.s32 %v2493, %v3191
    %v3193 = vrot.slane %v2778, %v3192
    %v3194 = vlaneseq
    %v3195 = vshrl.u32 %v3194, 7
    %v3196 = vsub.s32 %v2493, %v3195
    %v3197 = vrot.slane %v2781, %v3196
    %v3198 = vlaneseq
    %v3199 = vshrl.u32 %v3198, 7
    %v3200 = vsub.s32 %v2493, %v3199
    %v3201 = vrot.slane %v2784, %v3200
    %v3202 = vlaneseq
    %v3203 = vshrl.u32 %v3202, 7
    %v3204 = vsub.s32 %v2493, %v3203
    %v3205 = vrot.slane %v2787, %v3204
    %v3206 = vlaneseq
    %v3207 = vshrl.u32 %v3206, 7
    %v3208 = vsub.s32 %v2493, %v3207
    %v3209 = vrot.slane %v2790, %v3208
    %v3210 = vlaneseq
    %v3211 = vshrl.u32 %v3210, 7
    %v3212 = vsub.s32 %v2493, %v3211
    %v3213 = vrot.slane %v2793, %v3212
    %v3214 = vlaneseq
    %v3215 = vshrl.u32 %v3214, 7
    %v3216 = vsub.s32 %v2493, %v3215
    %v3217 = vrot.slane %v2796, %v3216
    %v3218 = vlaneseq
    %v3219 = vshrl.u32 %v3218, 7
    %v3220 = vsub.s32 %v2493, %v3219
    %v3221 = vrot.slane %v2799, %v3220
    %v3222 = vlaneseq
    %v3223 = vshrl.u32 %v3222, 7
    %v3224 = vsub.s32 %v2493, %v3223
    %v3225 = vrot.slane %v2802, %v3224
    %v3226 = vlaneseq
    %v3227 = vshrl.u32 %v3226, 7
    %v3228 = vsub.s32 %v2493, %v3227
    %v3229 = vrot.slane %v2805, %v3228
    %v3230 = vlaneseq
    %v3231 = vshrl.u32 %v3230, 7
    %v3232 = vsub.s32 %v2493, %v3231
    %v3233 = vrot.slane %v2808, %v3232
    %v3234 = vlaneseq
    %v3235 = vshrl.u32 %v3234, 7
    %v3236 = vsub.s32 %v2493, %v3235
    %v3237 = vrot.slane %v2811, %v3236
    %v3238 = vlaneseq
    %v3239 = vshrl.u32 %v3238, 7
    %v3240 = vsub.s32 %v2493, %v3239
    %v3241 = vrot.slane %v2814, %v3240
    %v3242 = vlaneseq
    %v3243 = vshrl.u32 %v3242, 7
    %v3244 = vsub.s32 %v2493, %v3243
    %v3245 = vrot.slane %v2817, %v3244
    %v3246 = vlaneseq
    %v3247 = vshrl.u32 %v3246, 7
    %v3248 = vsub.s32 %v2493, %v3247
    %v3249 = vrot.slane %v2820, %v3248
    %v3250 = vlaneseq
    %v3251 = vshrl.u32 %v3250, 7
    %v3252 = vsub.s32 %v2493, %v3251
    %v3253 = vrot.slane %v2823, %v3252
    %v3254 = vlaneseq
    %v3255 = vshrl.u32 %v3254, 7
    %v3256 = vsub.s32 %v2493, %v3255
    %v3257 = vrot.slane %v2826, %v3256
    %v3258 = vlaneseq
    %v3259 = vshrl.u32 %v3258, 7
    %v3260 = vsub.s32 %v2493, %v3259
    %v3261 = vrot.slane %v2829, %v3260
    %v3262 = vlaneseq
    %v3263 = vshrl.u32 %v3262, 7
    %v3264 = vsub.s32 %v2493, %v3263
    %v3265 = vrot.slane %v2832, %v3264
    %v3266 = vlaneseq
    %v3267 = vshrl.u32 %v3266, 7
    %v3268 = vsub.s32 %v2493, %v3267
    %v3269 = vrot.slane %v2835, %v3268
    %v3270 = vlaneseq
    %v3271 = vshrl.u32 %v3270, 7
    %v3272 = vsub.s32 %v2493, %v3271
    %v3273 = vrot.slane %v2838, %v3272
    %v3274 = vlaneseq
    %v3275 = vshrl.u32 %v3274, 7
    %v3276 = vsub.s32 %v2493, %v3275
    %v3277 = vrot.slane %v2841, %v3276
    %v3278 = vlaneseq
    %v3279 = vshrl.u32 %v3278, 7
    %v3280 = vsub.s32 %v2493, %v3279
    %v3281 = vrot.slane %v2844, %v3280
    %v3282 = vlaneseq
    %v3283 = vshrl.u32 %v3282, 7
    %v3284 = vsub.s32 %v2493, %v3283
    %v3285 = vrot.slane %v2847, %v3284
    %v3286 = vlaneseq
    %v3287 = vshrl.u32 %v3286, 7
    %v3288 = vsub.s32 %v2493, %v3287
    %v3289 = vrot.slane %v2850, %v3288
    %v3290 = vlaneseq
    %v3291 = vshrl.u32 %v3290, 7
    %v3292 = vsub.s32 %v2493, %v3291
    %v3293 = vrot.slane %v2853, %v3292
    %v3294 = vlaneseq
    %v3295 = vshrl.u32 %v3294, 7
    %v3296 = vsub.s32 %v2493, %v3295
    %v3297 = vrot.slane %v2856, %v3296
    %v3298 = vlaneseq
    %v3299 = vshrl.u32 %v3298, 7
    %v3300 = vsub.s32 %v2493, %v3299
    %v3301 = vrot.slane %v2859, %v3300
    %v3302 = vlaneseq
    %v3303 = vshrl.u32 %v3302, 7
    %v3304 = vsub.s32 %v2493, %v3303
    %v3305 = vrot.slane %v2862, %v3304
    %v3306 = vlaneseq
    %v3307 = vshrl.u32 %v3306, 7
    %v3308 = vsub.s32 %v2493, %v3307
    %v3309 = vrot.slane %v2865, %v3308
    %v3310 = vlaneseq
    %v3311 = vshrl.u32 %v3310, 7
    %v3312 = vsub.s32 %v2493, %v3311
    %v3313 = vrot.slane %v2868, %v3312
    %v3314 = vlaneseq
    %v3315 = vshrl.u32 %v3314, 7
    %v3316 = vsub.s32 %v2493, %v3315
    %v3317 = vrot.slane %v2871, %v3316
    %v3318 = vlaneseq
    %v3319 = vshrl.u32 %v3318, 7
    %v3320 = vsub.s32 %v2493, %v3319
    %v3321 = vrot.slane %v2874, %v3320
    %v3322 = vlaneseq
    %v3323 = vshrl.u32 %v3322, 7
    %v3324 = vsub.s32 %v2493, %v3323
    %v3325 = vrot.slane %v2877, %v3324
    %v3326 = vlaneseq
    %v3327 = vshrl.u32 %v3326, 7
    %v3328 = vsub.s32 %v2493, %v3327
    %v3329 = vrot.slane %v2880, %v3328
    %v3330 = vlaneseq
    %v3331 = vshrl.u32 %v3330, 7
    %v3332 = vsub.s32 %v2493, %v3331
    %v3333 = vrot.slane %v2883, %v3332
    %v3334 = vlaneseq
    %v3335 = vshrl.u32 %v3334, 7
    %v3336 = vsub.s32 %v2493, %v3335
    %v3337 = vrot.slane %v2886, %v3336
    %v3338 = vlaneseq
    %v3339 = vshrl.u32 %v3338, 7
    %v3340 = vsub.s32 %v2493, %v3339
    %v3341 = vrot.slane %v2889, %v3340
    %v3342 = vlaneseq
    %v3343 = vshrl.u32 %v3342, 7
    %v3344 = vsub.s32 %v2493, %v3343
    %v3345 = vrot.slane %v2892, %v3344
    %v3346 = vlaneseq
    %v3347 = vshrl.u32 %v3346, 7
    %v3348 = vsub.s32 %v2493, %v3347
    %v3349 = vrot.slane %v2895, %v3348
    %v3350 = vlaneseq
    %v3351 = vshrl.u32 %v3350, 7
    %v3352 = vsub.s32 %v2493, %v3351
    %v3353 = vrot.slane %v2898, %v3352
    %v3354 = vlaneseq
    %v3355 = vshrl.u32 %v3354, 7
    %v3356 = vsub.s32 %v2493, %v3355
    %v3357 = vrot.slane %v2901, %v3356
    %v3358 = vlaneseq
    %v3359 = vshrl.u32 %v3358, 7
    %v3360 = vsub.s32 %v2493, %v3359
    %v3361 = vrot.slane %v2904, %v3360
    %v3362 = vlaneseq
    %v3363 = vshrl.u32 %v3362, 7
    %v3364 = vsub.s32 %v2493, %v3363
    %v3365 = vrot.slane %v2907, %v3364
    %v3366 = vlaneseq
    %v3367 = vshrl.u32 %v3366, 7
    %v3368 = vsub.s32 %v2493, %v3367
    %v3369 = vrot.slane %v2910, %v3368
    %v3370 = vlaneseq
    %v3371 = vshrl.u32 %v3370, 7
    %v3372 = vsub.s32 %v2493, %v3371
    %v3373 = vrot.slane %v2913, %v3372
    %v3374 = vlaneseq
    %v3375 = vshrl.u32 %v3374, 7
    %v3376 = vsub.s32 %v2493, %v3375
    %v3377 = vrot.slane %v2916, %v3376
    %v3378 = vlaneseq
    %v3379 = vshrl.u32 %v3378, 7
    %v3380 = vsub.s32 %v2493, %v3379
    %v3381 = vrot.slane %v2919, %v3380
    %v3382 = vlaneseq
    %v3383 = vshrl.u32 %v3382, 7
    %v3384 = vsub.s32 %v2493, %v3383
    %v3385 = vrot.slane %v2922, %v3384
    %v3386 = vlaneseq
    %v3387 = vshrl.u32 %v3386, 7
    %v3388 = vsub.s32 %v2493, %v3387
    %v3389 = vrot.slane %v2925, %v3388
    %v3390 = vlaneseq
    %v3391 = vshrl.u32 %v3390, 7
    %v3392 = vsub.s32 %v2493, %v3391
    %v3393 = vrot.slane %v2928, %v3392
    %v3394 = vlaneseq
    %v3395 = vshrl.u32 %v3394, 7
    %v3396 = vsub.s32 %v2493, %v3395
    %v3397 = vrot.slane %v2931, %v3396
    %v3398 = vlaneseq
    %v3399 = vshrl.u32 %v3398, 7
    %v3400 = vsub.s32 %v2493, %v3399
    %v3401 = vrot.slane %v2934, %v3400
    %v3402 = vlaneseq
    %v3403 = vshrl.u32 %v3402, 7
    %v3404 = vsub.s32 %v2493, %v3403
    %v3405 = vrot.slane %v2937, %v3404
    %v3406 = vlaneseq
    %v3407 = vshrl.u32 %v3406, 7
    %v3408 = vsub.s32 %v2493, %v3407
    %v3409 = vrot.slane %v2940, %v3408
    %v3410 = vlaneseq
    %v3411 = vshrl.u32 %v3410, 7
    %v3412 = vsub.s32 %v2493, %v3411
    %v3413 = vrot.slane %v2943, %v3412
    %v3414 = vlaneseq
    %v3415 = vshrl.u32 %v3414, 7
    %v3416 = vsub.s32 %v2493, %v3415
    %v3417 = vrot.slane %v2946, %v3416
    %v3418 = vlaneseq
    %v3419 = vshrl.u32 %v3418, 7
    %v3420 = vsub.s32 %v2493, %v3419
    %v3421 = vrot.slane %v2949, %v3420
    %v3422 = vlaneseq
    %v3423 = vshrl.u32 %v3422, 7
    %v3424 = vsub.s32 %v2493, %v3423
    %v3425 = vrot.slane %v2952, %v3424
    %v3426 = vlaneseq
    %v3427 = vshrl.u32 %v3426, 7
    %v3428 = vsub.s32 %v2493, %v3427
    %v3429 = vrot.slane %v2955, %v3428
    %v3430 = vlaneseq
    %v3431 = vshrl.u32 %v3430, 7
    %v3432 = vsub.s32 %v2493, %v3431
    %v3433 = vrot.slane %v2958, %v3432
    %v3434 = vlaneseq
    %v3435 = vshrl.u32 %v3434, 7
    %v3436 = vsub.s32 %v2493, %v3435
    %v3437 = vrot.slane %v2961, %v3436
    %v3438 = vlaneseq
    %v3439 = vshrl.u32 %v3438, 7
    %v3440 = vsub.s32 %v2493, %v3439
    %v3441 = vrot.slane %v2964, %v3440
    %v3442 = vlaneseq
    %v3443 = vshrl.u32 %v3442, 7
    %v3444 = vsub.s32 %v2493, %v3443
    %v3445 = vrot.slane %v2967, %v3444
    %v3446 = vlaneseq
    %v3447 = vshrl.u32 %v3446, 7
    %v3448 = vsub.s32 %v2493, %v3447
    %v3449 = vrot.slane %v2970, %v3448
    %v3450 = vlaneseq
    %v3451 = vshrl.u32 %v3450, 7
    %v3452 = vsub.s32 %v2493, %v3451
    %v3453 = vrot.slane %v2973, %v3452
    %v3454 = vlaneseq
    %v3455 = vshrl.u32 %v3454, 7
    %v3456 = vsub.s32 %v2493, %v3455
    %v3457 = vrot.slane %v2976, %v3456
    %v3458 = vlaneseq
    %v3459 = vshrl.u32 %v3458, 7
    %v3460 = vsub.s32 %v2493, %v3459
    %v3461 = vrot.slane %v2979, %v3460
    %v3462 = vlaneseq
    %v3463 = vshrl.u32 %v3462, 7
    %v3464 = vsub.s32 %v2493, %v3463
    %v3465 = vrot.slane %v2982, %v3464
    %v3466 = vlaneseq
    %v3467 = vshrl.u32 %v3466, 7
    %v3468 = vsub.s32 %v2493, %v3467
    %v3469 = vrot.slane %v2985, %v3468
    %v3470 = vlaneseq
    %v3471 = vshrl.u32 %v3470, 7
    %v3472 = vsub.s32 %v2493, %v3471
    %v3473 = vrot.slane %v2988, %v3472
    %v3474 = vlaneseq
    %v3475 = vshrl.u32 %v3474, 7
    %v3476 = vsub.s32 %v2493, %v3475
    %v3477 = vrot.slane %v2991, %v3476
    %v3478 = vlaneseq
    %v3479 = vshrl.u32 %v3478, 7
    %v3480 = vsub.s32 %v2493, %v3479
    %v3481 = vrot.slane %v2994, %v3480
    %v3482 = vlaneseq
    %v3483 = vshrl.u32 %v3482, 7
    %v3484 = vsub.s32 %v2493, %v3483
    %v3485 = vrot.slane %v2997, %v3484
    %v3486 = vlaneseq
    %v3487 = vshrl.u32 %v3486, 7
    %v3488 = vsub.s32 %v2493, %v3487
    %v3489 = vrot.slane %v3000, %v3488
    %v3490 = vlaneseq
    %v3491 = vshrl.u32 %v3490, 7
    %v3492 = vsub.s32 %v2493, %v3491
    %v3493 = vrot.slane %v3003, %v3492
    %v3494 = vlaneseq
    %v3495 = vshrl.u32 %v3494, 7
    %v3496 = vsub.s32 %v2493, %v3495
    %v3497 = vrot.slane %v3006, %v3496
    %v3498 = vlaneseq
    %v3499 = vshrl.u32 %v3498, 7
    %v3500 = vsub.s32 %v2493, %v3499
    %v3501 = vrot.slane %v3009, %v3500
    %v3502 = vlaneseq
    %v3503 = vshrl.u32 %v3502, 7
    %v3504 = vsub.s32 %v2493, %v3503
    %v3505 = vrot.slane %v3012, %v3504
    %v3506 = vlaneseq
    %v3507 = vshrl.u32 %v3506, 7
    %v3508 = vsub.s32 %v2493, %v3507
    %v3509 = vrot.slane %v3015, %v3508
    %v3510 = vlaneseq
    %v3511 = vshrl.u32 %v3510, 7
    %v3512 = vsub.s32 %v2493, %v3511
    %v3513 = vrot.slane %v3018, %v3512
    %v3514 = vlaneseq
    %v3515 = vshrl.u32 %v3514, 7
    %v3516 = vsub.s32 %v2493, %v3515
    %v3517 = vrot.slane %v3021, %v3516
    %v3518 = vlaneseq
    %v3519 = vshrl.u32 %v3518, 7
    %v3520 = vsub.s32 %v2493, %v3519
    %v3521 = vrot.slane %v3024, %v3520
    %v3522 = vlaneseq
    %v3523 = vshrl.u32 %v3522, 7
    %v3524 = vsub.s32 %v2493, %v3523
    %v3525 = vrot.slane %v3027, %v3524
    %v3526 = vlaneseq
    %v3527 = vshrl.u32 %v3526, 7
    %v3528 = vsub.s32 %v2493, %v3527
    %v3529 = vrot.slane %v3030, %v3528
    %v3530 = vlaneseq
    %v3531 = vshrl.u32 %v3530, 7
    %v3532 = vsub.s32 %v2493, %v3531
    %v3533 = vrot.slane %v3033, %v3532
    %v3534 = vlaneseq
    %v3535 = vshrl.u32 %v3534, 7
    %v3536 = vsub.s32 %v2493, %v3535
    %v3537 = vrot.slane %v3036, %v3536
    %v3538 = vlaneseq
    %v3539 = vshrl.u32 %v3538, 7
    %v3540 = vsub.s32 %v2493, %v3539
    %v3541 = vrot.slane %v3039, %v3540
    %v3542 = vlaneseq
    %v3543 = vshrl.u32 %v3542, 7
    %v3544 = vsub.s32 %v2493, %v3543
    %v3545 = vrot.slane %v3042, %v3544
    %v3546 = vlaneseq
    %v3547 = vshrl.u32 %v3546, 7
    %v3548 = vsub.s32 %v2493, %v3547
    %v3549 = vrot.slane %v3045, %v3548
    %v3550 = vlaneseq
    %v3551 = vshrl.u32 %v3550, 7
    %v3552 = vsub.s32 %v2493, %v3551
    %v3553 = vrot.slane %v3048, %v3552
    %v3554 = vlaneseq
    %v3555 = vshrl.u32 %v3554, 7
    %v3556 = vsub.s32 %v2493, %v3555
    %v3557 = vrot.slane %v3051, %v3556
    %v3558 = vlaneseq
    %v3559 = vshrl.u32 %v3558, 7
    %v3560 = vsub.s32 %v2493, %v3559
    %v3561 = vrot.slane %v3054, %v3560
    %v3562 = vlaneseq
    %v3563 = vshrl.u32 %v3562, 7
    %v3564 = vsub.s32 %v2493, %v3563
    %v3565 = vrot.slane %v3057, %v3564
    %v3566 = vlaneseq
    %v3567 = vshrl.u32 %v3566, 7
    %v3568 = vsub.s32 %v2493, %v3567
    %v3569 = vrot.slane %v3060, %v3568
    %v3570 = vlaneseq
    %v3571 = vshrl.u32 %v3570, 7
    %v3572 = vsub.s32 %v2493, %v3571
    %v3573 = vrot.slane %v3063, %v3572
    %v3574 = vlaneseq
    %v3575 = vshrl.u32 %v3574, 7
    %v3576 = vsub.s32 %v2493, %v3575
    %v3577 = vrot.slane %v3066, %v3576
    %v3578 = vlaneseq
    %v3579 = vshrl.u32 %v3578, 7
    %v3580 = vsub.s32 %v2493, %v3579
    %v3581 = vrot.slane %v3069, %v3580
    %vm3582 = vcmask 1041409
    %v3583 = vsel %vm3582, %v3077, %v3073
    %vm3584 = vcmask 1042434
    %v3585 = vsel %vm3584, %v3081, %v3583
    %vm3586 = vcmask 1043459
    %v3587 = vsel %vm3586, %v3085, %v3585
    %vm3588 = vcmask 1044484
    %v3589 = vsel %vm3588, %v3089, %v3587
    %vm3590 = vcmask 1045509
    %v3591 = vsel %vm3590, %v3093, %v3589
    %vm3592 = vcmask 1046534
    %v3593 = vsel %vm3592, %v3097, %v3591
    %vm3594 = vcmask 1047559
    %v3595 = vsel %vm3594, %v3101, %v3593
    %v3596 = vsel %vm3582, %v3109, %v3105
    %v3597 = vsel %vm3584, %v3113, %v3596
    %v3598 = vsel %vm3586, %v3117, %v3597
    %v3599 = vsel %vm3588, %v3121, %v3598
    %v3600 = vsel %vm3590, %v3125, %v3599
    %v3601 = vsel %vm3592, %v3129, %v3600
    %v3602 = vsel %vm3594, %v3133, %v3601
    %v3603 = vsel %vm3582, %v3141, %v3137
    %v3604 = vsel %vm3584, %v3145, %v3603
    %v3605 = vsel %vm3586, %v3149, %v3604
    %v3606 = vsel %vm3588, %v3153, %v3605
    %v3607 = vsel %vm3590, %v3157, %v3606
    %v3608 = vsel %vm3592, %v3161, %v3607
    %v3609 = vsel %vm3594, %v3165, %v3608
    %v3610 = vsel %vm3582, %v3173, %v3169
    %v3611 = vsel %vm3584, %v3177, %v3610
    %v3612 = vsel %vm3586, %v3181, %v3611
    %v3613 = vsel %vm3588, %v3185, %v3612
    %v3614 = vsel %vm3590, %v3189, %v3613
    %v3615 = vsel %vm3592, %v3193, %v3614
    %v3616 = vsel %vm3594, %v3197, %v3615
    %v3617 = vsel %vm3582, %v3205, %v3201
    %v3618 = vsel %vm3584, %v3209, %v3617
    %v3619 = vsel %vm3586, %v3213, %v3618
    %v3620 = vsel %vm3588, %v3217, %v3619
    %v3621 = vsel %vm3590, %v3221, %v3620
    %v3622 = vsel %vm3592, %v3225, %v3621
    %v3623 = vsel %vm3594, %v3229, %v3622
    %v3624 = vsel %vm3582, %v3237, %v3233
    %v3625 = vsel %vm3584, %v3241, %v3624
    %v3626 = vsel %vm3586, %v3245, %v3625
    %v3627 = vsel %vm3588, %v3249, %v3626
    %v3628 = vsel %vm3590, %v3253, %v3627
    %v3629 = vsel %vm3592, %v3257, %v3628
    %v3630 = vsel %vm3594, %v3261, %v3629
    %v3631 = vsel %vm3582, %v3269, %v3265
    %v3632 = vsel %vm3584, %v3273, %v3631
    %v3633 = vsel %vm3586, %v3277, %v3632
    %v3634 = vsel %vm3588, %v3281, %v3633
    %v3635 = vsel %vm3590, %v3285, %v3634
    %v3636 = vsel %vm3592, %v3289, %v3635
    %v3637 = vsel %vm3594, %v3293, %v3636
    %v3638 = vsel %vm3582, %v3301, %v3297
    %v3639 = vsel %vm3584, %v3305, %v3638
    %v3640 = vsel %vm3586, %v3309, %v3639
    %v3641 = vsel %vm3588, %v3313, %v3640
    %v3642 = vsel %vm3590, %v3317, %v3641
    %v3643 = vsel %vm3592, %v3321, %v3642
    %v3644 = vsel %vm3594, %v3325, %v3643
    %v3645 = vsel %vm3582, %v3333, %v3329
    %v3646 = vsel %vm3584, %v3337, %v3645
    %v3647 = vsel %vm3586, %v3341, %v3646
    %v3648 = vsel %vm3588, %v3345, %v3647
    %v3649 = vsel %vm3590, %v3349, %v3648
    %v3650 = vsel %vm3592, %v3353, %v3649
    %v3651 = vsel %vm3594, %v3357, %v3650
    %v3652 = vsel %vm3582, %v3365, %v3361
    %v3653 = vsel %vm3584, %v3369, %v3652
    %v3654 = vsel %vm3586, %v3373, %v3653
    %v3655 = vsel %vm3588, %v3377, %v3654
    %v3656 = vsel %vm3590, %v3381, %v3655
    %v3657 = vsel %vm3592, %v3385, %v3656
    %v3658 = vsel %vm3594, %v3389, %v3657
    %v3659 = vsel %vm3582, %v3397, %v3393
    %v3660 = vsel %vm3584, %v3401, %v3659
    %v3661 = vsel %vm3586, %v3405, %v3660
    %v3662 = vsel %vm3588, %v3409, %v3661
    %v3663 = vsel %vm3590, %v3413, %v3662
    %v3664 = vsel %vm3592, %v3417, %v3663
    %v3665 = vsel %vm3594, %v3421, %v3664
    %v3666 = vsel %vm3582, %v3429, %v3425
    %v3667 = vsel %vm3584, %v3433, %v3666
    %v3668 = vsel %vm3586, %v3437, %v3667
    %v3669 = vsel %vm3588, %v3441, %v3668
    %v3670 = vsel %vm3590, %v3445, %v3669
    %v3671 = vsel %vm3592, %v3449, %v3670
    %v3672 = vsel %vm3594, %v3453, %v3671
    %v3673 = vsel %vm3582, %v3461, %v3457
    %v3674 = vsel %vm3584, %v3465, %v3673
    %v3675 = vsel %vm3586, %v3469, %v3674
    %v3676 = vsel %vm3588, %v3473, %v3675
    %v3677 = vsel %vm3590, %v3477, %v3676
    %v3678 = vsel %vm3592, %v3481, %v3677
    %v3679 = vsel %vm3594, %v3485, %v3678
    %v3680 = vsel %vm3582, %v3493, %v3489
    %v3681 = vsel %vm3584, %v3497, %v3680
    %v3682 = vsel %vm3586, %v3501, %v3681
    %v3683 = vsel %vm3588, %v3505, %v3682
    %v3684 = vsel %vm3590, %v3509, %v3683
    %v3685 = vsel %vm3592, %v3513, %v3684
    %v3686 = vsel %vm3594, %v3517, %v3685
    %v3687 = vsel %vm3582, %v3525, %v3521
    %v3688 = vsel %vm3584, %v3529, %v3687
    %v3689 = vsel %vm3586, %v3533, %v3688
    %v3690 = vsel %vm3588, %v3537, %v3689
    %v3691 = vsel %vm3590, %v3541, %v3690
    %v3692 = vsel %vm3592, %v3545, %v3691
    %v3693 = vsel %vm3594, %v3549, %v3692
    %v3694 = vsel %vm3582, %v3557, %v3553
    %v3695 = vsel %vm3584, %v3561, %v3694
    %v3696 = vsel %vm3586, %v3565, %v3695
    %v3697 = vsel %vm3588, %v3569, %v3696
    %v3698 = vsel %vm3590, %v3573, %v3697
    %v3699 = vsel %vm3592, %v3577, %v3698
    %v3700 = vsel %vm3594, %v3581, %v3699
    %v3717 = vsel %vm2542, %v3595, -1e+09
    %v3718 = vsel %vm2543, %v3602, -1e+09
    %v3719 = vsel %vm2544, %v3609, -1e+09
    %v3720 = vsel %vm2545, %v3616, -1e+09
    %v3721 = vsel %vm2546, %v3623, -1e+09
    %v3722 = vsel %vm2547, %v3630, -1e+09
    %v3723 = vsel %vm2548, %v3637, -1e+09
    %v3724 = vsel %vm2549, %v3644, -1e+09
    %v3725 = vsel %vm2550, %v3651, -1e+09
    %v3726 = vsel %vm2551, %v3658, -1e+09
    %v3727 = vsel %vm2552, %v3665, -1e+09
    %v3728 = vsel %vm2553, %v3672, -1e+09
    %v3729 = vsel %vm2554, %v3679, -1e+09
    %v3730 = vsel %vm2555, %v3686, -1e+09
    %v3731 = vsel %vm2556, %v3693, -1e+09
    %v3732 = vsel %vm2557, %v3700, -1e+09
    %vm3733 = vcmask 64512
    %v3734 = vsel %vm3733, %v3717, -inf
    %3735 = vmax.xlane.f32.xlu0 %v3734
    %v3736 = vpop.xlane.xlu0 %3735
    %v3737 = vsel %vm3733, %v3718, -inf
    %3738 = vmax.xlane.f32.xlu0 %v3737
    %v3739 = vpop.xlane.xlu0 %3738
    %v3740 = vsel %vm3733, %v3719, -inf
    %3741 = vmax.xlane.f32.xlu0 %v3740
    %v3742 = vpop.xlane.xlu0 %3741
    %v3743 = vsel %vm3733, %v3720, -inf
    %3744 = vmax.xlane.f32.xlu0 %v3743
    %v3745 = vpop.xlane.xlu0 %3744
    %v3746 = vsel %vm3733, %v3721, -inf
    %3747 = vmax.xlane.f32.xlu0 %v3746
    %v3748 = vpop.xlane.xlu0 %3747
    %v3749 = vsel %vm3733, %v3722, -inf
    %3750 = vmax.xlane.f32.xlu0 %v3749
    %v3751 = vpop.xlane.xlu0 %3750
    %v3752 = vsel %vm3733, %v3723, -inf
    %3753 = vmax.xlane.f32.xlu0 %v3752
    %v3754 = vpop.xlane.xlu0 %3753
    %v3755 = vsel %vm3733, %v3724, -inf
    %3756 = vmax.xlane.f32.xlu0 %v3755
    %v3757 = vpop.xlane.xlu0 %3756
    %v3758 = vsel %vm3733, %v3725, -inf
    %3759 = vmax.xlane.f32.xlu0 %v3758
    %v3760 = vpop.xlane.xlu0 %3759
    %v3761 = vsel %vm3733, %v3726, -inf
    %3762 = vmax.xlane.f32.xlu0 %v3761
    %v3763 = vpop.xlane.xlu0 %3762
    %v3764 = vsel %vm3733, %v3727, -inf
    %3765 = vmax.xlane.f32.xlu0 %v3764
    %v3766 = vpop.xlane.xlu0 %3765
    %v3767 = vsel %vm3733, %v3728, -inf
    %3768 = vmax.xlane.f32.xlu0 %v3767
    %v3769 = vpop.xlane.xlu0 %3768
    %v3770 = vsel %vm3733, %v3729, -inf
    %3771 = vmax.xlane.f32.xlu0 %v3770
    %v3772 = vpop.xlane.xlu0 %3771
    %v3773 = vsel %vm3733, %v3730, -inf
    %3774 = vmax.xlane.f32.xlu0 %v3773
    %v3775 = vpop.xlane.xlu0 %3774
    %v3776 = vsel %vm3733, %v3731, -inf
    %3777 = vmax.xlane.f32.xlu0 %v3776
    %v3778 = vpop.xlane.xlu0 %3777
    %v3779 = vsel %vm3733, %v3732, -inf
    %3780 = vmax.xlane.f32.xlu0 %v3779
    %v3781 = vpop.xlane.xlu0 %3780
    %v3782 = vsub.f32 %v3717, %v3736
    %v3783 = vsub.f32 %v3718, %v3739
    %v3784 = vsub.f32 %v3719, %v3742
    %v3785 = vsub.f32 %v3720, %v3745
    %v3786 = vsub.f32 %v3721, %v3748
    %v3787 = vsub.f32 %v3722, %v3751
    %v3788 = vsub.f32 %v3723, %v3754
    %v3789 = vsub.f32 %v3724, %v3757
    %v3790 = vsub.f32 %v3725, %v3760
    %v3791 = vsub.f32 %v3726, %v3763
    %v3792 = vsub.f32 %v3727, %v3766
    %v3793 = vsub.f32 %v3728, %v3769
    %v3794 = vsub.f32 %v3729, %v3772
    %v3795 = vsub.f32 %v3730, %v3775
    %v3796 = vsub.f32 %v3731, %v3778
    %v3797 = vsub.f32 %v3732, %v3781
    %v3798 = vmul.f32 %v3782, 1.442695
    %v3799 = vpow.pop %v3798
    %v3800 = vmul.f32 %v3783, 1.442695
    %v3801 = vpow.pop %v3800
    %v3802 = vmul.f32 %v3784, 1.442695
    %v3803 = vpow.pop %v3802
    %v3804 = vmul.f32 %v3785, 1.442695
    %v3805 = vpow.pop %v3804
    %v3806 = vmul.f32 %v3786, 1.442695
    %v3807 = vpow.pop %v3806
    %v3808 = vmul.f32 %v3787, 1.442695
    %v3809 = vpow.pop %v3808
    %v3810 = vmul.f32 %v3788, 1.442695
    %v3811 = vpow.pop %v3810
    %v3812 = vmul.f32 %v3789, 1.442695
    %v3813 = vpow.pop %v3812
    %v3814 = vmul.f32 %v3790, 1.442695
    %v3815 = vpow.pop %v3814
    %v3816 = vmul.f32 %v3791, 1.442695
    %v3817 = vpow.pop %v3816
    %v3818 = vmul.f32 %v3792, 1.442695
    %v3819 = vpow.pop %v3818
    %v3820 = vmul.f32 %v3793, 1.442695
    %v3821 = vpow.pop %v3820
    %v3822 = vmul.f32 %v3794, 1.442695
    %v3823 = vpow.pop %v3822
    %v3824 = vmul.f32 %v3795, 1.442695
    %v3825 = vpow.pop %v3824
    %v3826 = vmul.f32 %v3796, 1.442695
    %v3827 = vpow.pop %v3826
    %v3828 = vmul.f32 %v3797, 1.442695
    %v3829 = vpow.pop %v3828
    %v3830 = vsel %vm2542, 1, 0
    %v3831 = vsel %vm2543, 1, 0
    %v3832 = vsel %vm2544, 1, 0
    %v3833 = vsel %vm2545, 1, 0
    %v3834 = vsel %vm2546, 1, 0
    %v3835 = vsel %vm2547, 1, 0
    %v3836 = vsel %vm2548, 1, 0
    %v3837 = vsel %vm2549, 1, 0
    %v3838 = vsel %vm2550, 1, 0
    %v3839 = vsel %vm2551, 1, 0
    %v3840 = vsel %vm2552, 1, 0
    %v3841 = vsel %vm2553, 1, 0
    %v3842 = vsel %vm2554, 1, 0
    %v3843 = vsel %vm2555, 1, 0
    %v3844 = vsel %vm2556, 1, 0
    %v3845 = vsel %vm2557, 1, 0
    %v3846 = vcvt.s32.f32 %v3830
    %v3847 = vcvt.s32.f32 %v3831
    %v3848 = vcvt.s32.f32 %v3832
    %v3849 = vcvt.s32.f32 %v3833
    %v3850 = vcvt.s32.f32 %v3834
    %v3851 = vcvt.s32.f32 %v3835
    %v3852 = vcvt.s32.f32 %v3836
    %v3853 = vcvt.s32.f32 %v3837
    %v3854 = vcvt.s32.f32 %v3838
    %v3855 = vcvt.s32.f32 %v3839
    %v3856 = vcvt.s32.f32 %v3840
    %v3857 = vcvt.s32.f32 %v3841
    %v3858 = vcvt.s32.f32 %v3842
    %v3859 = vcvt.s32.f32 %v3843
    %v3860 = vcvt.s32.f32 %v3844
    %v3861 = vcvt.s32.f32 %v3845
    %v3862 = vmul.f32 %v3799, %v3846
    %v3863 = vmul.f32 %v3801, %v3847
    %v3864 = vmul.f32 %v3803, %v3848
    %v3865 = vmul.f32 %v3805, %v3849
    %v3866 = vmul.f32 %v3807, %v3850
    %v3867 = vmul.f32 %v3809, %v3851
    %v3868 = vmul.f32 %v3811, %v3852
    %v3869 = vmul.f32 %v3813, %v3853
    %v3870 = vmul.f32 %v3815, %v3854
    %v3871 = vmul.f32 %v3817, %v3855
    %v3872 = vmul.f32 %v3819, %v3856
    %v3873 = vmul.f32 %v3821, %v3857
    %v3874 = vmul.f32 %v3823, %v3858
    %v3875 = vmul.f32 %v3825, %v3859
    %v3876 = vmul.f32 %v3827, %v3860
    %v3877 = vmul.f32 %v3829, %v3861
    %v3878 = vsel %vm3733, %v3862, 0.0
    %3879 = vadd.xlane.f32.xlu0 %v3878
    %v3880 = vpop.xlane.xlu0 %3879
    %v3881 = vsel %vm3733, %v3863, 0.0
    %3882 = vadd.xlane.f32.xlu0 %v3881
    %v3883 = vpop.xlane.xlu0 %3882
    %v3884 = vsel %vm3733, %v3864, 0.0
    %3885 = vadd.xlane.f32.xlu0 %v3884
    %v3886 = vpop.xlane.xlu0 %3885
    %v3887 = vsel %vm3733, %v3865, 0.0
    %3888 = vadd.xlane.f32.xlu0 %v3887
    %v3889 = vpop.xlane.xlu0 %3888
    %v3890 = vsel %vm3733, %v3866, 0.0
    %3891 = vadd.xlane.f32.xlu0 %v3890
    %v3892 = vpop.xlane.xlu0 %3891
    %v3893 = vsel %vm3733, %v3867, 0.0
    %3894 = vadd.xlane.f32.xlu0 %v3893
    %v3895 = vpop.xlane.xlu0 %3894
    %v3896 = vsel %vm3733, %v3868, 0.0
    %3897 = vadd.xlane.f32.xlu0 %v3896
    %v3898 = vpop.xlane.xlu0 %3897
    %v3899 = vsel %vm3733, %v3869, 0.0
    %3900 = vadd.xlane.f32.xlu0 %v3899
    %v3901 = vpop.xlane.xlu0 %3900
    %v3902 = vsel %vm3733, %v3870, 0.0
    %3903 = vadd.xlane.f32.xlu0 %v3902
    %v3904 = vpop.xlane.xlu0 %3903
    %v3905 = vsel %vm3733, %v3871, 0.0
    %3906 = vadd.xlane.f32.xlu0 %v3905
    %v3907 = vpop.xlane.xlu0 %3906
    %v3908 = vsel %vm3733, %v3872, 0.0
    %3909 = vadd.xlane.f32.xlu0 %v3908
    %v3910 = vpop.xlane.xlu0 %3909
    %v3911 = vsel %vm3733, %v3873, 0.0
    %3912 = vadd.xlane.f32.xlu0 %v3911
    %v3913 = vpop.xlane.xlu0 %3912
    %v3914 = vsel %vm3733, %v3874, 0.0
    %3915 = vadd.xlane.f32.xlu0 %v3914
    %v3916 = vpop.xlane.xlu0 %3915
    %v3917 = vsel %vm3733, %v3875, 0.0
    %3918 = vadd.xlane.f32.xlu0 %v3917
    %v3919 = vpop.xlane.xlu0 %3918
    %v3920 = vsel %vm3733, %v3876, 0.0
    %3921 = vadd.xlane.f32.xlu0 %v3920
    %v3922 = vpop.xlane.xlu0 %3921
    %v3923 = vsel %vm3733, %v3877, 0.0
    %3924 = vadd.xlane.f32.xlu0 %v3923
    %v3925 = vpop.xlane.xlu0 %3924
    %v3926 = vmax.f32 %v3880, 1e-09
    %v3927 = vmax.f32 %v3883, 1e-09
    %v3928 = vmax.f32 %v3886, 1e-09
    %v3929 = vmax.f32 %v3889, 1e-09
    %v3930 = vmax.f32 %v3892, 1e-09
    %v3931 = vmax.f32 %v3895, 1e-09
    %v3932 = vmax.f32 %v3898, 1e-09
    %v3933 = vmax.f32 %v3901, 1e-09
    %v3934 = vmax.f32 %v3904, 1e-09
    %v3935 = vmax.f32 %v3907, 1e-09
    %v3936 = vmax.f32 %v3910, 1e-09
    %v3937 = vmax.f32 %v3913, 1e-09
    %v3938 = vmax.f32 %v3916, 1e-09
    %v3939 = vmax.f32 %v3919, 1e-09
    %v3940 = vmax.f32 %v3922, 1e-09
    %v3941 = vmax.f32 %v3925, 1e-09
    %v3942 = vrcp.pop %v3926
    %v3943 = vrcp.pop %v3927
    %v3944 = vrcp.pop %v3928
    %v3945 = vrcp.pop %v3929
    %v3946 = vrcp.pop %v3930
    %v3947 = vrcp.pop %v3931
    %v3948 = vrcp.pop %v3932
    %v3949 = vrcp.pop %v3933
    %v3950 = vrcp.pop %v3934
    %v3951 = vrcp.pop %v3935
    %v3952 = vrcp.pop %v3936
    %v3953 = vrcp.pop %v3937
    %v3954 = vrcp.pop %v3938
    %v3955 = vrcp.pop %v3939
    %v3956 = vrcp.pop %v3940
    %v3957 = vrcp.pop %v3941
    %v3958 = vmul.f32 %v3862, %v3942
    %v3959 = vmul.f32 %v3863, %v3943
    %v3960 = vmul.f32 %v3864, %v3944
    %v3961 = vmul.f32 %v3865, %v3945
    %v3962 = vmul.f32 %v3866, %v3946
    %v3963 = vmul.f32 %v3867, %v3947
    %v3964 = vmul.f32 %v3868, %v3948
    %v3965 = vmul.f32 %v3869, %v3949
    %v3966 = vmul.f32 %v3870, %v3950
    %v3967 = vmul.f32 %v3871, %v3951
    %v3968 = vmul.f32 %v3872, %v3952
    %v3969 = vmul.f32 %v3873, %v3953
    %v3970 = vmul.f32 %v3874, %v3954
    %v3971 = vmul.f32 %v3875, %v3955
    %v3972 = vmul.f32 %v3876, %v3956
    %v3973 = vmul.f32 %v3877, %v3957
    %v3974 = vlaneseq
    %v3975 = vshrl.u32 %v3974, 7
    %v3976 = vsub.s32 0, %v3975
    %v3977 = vrot.slane %v3958, %v3976
    %3979 = vbcast.lane.b32.xlu0 %v3977, 256
    %v3980 = vpop.permute.xlu0 %3979
    %v3981 = vlaneseq
    %v3982 = vshrl.u32 %v3981, 7
    %v3983 = vsub.s32 1, %v3982
    %v3984 = vrot.slane %v3958, %v3983
    %3986 = vbcast.lane.b32.xlu0 %v3984, 256
    %v3987 = vpop.permute.xlu0 %3986
    %v3988 = vlaneseq
    %v3989 = vshrl.u32 %v3988, 7
    %v3990 = vsub.s32 2, %v3989
    %v3991 = vrot.slane %v3958, %v3990
    %3993 = vbcast.lane.b32.xlu0 %v3991, 256
    %v3994 = vpop.permute.xlu0 %3993
    %v3995 = vlaneseq
    %v3996 = vshrl.u32 %v3995, 7
    %v3997 = vsub.s32 3, %v3996
    %v3998 = vrot.slane %v3958, %v3997
    %4000 = vbcast.lane.b32.xlu0 %v3998, 256
    %v4001 = vpop.permute.xlu0 %4000
    %v4002 = vlaneseq
    %v4003 = vshrl.u32 %v4002, 7
    %v4004 = vsub.s32 4, %v4003
    %v4005 = vrot.slane %v3958, %v4004
    %4007 = vbcast.lane.b32.xlu0 %v4005, 256
    %v4008 = vpop.permute.xlu0 %4007
    %v4009 = vlaneseq
    %v4010 = vshrl.u32 %v4009, 7
    %v4011 = vsub.s32 5, %v4010
    %v4012 = vrot.slane %v3958, %v4011
    %4014 = vbcast.lane.b32.xlu0 %v4012, 256
    %v4015 = vpop.permute.xlu0 %4014
    %v4016 = vlaneseq
    %v4017 = vshrl.u32 %v4016, 7
    %v4018 = vsub.s32 6, %v4017
    %v4019 = vrot.slane %v3958, %v4018
    %4021 = vbcast.lane.b32.xlu0 %v4019, 256
    %v4022 = vpop.permute.xlu0 %4021
    %v4023 = vlaneseq
    %v4024 = vshrl.u32 %v4023, 7
    %v4025 = vsub.s32 7, %v4024
    %v4026 = vrot.slane %v3958, %v4025
    %4028 = vbcast.lane.b32.xlu0 %v4026, 256
    %v4029 = vpop.permute.xlu0 %4028
    %v4030 = vlaneseq
    %v4031 = vshrl.u32 %v4030, 7
    %v4032 = vsub.s32 0, %v4031
    %v4033 = vrot.slane %v3959, %v4032
    %4035 = vbcast.lane.b32.xlu0 %v4033, 256
    %v4036 = vpop.permute.xlu0 %4035
    %v4037 = vlaneseq
    %v4038 = vshrl.u32 %v4037, 7
    %v4039 = vsub.s32 1, %v4038
    %v4040 = vrot.slane %v3959, %v4039
    %4042 = vbcast.lane.b32.xlu0 %v4040, 256
    %v4043 = vpop.permute.xlu0 %4042
    %v4044 = vlaneseq
    %v4045 = vshrl.u32 %v4044, 7
    %v4046 = vsub.s32 2, %v4045
    %v4047 = vrot.slane %v3959, %v4046
    %4049 = vbcast.lane.b32.xlu0 %v4047, 256
    %v4050 = vpop.permute.xlu0 %4049
    %v4051 = vlaneseq
    %v4052 = vshrl.u32 %v4051, 7
    %v4053 = vsub.s32 3, %v4052
    %v4054 = vrot.slane %v3959, %v4053
    %4056 = vbcast.lane.b32.xlu0 %v4054, 256
    %v4057 = vpop.permute.xlu0 %4056
    %v4058 = vlaneseq
    %v4059 = vshrl.u32 %v4058, 7
    %v4060 = vsub.s32 4, %v4059
    %v4061 = vrot.slane %v3959, %v4060
    %4063 = vbcast.lane.b32.xlu0 %v4061, 256
    %v4064 = vpop.permute.xlu0 %4063
    %v4065 = vlaneseq
    %v4066 = vshrl.u32 %v4065, 7
    %v4067 = vsub.s32 5, %v4066
    %v4068 = vrot.slane %v3959, %v4067
    %4070 = vbcast.lane.b32.xlu0 %v4068, 256
    %v4071 = vpop.permute.xlu0 %4070
    %v4072 = vlaneseq
    %v4073 = vshrl.u32 %v4072, 7
    %v4074 = vsub.s32 6, %v4073
    %v4075 = vrot.slane %v3959, %v4074
    %4077 = vbcast.lane.b32.xlu0 %v4075, 256
    %v4078 = vpop.permute.xlu0 %4077
    %v4079 = vlaneseq
    %v4080 = vshrl.u32 %v4079, 7
    %v4081 = vsub.s32 7, %v4080
    %v4082 = vrot.slane %v3959, %v4081
    %4084 = vbcast.lane.b32.xlu0 %v4082, 256
    %v4085 = vpop.permute.xlu0 %4084
    %v4086 = vlaneseq
    %v4087 = vshrl.u32 %v4086, 7
    %v4088 = vsub.s32 0, %v4087
    %v4089 = vrot.slane %v3960, %v4088
    %4091 = vbcast.lane.b32.xlu0 %v4089, 256
    %v4092 = vpop.permute.xlu0 %4091
    %v4093 = vlaneseq
    %v4094 = vshrl.u32 %v4093, 7
    %v4095 = vsub.s32 1, %v4094
    %v4096 = vrot.slane %v3960, %v4095
    %4098 = vbcast.lane.b32.xlu0 %v4096, 256
    %v4099 = vpop.permute.xlu0 %4098
    %v4100 = vlaneseq
    %v4101 = vshrl.u32 %v4100, 7
    %v4102 = vsub.s32 2, %v4101
    %v4103 = vrot.slane %v3960, %v4102
    %4105 = vbcast.lane.b32.xlu0 %v4103, 256
    %v4106 = vpop.permute.xlu0 %4105
    %v4107 = vlaneseq
    %v4108 = vshrl.u32 %v4107, 7
    %v4109 = vsub.s32 3, %v4108
    %v4110 = vrot.slane %v3960, %v4109
    %4112 = vbcast.lane.b32.xlu0 %v4110, 256
    %v4113 = vpop.permute.xlu0 %4112
    %v4114 = vlaneseq
    %v4115 = vshrl.u32 %v4114, 7
    %v4116 = vsub.s32 4, %v4115
    %v4117 = vrot.slane %v3960, %v4116
    %4119 = vbcast.lane.b32.xlu0 %v4117, 256
    %v4120 = vpop.permute.xlu0 %4119
    %v4121 = vlaneseq
    %v4122 = vshrl.u32 %v4121, 7
    %v4123 = vsub.s32 5, %v4122
    %v4124 = vrot.slane %v3960, %v4123
    %4126 = vbcast.lane.b32.xlu0 %v4124, 256
    %v4127 = vpop.permute.xlu0 %4126
    %v4128 = vlaneseq
    %v4129 = vshrl.u32 %v4128, 7
    %v4130 = vsub.s32 6, %v4129
    %v4131 = vrot.slane %v3960, %v4130
    %4133 = vbcast.lane.b32.xlu0 %v4131, 256
    %v4134 = vpop.permute.xlu0 %4133
    %v4135 = vlaneseq
    %v4136 = vshrl.u32 %v4135, 7
    %v4137 = vsub.s32 7, %v4136
    %v4138 = vrot.slane %v3960, %v4137
    %4140 = vbcast.lane.b32.xlu0 %v4138, 256
    %v4141 = vpop.permute.xlu0 %4140
    %v4142 = vlaneseq
    %v4143 = vshrl.u32 %v4142, 7
    %v4144 = vsub.s32 0, %v4143
    %v4145 = vrot.slane %v3961, %v4144
    %4147 = vbcast.lane.b32.xlu0 %v4145, 256
    %v4148 = vpop.permute.xlu0 %4147
    %v4149 = vlaneseq
    %v4150 = vshrl.u32 %v4149, 7
    %v4151 = vsub.s32 1, %v4150
    %v4152 = vrot.slane %v3961, %v4151
    %4154 = vbcast.lane.b32.xlu0 %v4152, 256
    %v4155 = vpop.permute.xlu0 %4154
    %v4156 = vlaneseq
    %v4157 = vshrl.u32 %v4156, 7
    %v4158 = vsub.s32 2, %v4157
    %v4159 = vrot.slane %v3961, %v4158
    %4161 = vbcast.lane.b32.xlu0 %v4159, 256
    %v4162 = vpop.permute.xlu0 %4161
    %v4163 = vlaneseq
    %v4164 = vshrl.u32 %v4163, 7
    %v4165 = vsub.s32 3, %v4164
    %v4166 = vrot.slane %v3961, %v4165
    %4168 = vbcast.lane.b32.xlu0 %v4166, 256
    %v4169 = vpop.permute.xlu0 %4168
    %v4170 = vlaneseq
    %v4171 = vshrl.u32 %v4170, 7
    %v4172 = vsub.s32 4, %v4171
    %v4173 = vrot.slane %v3961, %v4172
    %4175 = vbcast.lane.b32.xlu0 %v4173, 256
    %v4176 = vpop.permute.xlu0 %4175
    %v4177 = vlaneseq
    %v4178 = vshrl.u32 %v4177, 7
    %v4179 = vsub.s32 5, %v4178
    %v4180 = vrot.slane %v3961, %v4179
    %4182 = vbcast.lane.b32.xlu0 %v4180, 256
    %v4183 = vpop.permute.xlu0 %4182
    %v4184 = vlaneseq
    %v4185 = vshrl.u32 %v4184, 7
    %v4186 = vsub.s32 6, %v4185
    %v4187 = vrot.slane %v3961, %v4186
    %4189 = vbcast.lane.b32.xlu0 %v4187, 256
    %v4190 = vpop.permute.xlu0 %4189
    %v4191 = vlaneseq
    %v4192 = vshrl.u32 %v4191, 7
    %v4193 = vsub.s32 7, %v4192
    %v4194 = vrot.slane %v3961, %v4193
    %4196 = vbcast.lane.b32.xlu0 %v4194, 256
    %v4197 = vpop.permute.xlu0 %4196
    %v4198 = vlaneseq
    %v4199 = vshrl.u32 %v4198, 7
    %v4200 = vsub.s32 0, %v4199
    %v4201 = vrot.slane %v3962, %v4200
    %4203 = vbcast.lane.b32.xlu0 %v4201, 256
    %v4204 = vpop.permute.xlu0 %4203
    %v4205 = vlaneseq
    %v4206 = vshrl.u32 %v4205, 7
    %v4207 = vsub.s32 1, %v4206
    %v4208 = vrot.slane %v3962, %v4207
    %4210 = vbcast.lane.b32.xlu0 %v4208, 256
    %v4211 = vpop.permute.xlu0 %4210
    %v4212 = vlaneseq
    %v4213 = vshrl.u32 %v4212, 7
    %v4214 = vsub.s32 2, %v4213
    %v4215 = vrot.slane %v3962, %v4214
    %4217 = vbcast.lane.b32.xlu0 %v4215, 256
    %v4218 = vpop.permute.xlu0 %4217
    %v4219 = vlaneseq
    %v4220 = vshrl.u32 %v4219, 7
    %v4221 = vsub.s32 3, %v4220
    %v4222 = vrot.slane %v3962, %v4221
    %4224 = vbcast.lane.b32.xlu0 %v4222, 256
    %v4225 = vpop.permute.xlu0 %4224
    %v4226 = vlaneseq
    %v4227 = vshrl.u32 %v4226, 7
    %v4228 = vsub.s32 4, %v4227
    %v4229 = vrot.slane %v3962, %v4228
    %4231 = vbcast.lane.b32.xlu0 %v4229, 256
    %v4232 = vpop.permute.xlu0 %4231
    %v4233 = vlaneseq
    %v4234 = vshrl.u32 %v4233, 7
    %v4235 = vsub.s32 5, %v4234
    %v4236 = vrot.slane %v3962, %v4235
    %4238 = vbcast.lane.b32.xlu0 %v4236, 256
    %v4239 = vpop.permute.xlu0 %4238
    %v4240 = vlaneseq
    %v4241 = vshrl.u32 %v4240, 7
    %v4242 = vsub.s32 6, %v4241
    %v4243 = vrot.slane %v3962, %v4242
    %4245 = vbcast.lane.b32.xlu0 %v4243, 256
    %v4246 = vpop.permute.xlu0 %4245
    %v4247 = vlaneseq
    %v4248 = vshrl.u32 %v4247, 7
    %v4249 = vsub.s32 7, %v4248
    %v4250 = vrot.slane %v3962, %v4249
    %4252 = vbcast.lane.b32.xlu0 %v4250, 256
    %v4253 = vpop.permute.xlu0 %4252
    %v4254 = vlaneseq
    %v4255 = vshrl.u32 %v4254, 7
    %v4256 = vsub.s32 0, %v4255
    %v4257 = vrot.slane %v3963, %v4256
    %4259 = vbcast.lane.b32.xlu0 %v4257, 256
    %v4260 = vpop.permute.xlu0 %4259
    %v4261 = vlaneseq
    %v4262 = vshrl.u32 %v4261, 7
    %v4263 = vsub.s32 1, %v4262
    %v4264 = vrot.slane %v3963, %v4263
    %4266 = vbcast.lane.b32.xlu0 %v4264, 256
    %v4267 = vpop.permute.xlu0 %4266
    %v4268 = vlaneseq
    %v4269 = vshrl.u32 %v4268, 7
    %v4270 = vsub.s32 2, %v4269
    %v4271 = vrot.slane %v3963, %v4270
    %4273 = vbcast.lane.b32.xlu0 %v4271, 256
    %v4274 = vpop.permute.xlu0 %4273
    %v4275 = vlaneseq
    %v4276 = vshrl.u32 %v4275, 7
    %v4277 = vsub.s32 3, %v4276
    %v4278 = vrot.slane %v3963, %v4277
    %4280 = vbcast.lane.b32.xlu0 %v4278, 256
    %v4281 = vpop.permute.xlu0 %4280
    %v4282 = vlaneseq
    %v4283 = vshrl.u32 %v4282, 7
    %v4284 = vsub.s32 4, %v4283
    %v4285 = vrot.slane %v3963, %v4284
    %4287 = vbcast.lane.b32.xlu0 %v4285, 256
    %v4288 = vpop.permute.xlu0 %4287
    %v4289 = vlaneseq
    %v4290 = vshrl.u32 %v4289, 7
    %v4291 = vsub.s32 5, %v4290
    %v4292 = vrot.slane %v3963, %v4291
    %4294 = vbcast.lane.b32.xlu0 %v4292, 256
    %v4295 = vpop.permute.xlu0 %4294
    %v4296 = vlaneseq
    %v4297 = vshrl.u32 %v4296, 7
    %v4298 = vsub.s32 6, %v4297
    %v4299 = vrot.slane %v3963, %v4298
    %4301 = vbcast.lane.b32.xlu0 %v4299, 256
    %v4302 = vpop.permute.xlu0 %4301
    %v4303 = vlaneseq
    %v4304 = vshrl.u32 %v4303, 7
    %v4305 = vsub.s32 7, %v4304
    %v4306 = vrot.slane %v3963, %v4305
    %4308 = vbcast.lane.b32.xlu0 %v4306, 256
    %v4309 = vpop.permute.xlu0 %4308
    %v4310 = vlaneseq
    %v4311 = vshrl.u32 %v4310, 7
    %v4312 = vsub.s32 0, %v4311
    %v4313 = vrot.slane %v3964, %v4312
    %4315 = vbcast.lane.b32.xlu0 %v4313, 256
    %v4316 = vpop.permute.xlu0 %4315
    %v4317 = vlaneseq
    %v4318 = vshrl.u32 %v4317, 7
    %v4319 = vsub.s32 1, %v4318
    %v4320 = vrot.slane %v3964, %v4319
    %4322 = vbcast.lane.b32.xlu0 %v4320, 256
    %v4323 = vpop.permute.xlu0 %4322
    %v4324 = vlaneseq
    %v4325 = vshrl.u32 %v4324, 7
    %v4326 = vsub.s32 2, %v4325
    %v4327 = vrot.slane %v3964, %v4326
    %4329 = vbcast.lane.b32.xlu0 %v4327, 256
    %v4330 = vpop.permute.xlu0 %4329
    %v4331 = vlaneseq
    %v4332 = vshrl.u32 %v4331, 7
    %v4333 = vsub.s32 3, %v4332
    %v4334 = vrot.slane %v3964, %v4333
    %4336 = vbcast.lane.b32.xlu0 %v4334, 256
    %v4337 = vpop.permute.xlu0 %4336
    %v4338 = vlaneseq
    %v4339 = vshrl.u32 %v4338, 7
    %v4340 = vsub.s32 4, %v4339
    %v4341 = vrot.slane %v3964, %v4340
    %4343 = vbcast.lane.b32.xlu0 %v4341, 256
    %v4344 = vpop.permute.xlu0 %4343
    %v4345 = vlaneseq
    %v4346 = vshrl.u32 %v4345, 7
    %v4347 = vsub.s32 5, %v4346
    %v4348 = vrot.slane %v3964, %v4347
    %4350 = vbcast.lane.b32.xlu0 %v4348, 256
    %v4351 = vpop.permute.xlu0 %4350
    %v4352 = vlaneseq
    %v4353 = vshrl.u32 %v4352, 7
    %v4354 = vsub.s32 6, %v4353
    %v4355 = vrot.slane %v3964, %v4354
    %4357 = vbcast.lane.b32.xlu0 %v4355, 256
    %v4358 = vpop.permute.xlu0 %4357
    %v4359 = vlaneseq
    %v4360 = vshrl.u32 %v4359, 7
    %v4361 = vsub.s32 7, %v4360
    %v4362 = vrot.slane %v3964, %v4361
    %4364 = vbcast.lane.b32.xlu0 %v4362, 256
    %v4365 = vpop.permute.xlu0 %4364
    %v4366 = vlaneseq
    %v4367 = vshrl.u32 %v4366, 7
    %v4368 = vsub.s32 0, %v4367
    %v4369 = vrot.slane %v3965, %v4368
    %4371 = vbcast.lane.b32.xlu0 %v4369, 256
    %v4372 = vpop.permute.xlu0 %4371
    %v4373 = vlaneseq
    %v4374 = vshrl.u32 %v4373, 7
    %v4375 = vsub.s32 1, %v4374
    %v4376 = vrot.slane %v3965, %v4375
    %4378 = vbcast.lane.b32.xlu0 %v4376, 256
    %v4379 = vpop.permute.xlu0 %4378
    %v4380 = vlaneseq
    %v4381 = vshrl.u32 %v4380, 7
    %v4382 = vsub.s32 2, %v4381
    %v4383 = vrot.slane %v3965, %v4382
    %4385 = vbcast.lane.b32.xlu0 %v4383, 256
    %v4386 = vpop.permute.xlu0 %4385
    %v4387 = vlaneseq
    %v4388 = vshrl.u32 %v4387, 7
    %v4389 = vsub.s32 3, %v4388
    %v4390 = vrot.slane %v3965, %v4389
    %4392 = vbcast.lane.b32.xlu0 %v4390, 256
    %v4393 = vpop.permute.xlu0 %4392
    %v4394 = vlaneseq
    %v4395 = vshrl.u32 %v4394, 7
    %v4396 = vsub.s32 4, %v4395
    %v4397 = vrot.slane %v3965, %v4396
    %4399 = vbcast.lane.b32.xlu0 %v4397, 256
    %v4400 = vpop.permute.xlu0 %4399
    %v4401 = vlaneseq
    %v4402 = vshrl.u32 %v4401, 7
    %v4403 = vsub.s32 5, %v4402
    %v4404 = vrot.slane %v3965, %v4403
    %4406 = vbcast.lane.b32.xlu0 %v4404, 256
    %v4407 = vpop.permute.xlu0 %4406
    %v4408 = vlaneseq
    %v4409 = vshrl.u32 %v4408, 7
    %v4410 = vsub.s32 6, %v4409
    %v4411 = vrot.slane %v3965, %v4410
    %4413 = vbcast.lane.b32.xlu0 %v4411, 256
    %v4414 = vpop.permute.xlu0 %4413
    %v4415 = vlaneseq
    %v4416 = vshrl.u32 %v4415, 7
    %v4417 = vsub.s32 7, %v4416
    %v4418 = vrot.slane %v3965, %v4417
    %4420 = vbcast.lane.b32.xlu0 %v4418, 256
    %v4421 = vpop.permute.xlu0 %4420
    %v4422 = vlaneseq
    %v4423 = vshrl.u32 %v4422, 7
    %v4424 = vsub.s32 0, %v4423
    %v4425 = vrot.slane %v3966, %v4424
    %4427 = vbcast.lane.b32.xlu0 %v4425, 256
    %v4428 = vpop.permute.xlu0 %4427
    %v4429 = vlaneseq
    %v4430 = vshrl.u32 %v4429, 7
    %v4431 = vsub.s32 1, %v4430
    %v4432 = vrot.slane %v3966, %v4431
    %4434 = vbcast.lane.b32.xlu0 %v4432, 256
    %v4435 = vpop.permute.xlu0 %4434
    %v4436 = vlaneseq
    %v4437 = vshrl.u32 %v4436, 7
    %v4438 = vsub.s32 2, %v4437
    %v4439 = vrot.slane %v3966, %v4438
    %4441 = vbcast.lane.b32.xlu0 %v4439, 256
    %v4442 = vpop.permute.xlu0 %4441
    %v4443 = vlaneseq
    %v4444 = vshrl.u32 %v4443, 7
    %v4445 = vsub.s32 3, %v4444
    %v4446 = vrot.slane %v3966, %v4445
    %4448 = vbcast.lane.b32.xlu0 %v4446, 256
    %v4449 = vpop.permute.xlu0 %4448
    %v4450 = vlaneseq
    %v4451 = vshrl.u32 %v4450, 7
    %v4452 = vsub.s32 4, %v4451
    %v4453 = vrot.slane %v3966, %v4452
    %4455 = vbcast.lane.b32.xlu0 %v4453, 256
    %v4456 = vpop.permute.xlu0 %4455
    %v4457 = vlaneseq
    %v4458 = vshrl.u32 %v4457, 7
    %v4459 = vsub.s32 5, %v4458
    %v4460 = vrot.slane %v3966, %v4459
    %4462 = vbcast.lane.b32.xlu0 %v4460, 256
    %v4463 = vpop.permute.xlu0 %4462
    %v4464 = vlaneseq
    %v4465 = vshrl.u32 %v4464, 7
    %v4466 = vsub.s32 6, %v4465
    %v4467 = vrot.slane %v3966, %v4466
    %4469 = vbcast.lane.b32.xlu0 %v4467, 256
    %v4470 = vpop.permute.xlu0 %4469
    %v4471 = vlaneseq
    %v4472 = vshrl.u32 %v4471, 7
    %v4473 = vsub.s32 7, %v4472
    %v4474 = vrot.slane %v3966, %v4473
    %4476 = vbcast.lane.b32.xlu0 %v4474, 256
    %v4477 = vpop.permute.xlu0 %4476
    %v4478 = vlaneseq
    %v4479 = vshrl.u32 %v4478, 7
    %v4480 = vsub.s32 0, %v4479
    %v4481 = vrot.slane %v3967, %v4480
    %4483 = vbcast.lane.b32.xlu0 %v4481, 256
    %v4484 = vpop.permute.xlu0 %4483
    %v4485 = vlaneseq
    %v4486 = vshrl.u32 %v4485, 7
    %v4487 = vsub.s32 1, %v4486
    %v4488 = vrot.slane %v3967, %v4487
    %4490 = vbcast.lane.b32.xlu0 %v4488, 256
    %v4491 = vpop.permute.xlu0 %4490
    %v4492 = vlaneseq
    %v4493 = vshrl.u32 %v4492, 7
    %v4494 = vsub.s32 2, %v4493
    %v4495 = vrot.slane %v3967, %v4494
    %4497 = vbcast.lane.b32.xlu0 %v4495, 256
    %v4498 = vpop.permute.xlu0 %4497
    %v4499 = vlaneseq
    %v4500 = vshrl.u32 %v4499, 7
    %v4501 = vsub.s32 3, %v4500
    %v4502 = vrot.slane %v3967, %v4501
    %4504 = vbcast.lane.b32.xlu0 %v4502, 256
    %v4505 = vpop.permute.xlu0 %4504
    %v4506 = vlaneseq
    %v4507 = vshrl.u32 %v4506, 7
    %v4508 = vsub.s32 4, %v4507
    %v4509 = vrot.slane %v3967, %v4508
    %4511 = vbcast.lane.b32.xlu0 %v4509, 256
    %v4512 = vpop.permute.xlu0 %4511
    %v4513 = vlaneseq
    %v4514 = vshrl.u32 %v4513, 7
    %v4515 = vsub.s32 5, %v4514
    %v4516 = vrot.slane %v3967, %v4515
    %4518 = vbcast.lane.b32.xlu0 %v4516, 256
    %v4519 = vpop.permute.xlu0 %4518
    %v4520 = vlaneseq
    %v4521 = vshrl.u32 %v4520, 7
    %v4522 = vsub.s32 6, %v4521
    %v4523 = vrot.slane %v3967, %v4522
    %4525 = vbcast.lane.b32.xlu0 %v4523, 256
    %v4526 = vpop.permute.xlu0 %4525
    %v4527 = vlaneseq
    %v4528 = vshrl.u32 %v4527, 7
    %v4529 = vsub.s32 7, %v4528
    %v4530 = vrot.slane %v3967, %v4529
    %4532 = vbcast.lane.b32.xlu0 %v4530, 256
    %v4533 = vpop.permute.xlu0 %4532
    %v4534 = vlaneseq
    %v4535 = vshrl.u32 %v4534, 7
    %v4536 = vsub.s32 0, %v4535
    %v4537 = vrot.slane %v3968, %v4536
    %4539 = vbcast.lane.b32.xlu0 %v4537, 256
    %v4540 = vpop.permute.xlu0 %4539
    %v4541 = vlaneseq
    %v4542 = vshrl.u32 %v4541, 7
    %v4543 = vsub.s32 1, %v4542
    %v4544 = vrot.slane %v3968, %v4543
    %4546 = vbcast.lane.b32.xlu0 %v4544, 256
    %v4547 = vpop.permute.xlu0 %4546
    %v4548 = vlaneseq
    %v4549 = vshrl.u32 %v4548, 7
    %v4550 = vsub.s32 2, %v4549
    %v4551 = vrot.slane %v3968, %v4550
    %4553 = vbcast.lane.b32.xlu0 %v4551, 256
    %v4554 = vpop.permute.xlu0 %4553
    %v4555 = vlaneseq
    %v4556 = vshrl.u32 %v4555, 7
    %v4557 = vsub.s32 3, %v4556
    %v4558 = vrot.slane %v3968, %v4557
    %4560 = vbcast.lane.b32.xlu0 %v4558, 256
    %v4561 = vpop.permute.xlu0 %4560
    %v4562 = vlaneseq
    %v4563 = vshrl.u32 %v4562, 7
    %v4564 = vsub.s32 4, %v4563
    %v4565 = vrot.slane %v3968, %v4564
    %4567 = vbcast.lane.b32.xlu0 %v4565, 256
    %v4568 = vpop.permute.xlu0 %4567
    %v4569 = vlaneseq
    %v4570 = vshrl.u32 %v4569, 7
    %v4571 = vsub.s32 5, %v4570
    %v4572 = vrot.slane %v3968, %v4571
    %4574 = vbcast.lane.b32.xlu0 %v4572, 256
    %v4575 = vpop.permute.xlu0 %4574
    %v4576 = vlaneseq
    %v4577 = vshrl.u32 %v4576, 7
    %v4578 = vsub.s32 6, %v4577
    %v4579 = vrot.slane %v3968, %v4578
    %4581 = vbcast.lane.b32.xlu0 %v4579, 256
    %v4582 = vpop.permute.xlu0 %4581
    %v4583 = vlaneseq
    %v4584 = vshrl.u32 %v4583, 7
    %v4585 = vsub.s32 7, %v4584
    %v4586 = vrot.slane %v3968, %v4585
    %4588 = vbcast.lane.b32.xlu0 %v4586, 256
    %v4589 = vpop.permute.xlu0 %4588
    %v4590 = vlaneseq
    %v4591 = vshrl.u32 %v4590, 7
    %v4592 = vsub.s32 0, %v4591
    %v4593 = vrot.slane %v3969, %v4592
    %4595 = vbcast.lane.b32.xlu0 %v4593, 256
    %v4596 = vpop.permute.xlu0 %4595
    %v4597 = vlaneseq
    %v4598 = vshrl.u32 %v4597, 7
    %v4599 = vsub.s32 1, %v4598
    %v4600 = vrot.slane %v3969, %v4599
    %4602 = vbcast.lane.b32.xlu0 %v4600, 256
    %v4603 = vpop.permute.xlu0 %4602
    %v4604 = vlaneseq
    %v4605 = vshrl.u32 %v4604, 7
    %v4606 = vsub.s32 2, %v4605
    %v4607 = vrot.slane %v3969, %v4606
    %4609 = vbcast.lane.b32.xlu0 %v4607, 256
    %v4610 = vpop.permute.xlu0 %4609
    %v4611 = vlaneseq
    %v4612 = vshrl.u32 %v4611, 7
    %v4613 = vsub.s32 3, %v4612
    %v4614 = vrot.slane %v3969, %v4613
    %4616 = vbcast.lane.b32.xlu0 %v4614, 256
    %v4617 = vpop.permute.xlu0 %4616
    %v4618 = vlaneseq
    %v4619 = vshrl.u32 %v4618, 7
    %v4620 = vsub.s32 4, %v4619
    %v4621 = vrot.slane %v3969, %v4620
    %4623 = vbcast.lane.b32.xlu0 %v4621, 256
    %v4624 = vpop.permute.xlu0 %4623
    %v4625 = vlaneseq
    %v4626 = vshrl.u32 %v4625, 7
    %v4627 = vsub.s32 5, %v4626
    %v4628 = vrot.slane %v3969, %v4627
    %4630 = vbcast.lane.b32.xlu0 %v4628, 256
    %v4631 = vpop.permute.xlu0 %4630
    %v4632 = vlaneseq
    %v4633 = vshrl.u32 %v4632, 7
    %v4634 = vsub.s32 6, %v4633
    %v4635 = vrot.slane %v3969, %v4634
    %4637 = vbcast.lane.b32.xlu0 %v4635, 256
    %v4638 = vpop.permute.xlu0 %4637
    %v4639 = vlaneseq
    %v4640 = vshrl.u32 %v4639, 7
    %v4641 = vsub.s32 7, %v4640
    %v4642 = vrot.slane %v3969, %v4641
    %4644 = vbcast.lane.b32.xlu0 %v4642, 256
    %v4645 = vpop.permute.xlu0 %4644
    %v4646 = vlaneseq
    %v4647 = vshrl.u32 %v4646, 7
    %v4648 = vsub.s32 0, %v4647
    %v4649 = vrot.slane %v3970, %v4648
    %4651 = vbcast.lane.b32.xlu0 %v4649, 256
    %v4652 = vpop.permute.xlu0 %4651
    %v4653 = vlaneseq
    %v4654 = vshrl.u32 %v4653, 7
    %v4655 = vsub.s32 1, %v4654
    %v4656 = vrot.slane %v3970, %v4655
    %4658 = vbcast.lane.b32.xlu0 %v4656, 256
    %v4659 = vpop.permute.xlu0 %4658
    %v4660 = vlaneseq
    %v4661 = vshrl.u32 %v4660, 7
    %v4662 = vsub.s32 2, %v4661
    %v4663 = vrot.slane %v3970, %v4662
    %4665 = vbcast.lane.b32.xlu0 %v4663, 256
    %v4666 = vpop.permute.xlu0 %4665
    %v4667 = vlaneseq
    %v4668 = vshrl.u32 %v4667, 7
    %v4669 = vsub.s32 3, %v4668
    %v4670 = vrot.slane %v3970, %v4669
    %4672 = vbcast.lane.b32.xlu0 %v4670, 256
    %v4673 = vpop.permute.xlu0 %4672
    %v4674 = vlaneseq
    %v4675 = vshrl.u32 %v4674, 7
    %v4676 = vsub.s32 4, %v4675
    %v4677 = vrot.slane %v3970, %v4676
    %4679 = vbcast.lane.b32.xlu0 %v4677, 256
    %v4680 = vpop.permute.xlu0 %4679
    %v4681 = vlaneseq
    %v4682 = vshrl.u32 %v4681, 7
    %v4683 = vsub.s32 5, %v4682
    %v4684 = vrot.slane %v3970, %v4683
    %4686 = vbcast.lane.b32.xlu0 %v4684, 256
    %v4687 = vpop.permute.xlu0 %4686
    %v4688 = vlaneseq
    %v4689 = vshrl.u32 %v4688, 7
    %v4690 = vsub.s32 6, %v4689
    %v4691 = vrot.slane %v3970, %v4690
    %4693 = vbcast.lane.b32.xlu0 %v4691, 256
    %v4694 = vpop.permute.xlu0 %4693
    %v4695 = vlaneseq
    %v4696 = vshrl.u32 %v4695, 7
    %v4697 = vsub.s32 7, %v4696
    %v4698 = vrot.slane %v3970, %v4697
    %4700 = vbcast.lane.b32.xlu0 %v4698, 256
    %v4701 = vpop.permute.xlu0 %4700
    %v4702 = vlaneseq
    %v4703 = vshrl.u32 %v4702, 7
    %v4704 = vsub.s32 0, %v4703
    %v4705 = vrot.slane %v3971, %v4704
    %4707 = vbcast.lane.b32.xlu0 %v4705, 256
    %v4708 = vpop.permute.xlu0 %4707
    %v4709 = vlaneseq
    %v4710 = vshrl.u32 %v4709, 7
    %v4711 = vsub.s32 1, %v4710
    %v4712 = vrot.slane %v3971, %v4711
    %4714 = vbcast.lane.b32.xlu0 %v4712, 256
    %v4715 = vpop.permute.xlu0 %4714
    %v4716 = vlaneseq
    %v4717 = vshrl.u32 %v4716, 7
    %v4718 = vsub.s32 2, %v4717
    %v4719 = vrot.slane %v3971, %v4718
    %4721 = vbcast.lane.b32.xlu0 %v4719, 256
    %v4722 = vpop.permute.xlu0 %4721
    %v4723 = vlaneseq
    %v4724 = vshrl.u32 %v4723, 7
    %v4725 = vsub.s32 3, %v4724
    %v4726 = vrot.slane %v3971, %v4725
    %4728 = vbcast.lane.b32.xlu0 %v4726, 256
    %v4729 = vpop.permute.xlu0 %4728
    %v4730 = vlaneseq
    %v4731 = vshrl.u32 %v4730, 7
    %v4732 = vsub.s32 4, %v4731
    %v4733 = vrot.slane %v3971, %v4732
    %4735 = vbcast.lane.b32.xlu0 %v4733, 256
    %v4736 = vpop.permute.xlu0 %4735
    %v4737 = vlaneseq
    %v4738 = vshrl.u32 %v4737, 7
    %v4739 = vsub.s32 5, %v4738
    %v4740 = vrot.slane %v3971, %v4739
    %4742 = vbcast.lane.b32.xlu0 %v4740, 256
    %v4743 = vpop.permute.xlu0 %4742
    %v4744 = vlaneseq
    %v4745 = vshrl.u32 %v4744, 7
    %v4746 = vsub.s32 6, %v4745
    %v4747 = vrot.slane %v3971, %v4746
    %4749 = vbcast.lane.b32.xlu0 %v4747, 256
    %v4750 = vpop.permute.xlu0 %4749
    %v4751 = vlaneseq
    %v4752 = vshrl.u32 %v4751, 7
    %v4753 = vsub.s32 7, %v4752
    %v4754 = vrot.slane %v3971, %v4753
    %4756 = vbcast.lane.b32.xlu0 %v4754, 256
    %v4757 = vpop.permute.xlu0 %4756
    %v4758 = vlaneseq
    %v4759 = vshrl.u32 %v4758, 7
    %v4760 = vsub.s32 0, %v4759
    %v4761 = vrot.slane %v3972, %v4760
    %4763 = vbcast.lane.b32.xlu0 %v4761, 256
    %v4764 = vpop.permute.xlu0 %4763
    %v4765 = vlaneseq
    %v4766 = vshrl.u32 %v4765, 7
    %v4767 = vsub.s32 1, %v4766
    %v4768 = vrot.slane %v3972, %v4767
    %4770 = vbcast.lane.b32.xlu0 %v4768, 256
    %v4771 = vpop.permute.xlu0 %4770
    %v4772 = vlaneseq
    %v4773 = vshrl.u32 %v4772, 7
    %v4774 = vsub.s32 2, %v4773
    %v4775 = vrot.slane %v3972, %v4774
    %4777 = vbcast.lane.b32.xlu0 %v4775, 256
    %v4778 = vpop.permute.xlu0 %4777
    %v4779 = vlaneseq
    %v4780 = vshrl.u32 %v4779, 7
    %v4781 = vsub.s32 3, %v4780
    %v4782 = vrot.slane %v3972, %v4781
    %4784 = vbcast.lane.b32.xlu0 %v4782, 256
    %v4785 = vpop.permute.xlu0 %4784
    %v4786 = vlaneseq
    %v4787 = vshrl.u32 %v4786, 7
    %v4788 = vsub.s32 4, %v4787
    %v4789 = vrot.slane %v3972, %v4788
    %4791 = vbcast.lane.b32.xlu0 %v4789, 256
    %v4792 = vpop.permute.xlu0 %4791
    %v4793 = vlaneseq
    %v4794 = vshrl.u32 %v4793, 7
    %v4795 = vsub.s32 5, %v4794
    %v4796 = vrot.slane %v3972, %v4795
    %4798 = vbcast.lane.b32.xlu0 %v4796, 256
    %v4799 = vpop.permute.xlu0 %4798
    %v4800 = vlaneseq
    %v4801 = vshrl.u32 %v4800, 7
    %v4802 = vsub.s32 6, %v4801
    %v4803 = vrot.slane %v3972, %v4802
    %4805 = vbcast.lane.b32.xlu0 %v4803, 256
    %v4806 = vpop.permute.xlu0 %4805
    %v4807 = vlaneseq
    %v4808 = vshrl.u32 %v4807, 7
    %v4809 = vsub.s32 7, %v4808
    %v4810 = vrot.slane %v3972, %v4809
    %4812 = vbcast.lane.b32.xlu0 %v4810, 256
    %v4813 = vpop.permute.xlu0 %4812
    %v4814 = vlaneseq
    %v4815 = vshrl.u32 %v4814, 7
    %v4816 = vsub.s32 0, %v4815
    %v4817 = vrot.slane %v3973, %v4816
    %4819 = vbcast.lane.b32.xlu0 %v4817, 256
    %v4820 = vpop.permute.xlu0 %4819
    %v4821 = vlaneseq
    %v4822 = vshrl.u32 %v4821, 7
    %v4823 = vsub.s32 1, %v4822
    %v4824 = vrot.slane %v3973, %v4823
    %4826 = vbcast.lane.b32.xlu0 %v4824, 256
    %v4827 = vpop.permute.xlu0 %4826
    %v4828 = vlaneseq
    %v4829 = vshrl.u32 %v4828, 7
    %v4830 = vsub.s32 2, %v4829
    %v4831 = vrot.slane %v3973, %v4830
    %4833 = vbcast.lane.b32.xlu0 %v4831, 256
    %v4834 = vpop.permute.xlu0 %4833
    %v4835 = vlaneseq
    %v4836 = vshrl.u32 %v4835, 7
    %v4837 = vsub.s32 3, %v4836
    %v4838 = vrot.slane %v3973, %v4837
    %4840 = vbcast.lane.b32.xlu0 %v4838, 256
    %v4841 = vpop.permute.xlu0 %4840
    %v4842 = vlaneseq
    %v4843 = vshrl.u32 %v4842, 7
    %v4844 = vsub.s32 4, %v4843
    %v4845 = vrot.slane %v3973, %v4844
    %4847 = vbcast.lane.b32.xlu0 %v4845, 256
    %v4848 = vpop.permute.xlu0 %4847
    %v4849 = vlaneseq
    %v4850 = vshrl.u32 %v4849, 7
    %v4851 = vsub.s32 5, %v4850
    %v4852 = vrot.slane %v3973, %v4851
    %4854 = vbcast.lane.b32.xlu0 %v4852, 256
    %v4855 = vpop.permute.xlu0 %4854
    %v4856 = vlaneseq
    %v4857 = vshrl.u32 %v4856, 7
    %v4858 = vsub.s32 6, %v4857
    %v4859 = vrot.slane %v3973, %v4858
    %4861 = vbcast.lane.b32.xlu0 %v4859, 256
    %v4862 = vpop.permute.xlu0 %4861
    %v4863 = vlaneseq
    %v4864 = vshrl.u32 %v4863, 7
    %v4865 = vsub.s32 7, %v4864
    %v4866 = vrot.slane %v3973, %v4865
    %4868 = vbcast.lane.b32.xlu0 %v4866, 256
    %v4869 = vpop.permute.xlu0 %4868
    %v4870 = vmul.f32 %v3980, %v27
    %v4871 = vmul.f32 %v3987, %v28
    %v4872 = vmul.f32 %v3994, %v29
    %v4873 = vmul.f32 %v4001, %v30
    %v4874 = vmul.f32 %v4008, %v31
    %v4875 = vmul.f32 %v4015, %v32
    %v4876 = vmul.f32 %v4022, %v33
    %v4877 = vmul.f32 %v4029, %v34
    %v4878 = vmul.f32 %v4036, %v35
    %v4879 = vmul.f32 %v4043, %v36
    %v4880 = vmul.f32 %v4050, %v37
    %v4881 = vmul.f32 %v4057, %v38
    %v4882 = vmul.f32 %v4064, %v39
    %v4883 = vmul.f32 %v4071, %v40
    %v4884 = vmul.f32 %v4078, %v41
    %v4885 = vmul.f32 %v4085, %v42
    %v4886 = vmul.f32 %v4092, %v43
    %v4887 = vmul.f32 %v4099, %v44
    %v4888 = vmul.f32 %v4106, %v45
    %v4889 = vmul.f32 %v4113, %v46
    %v4890 = vmul.f32 %v4120, %v47
    %v4891 = vmul.f32 %v4127, %v48
    %v4892 = vmul.f32 %v4134, %v49
    %v4893 = vmul.f32 %v4141, %v50
    %v4894 = vmul.f32 %v4148, %v51
    %v4895 = vmul.f32 %v4155, %v52
    %v4896 = vmul.f32 %v4162, %v53
    %v4897 = vmul.f32 %v4169, %v54
    %v4898 = vmul.f32 %v4176, %v55
    %v4899 = vmul.f32 %v4183, %v56
    %v4900 = vmul.f32 %v4190, %v57
    %v4901 = vmul.f32 %v4197, %v58
    %v4902 = vmul.f32 %v4204, %v59
    %v4903 = vmul.f32 %v4211, %v60
    %v4904 = vmul.f32 %v4218, %v61
    %v4905 = vmul.f32 %v4225, %v62
    %v4906 = vmul.f32 %v4232, %v63
    %v4907 = vmul.f32 %v4239, %v64
    %v4908 = vmul.f32 %v4246, %v65
    %v4909 = vmul.f32 %v4253, %v66
    %v4910 = vmul.f32 %v4260, %v67
    %v4911 = vmul.f32 %v4267, %v68
    %v4912 = vmul.f32 %v4274, %v69
    %v4913 = vmul.f32 %v4281, %v70
    %v4914 = vmul.f32 %v4288, %v71
    %v4915 = vmul.f32 %v4295, %v72
    %v4916 = vmul.f32 %v4302, %v73
    %v4917 = vmul.f32 %v4309, %v74
    %v4918 = vmul.f32 %v4316, %v75
    %v4919 = vmul.f32 %v4323, %v76
    %v4920 = vmul.f32 %v4330, %v77
    %v4921 = vmul.f32 %v4337, %v78
    %v4922 = vmul.f32 %v4344, %v79
    %v4923 = vmul.f32 %v4351, %v80
    %v4924 = vmul.f32 %v4358, %v81
    %v4925 = vmul.f32 %v4365, %v82
    %v4926 = vmul.f32 %v4372, %v83
    %v4927 = vmul.f32 %v4379, %v84
    %v4928 = vmul.f32 %v4386, %v85
    %v4929 = vmul.f32 %v4393, %v86
    %v4930 = vmul.f32 %v4400, %v87
    %v4931 = vmul.f32 %v4407, %v88
    %v4932 = vmul.f32 %v4414, %v89
    %v4933 = vmul.f32 %v4421, %v90
    %v4934 = vmul.f32 %v4428, %v91
    %v4935 = vmul.f32 %v4435, %v92
    %v4936 = vmul.f32 %v4442, %v93
    %v4937 = vmul.f32 %v4449, %v94
    %v4938 = vmul.f32 %v4456, %v95
    %v4939 = vmul.f32 %v4463, %v96
    %v4940 = vmul.f32 %v4470, %v97
    %v4941 = vmul.f32 %v4477, %v98
    %v4942 = vmul.f32 %v4484, %v99
    %v4943 = vmul.f32 %v4491, %v100
    %v4944 = vmul.f32 %v4498, %v101
    %v4945 = vmul.f32 %v4505, %v102
    %v4946 = vmul.f32 %v4512, %v103
    %v4947 = vmul.f32 %v4519, %v104
    %v4948 = vmul.f32 %v4526, %v105
    %v4949 = vmul.f32 %v4533, %v106
    %v4950 = vmul.f32 %v4540, %v107
    %v4951 = vmul.f32 %v4547, %v108
    %v4952 = vmul.f32 %v4554, %v109
    %v4953 = vmul.f32 %v4561, %v110
    %v4954 = vmul.f32 %v4568, %v111
    %v4955 = vmul.f32 %v4575, %v112
    %v4956 = vmul.f32 %v4582, %v113
    %v4957 = vmul.f32 %v4589, %v114
    %v4958 = vmul.f32 %v4596, %v115
    %v4959 = vmul.f32 %v4603, %v116
    %v4960 = vmul.f32 %v4610, %v117
    %v4961 = vmul.f32 %v4617, %v118
    %v4962 = vmul.f32 %v4624, %v119
    %v4963 = vmul.f32 %v4631, %v120
    %v4964 = vmul.f32 %v4638, %v121
    %v4965 = vmul.f32 %v4645, %v122
    %v4966 = vmul.f32 %v4652, %v123
    %v4967 = vmul.f32 %v4659, %v124
    %v4968 = vmul.f32 %v4666, %v125
    %v4969 = vmul.f32 %v4673, %v126
    %v4970 = vmul.f32 %v4680, %v127
    %v4971 = vmul.f32 %v4687, %v128
    %v4972 = vmul.f32 %v4694, %v129
    %v4973 = vmul.f32 %v4701, %v130
    %v4974 = vmul.f32 %v4708, %v131
    %v4975 = vmul.f32 %v4715, %v132
    %v4976 = vmul.f32 %v4722, %v133
    %v4977 = vmul.f32 %v4729, %v134
    %v4978 = vmul.f32 %v4736, %v135
    %v4979 = vmul.f32 %v4743, %v136
    %v4980 = vmul.f32 %v4750, %v137
    %v4981 = vmul.f32 %v4757, %v138
    %v4982 = vmul.f32 %v4764, %v139
    %v4983 = vmul.f32 %v4771, %v140
    %v4984 = vmul.f32 %v4778, %v141
    %v4985 = vmul.f32 %v4785, %v142
    %v4986 = vmul.f32 %v4792, %v143
    %v4987 = vmul.f32 %v4799, %v144
    %v4988 = vmul.f32 %v4806, %v145
    %v4989 = vmul.f32 %v4813, %v146
    %v4990 = vmul.f32 %v4820, %v147
    %v4991 = vmul.f32 %v4827, %v148
    %v4992 = vmul.f32 %v4834, %v149
    %v4993 = vmul.f32 %v4841, %v150
    %v4994 = vmul.f32 %v4848, %v151
    %v4995 = vmul.f32 %v4855, %v152
    %v4996 = vmul.f32 %v4862, %v153
    %v4997 = vmul.f32 %v4869, %v154
    %v4998 = vsel %vm166, %v4870, 0.0
    %v4999 = vrot.slane %v4998, 4
    %v5000 = vadd.f32 %v4998, %v4999
    %v5001 = vrot.slane %v5000, 2
    %v5002 = vadd.f32 %v5000, %v5001
    %v5003 = vrot.slane %v5002, 1
    %v5004 = vadd.f32 %v5002, %v5003
    %v5005 = vsel %vm166, %v4871, 0.0
    %v5006 = vrot.slane %v5005, 4
    %v5007 = vadd.f32 %v5005, %v5006
    %v5008 = vrot.slane %v5007, 2
    %v5009 = vadd.f32 %v5007, %v5008
    %v5010 = vrot.slane %v5009, 1
    %v5011 = vadd.f32 %v5009, %v5010
    %v5012 = vsel %vm166, %v4872, 0.0
    %v5013 = vrot.slane %v5012, 4
    %v5014 = vadd.f32 %v5012, %v5013
    %v5015 = vrot.slane %v5014, 2
    %v5016 = vadd.f32 %v5014, %v5015
    %v5017 = vrot.slane %v5016, 1
    %v5018 = vadd.f32 %v5016, %v5017
    %v5019 = vsel %vm166, %v4873, 0.0
    %v5020 = vrot.slane %v5019, 4
    %v5021 = vadd.f32 %v5019, %v5020
    %v5022 = vrot.slane %v5021, 2
    %v5023 = vadd.f32 %v5021, %v5022
    %v5024 = vrot.slane %v5023, 1
    %v5025 = vadd.f32 %v5023, %v5024
    %v5026 = vsel %vm166, %v4874, 0.0
    %v5027 = vrot.slane %v5026, 4
    %v5028 = vadd.f32 %v5026, %v5027
    %v5029 = vrot.slane %v5028, 2
    %v5030 = vadd.f32 %v5028, %v5029
    %v5031 = vrot.slane %v5030, 1
    %v5032 = vadd.f32 %v5030, %v5031
    %v5033 = vsel %vm166, %v4875, 0.0
    %v5034 = vrot.slane %v5033, 4
    %v5035 = vadd.f32 %v5033, %v5034
    %v5036 = vrot.slane %v5035, 2
    %v5037 = vadd.f32 %v5035, %v5036
    %v5038 = vrot.slane %v5037, 1
    %v5039 = vadd.f32 %v5037, %v5038
    %v5040 = vsel %vm166, %v4876, 0.0
    %v5041 = vrot.slane %v5040, 4
    %v5042 = vadd.f32 %v5040, %v5041
    %v5043 = vrot.slane %v5042, 2
    %v5044 = vadd.f32 %v5042, %v5043
    %v5045 = vrot.slane %v5044, 1
    %v5046 = vadd.f32 %v5044, %v5045
    %v5047 = vsel %vm166, %v4877, 0.0
    %v5048 = vrot.slane %v5047, 4
    %v5049 = vadd.f32 %v5047, %v5048
    %v5050 = vrot.slane %v5049, 2
    %v5051 = vadd.f32 %v5049, %v5050
    %v5052 = vrot.slane %v5051, 1
    %v5053 = vadd.f32 %v5051, %v5052
    %v5054 = vsel %vm166, %v4878, 0.0
    %v5055 = vrot.slane %v5054, 4
    %v5056 = vadd.f32 %v5054, %v5055
    %v5057 = vrot.slane %v5056, 2
    %v5058 = vadd.f32 %v5056, %v5057
    %v5059 = vrot.slane %v5058, 1
    %v5060 = vadd.f32 %v5058, %v5059
    %v5061 = vsel %vm166, %v4879, 0.0
    %v5062 = vrot.slane %v5061, 4
    %v5063 = vadd.f32 %v5061, %v5062
    %v5064 = vrot.slane %v5063, 2
    %v5065 = vadd.f32 %v5063, %v5064
    %v5066 = vrot.slane %v5065, 1
    %v5067 = vadd.f32 %v5065, %v5066
    %v5068 = vsel %vm166, %v4880, 0.0
    %v5069 = vrot.slane %v5068, 4
    %v5070 = vadd.f32 %v5068, %v5069
    %v5071 = vrot.slane %v5070, 2
    %v5072 = vadd.f32 %v5070, %v5071
    %v5073 = vrot.slane %v5072, 1
    %v5074 = vadd.f32 %v5072, %v5073
    %v5075 = vsel %vm166, %v4881, 0.0
    %v5076 = vrot.slane %v5075, 4
    %v5077 = vadd.f32 %v5075, %v5076
    %v5078 = vrot.slane %v5077, 2
    %v5079 = vadd.f32 %v5077, %v5078
    %v5080 = vrot.slane %v5079, 1
    %v5081 = vadd.f32 %v5079, %v5080
    %v5082 = vsel %vm166, %v4882, 0.0
    %v5083 = vrot.slane %v5082, 4
    %v5084 = vadd.f32 %v5082, %v5083
    %v5085 = vrot.slane %v5084, 2
    %v5086 = vadd.f32 %v5084, %v5085
    %v5087 = vrot.slane %v5086, 1
    %v5088 = vadd.f32 %v5086, %v5087
    %v5089 = vsel %vm166, %v4883, 0.0
    %v5090 = vrot.slane %v5089, 4
    %v5091 = vadd.f32 %v5089, %v5090
    %v5092 = vrot.slane %v5091, 2
    %v5093 = vadd.f32 %v5091, %v5092
    %v5094 = vrot.slane %v5093, 1
    %v5095 = vadd.f32 %v5093, %v5094
    %v5096 = vsel %vm166, %v4884, 0.0
    %v5097 = vrot.slane %v5096, 4
    %v5098 = vadd.f32 %v5096, %v5097
    %v5099 = vrot.slane %v5098, 2
    %v5100 = vadd.f32 %v5098, %v5099
    %v5101 = vrot.slane %v5100, 1
    %v5102 = vadd.f32 %v5100, %v5101
    %v5103 = vsel %vm166, %v4885, 0.0
    %v5104 = vrot.slane %v5103, 4
    %v5105 = vadd.f32 %v5103, %v5104
    %v5106 = vrot.slane %v5105, 2
    %v5107 = vadd.f32 %v5105, %v5106
    %v5108 = vrot.slane %v5107, 1
    %v5109 = vadd.f32 %v5107, %v5108
    %v5110 = vsel %vm166, %v4886, 0.0
    %v5111 = vrot.slane %v5110, 4
    %v5112 = vadd.f32 %v5110, %v5111
    %v5113 = vrot.slane %v5112, 2
    %v5114 = vadd.f32 %v5112, %v5113
    %v5115 = vrot.slane %v5114, 1
    %v5116 = vadd.f32 %v5114, %v5115
    %v5117 = vsel %vm166, %v4887, 0.0
    %v5118 = vrot.slane %v5117, 4
    %v5119 = vadd.f32 %v5117, %v5118
    %v5120 = vrot.slane %v5119, 2
    %v5121 = vadd.f32 %v5119, %v5120
    %v5122 = vrot.slane %v5121, 1
    %v5123 = vadd.f32 %v5121, %v5122
    %v5124 = vsel %vm166, %v4888, 0.0
    %v5125 = vrot.slane %v5124, 4
    %v5126 = vadd.f32 %v5124, %v5125
    %v5127 = vrot.slane %v5126, 2
    %v5128 = vadd.f32 %v5126, %v5127
    %v5129 = vrot.slane %v5128, 1
    %v5130 = vadd.f32 %v5128, %v5129
    %v5131 = vsel %vm166, %v4889, 0.0
    %v5132 = vrot.slane %v5131, 4
    %v5133 = vadd.f32 %v5131, %v5132
    %v5134 = vrot.slane %v5133, 2
    %v5135 = vadd.f32 %v5133, %v5134
    %v5136 = vrot.slane %v5135, 1
    %v5137 = vadd.f32 %v5135, %v5136
    %v5138 = vsel %vm166, %v4890, 0.0
    %v5139 = vrot.slane %v5138, 4
    %v5140 = vadd.f32 %v5138, %v5139
    %v5141 = vrot.slane %v5140, 2
    %v5142 = vadd.f32 %v5140, %v5141
    %v5143 = vrot.slane %v5142, 1
    %v5144 = vadd.f32 %v5142, %v5143
    %v5145 = vsel %vm166, %v4891, 0.0
    %v5146 = vrot.slane %v5145, 4
    %v5147 = vadd.f32 %v5145, %v5146
    %v5148 = vrot.slane %v5147, 2
    %v5149 = vadd.f32 %v5147, %v5148
    %v5150 = vrot.slane %v5149, 1
    %v5151 = vadd.f32 %v5149, %v5150
    %v5152 = vsel %vm166, %v4892, 0.0
    %v5153 = vrot.slane %v5152, 4
    %v5154 = vadd.f32 %v5152, %v5153
    %v5155 = vrot.slane %v5154, 2
    %v5156 = vadd.f32 %v5154, %v5155
    %v5157 = vrot.slane %v5156, 1
    %v5158 = vadd.f32 %v5156, %v5157
    %v5159 = vsel %vm166, %v4893, 0.0
    %v5160 = vrot.slane %v5159, 4
    %v5161 = vadd.f32 %v5159, %v5160
    %v5162 = vrot.slane %v5161, 2
    %v5163 = vadd.f32 %v5161, %v5162
    %v5164 = vrot.slane %v5163, 1
    %v5165 = vadd.f32 %v5163, %v5164
    %v5166 = vsel %vm166, %v4894, 0.0
    %v5167 = vrot.slane %v5166, 4
    %v5168 = vadd.f32 %v5166, %v5167
    %v5169 = vrot.slane %v5168, 2
    %v5170 = vadd.f32 %v5168, %v5169
    %v5171 = vrot.slane %v5170, 1
    %v5172 = vadd.f32 %v5170, %v5171
    %v5173 = vsel %vm166, %v4895, 0.0
    %v5174 = vrot.slane %v5173, 4
    %v5175 = vadd.f32 %v5173, %v5174
    %v5176 = vrot.slane %v5175, 2
    %v5177 = vadd.f32 %v5175, %v5176
    %v5178 = vrot.slane %v5177, 1
    %v5179 = vadd.f32 %v5177, %v5178
    %v5180 = vsel %vm166, %v4896, 0.0
    %v5181 = vrot.slane %v5180, 4
    %v5182 = vadd.f32 %v5180, %v5181
    %v5183 = vrot.slane %v5182, 2
    %v5184 = vadd.f32 %v5182, %v5183
    %v5185 = vrot.slane %v5184, 1
    %v5186 = vadd.f32 %v5184, %v5185
    %v5187 = vsel %vm166, %v4897, 0.0
    %v5188 = vrot.slane %v5187, 4
    %v5189 = vadd.f32 %v5187, %v5188
    %v5190 = vrot.slane %v5189, 2
    %v5191 = vadd.f32 %v5189, %v5190
    %v5192 = vrot.slane %v5191, 1
    %v5193 = vadd.f32 %v5191, %v5192
    %v5194 = vsel %vm166, %v4898, 0.0
    %v5195 = vrot.slane %v5194, 4
    %v5196 = vadd.f32 %v5194, %v5195
    %v5197 = vrot.slane %v5196, 2
    %v5198 = vadd.f32 %v5196, %v5197
    %v5199 = vrot.slane %v5198, 1
    %v5200 = vadd.f32 %v5198, %v5199
    %v5201 = vsel %vm166, %v4899, 0.0
    %v5202 = vrot.slane %v5201, 4
    %v5203 = vadd.f32 %v5201, %v5202
    %v5204 = vrot.slane %v5203, 2
    %v5205 = vadd.f32 %v5203, %v5204
    %v5206 = vrot.slane %v5205, 1
    %v5207 = vadd.f32 %v5205, %v5206
    %v5208 = vsel %vm166, %v4900, 0.0
    %v5209 = vrot.slane %v5208, 4
    %v5210 = vadd.f32 %v5208, %v5209
    %v5211 = vrot.slane %v5210, 2
    %v5212 = vadd.f32 %v5210, %v5211
    %v5213 = vrot.slane %v5212, 1
    %v5214 = vadd.f32 %v5212, %v5213
    %v5215 = vsel %vm166, %v4901, 0.0
    %v5216 = vrot.slane %v5215, 4
    %v5217 = vadd.f32 %v5215, %v5216
    %v5218 = vrot.slane %v5217, 2
    %v5219 = vadd.f32 %v5217, %v5218
    %v5220 = vrot.slane %v5219, 1
    %v5221 = vadd.f32 %v5219, %v5220
    %v5222 = vsel %vm166, %v4902, 0.0
    %v5223 = vrot.slane %v5222, 4
    %v5224 = vadd.f32 %v5222, %v5223
    %v5225 = vrot.slane %v5224, 2
    %v5226 = vadd.f32 %v5224, %v5225
    %v5227 = vrot.slane %v5226, 1
    %v5228 = vadd.f32 %v5226, %v5227
    %v5229 = vsel %vm166, %v4903, 0.0
    %v5230 = vrot.slane %v5229, 4
    %v5231 = vadd.f32 %v5229, %v5230
    %v5232 = vrot.slane %v5231, 2
    %v5233 = vadd.f32 %v5231, %v5232
    %v5234 = vrot.slane %v5233, 1
    %v5235 = vadd.f32 %v5233, %v5234
    %v5236 = vsel %vm166, %v4904, 0.0
    %v5237 = vrot.slane %v5236, 4
    %v5238 = vadd.f32 %v5236, %v5237
    %v5239 = vrot.slane %v5238, 2
    %v5240 = vadd.f32 %v5238, %v5239
    %v5241 = vrot.slane %v5240, 1
    %v5242 = vadd.f32 %v5240, %v5241
    %v5243 = vsel %vm166, %v4905, 0.0
    %v5244 = vrot.slane %v5243, 4
    %v5245 = vadd.f32 %v5243, %v5244
    %v5246 = vrot.slane %v5245, 2
    %v5247 = vadd.f32 %v5245, %v5246
    %v5248 = vrot.slane %v5247, 1
    %v5249 = vadd.f32 %v5247, %v5248
    %v5250 = vsel %vm166, %v4906, 0.0
    %v5251 = vrot.slane %v5250, 4
    %v5252 = vadd.f32 %v5250, %v5251
    %v5253 = vrot.slane %v5252, 2
    %v5254 = vadd.f32 %v5252, %v5253
    %v5255 = vrot.slane %v5254, 1
    %v5256 = vadd.f32 %v5254, %v5255
    %v5257 = vsel %vm166, %v4907, 0.0
    %v5258 = vrot.slane %v5257, 4
    %v5259 = vadd.f32 %v5257, %v5258
    %v5260 = vrot.slane %v5259, 2
    %v5261 = vadd.f32 %v5259, %v5260
    %v5262 = vrot.slane %v5261, 1
    %v5263 = vadd.f32 %v5261, %v5262
    %v5264 = vsel %vm166, %v4908, 0.0
    %v5265 = vrot.slane %v5264, 4
    %v5266 = vadd.f32 %v5264, %v5265
    %v5267 = vrot.slane %v5266, 2
    %v5268 = vadd.f32 %v5266, %v5267
    %v5269 = vrot.slane %v5268, 1
    %v5270 = vadd.f32 %v5268, %v5269
    %v5271 = vsel %vm166, %v4909, 0.0
    %v5272 = vrot.slane %v5271, 4
    %v5273 = vadd.f32 %v5271, %v5272
    %v5274 = vrot.slane %v5273, 2
    %v5275 = vadd.f32 %v5273, %v5274
    %v5276 = vrot.slane %v5275, 1
    %v5277 = vadd.f32 %v5275, %v5276
    %v5278 = vsel %vm166, %v4910, 0.0
    %v5279 = vrot.slane %v5278, 4
    %v5280 = vadd.f32 %v5278, %v5279
    %v5281 = vrot.slane %v5280, 2
    %v5282 = vadd.f32 %v5280, %v5281
    %v5283 = vrot.slane %v5282, 1
    %v5284 = vadd.f32 %v5282, %v5283
    %v5285 = vsel %vm166, %v4911, 0.0
    %v5286 = vrot.slane %v5285, 4
    %v5287 = vadd.f32 %v5285, %v5286
    %v5288 = vrot.slane %v5287, 2
    %v5289 = vadd.f32 %v5287, %v5288
    %v5290 = vrot.slane %v5289, 1
    %v5291 = vadd.f32 %v5289, %v5290
    %v5292 = vsel %vm166, %v4912, 0.0
    %v5293 = vrot.slane %v5292, 4
    %v5294 = vadd.f32 %v5292, %v5293
    %v5295 = vrot.slane %v5294, 2
    %v5296 = vadd.f32 %v5294, %v5295
    %v5297 = vrot.slane %v5296, 1
    %v5298 = vadd.f32 %v5296, %v5297
    %v5299 = vsel %vm166, %v4913, 0.0
    %v5300 = vrot.slane %v5299, 4
    %v5301 = vadd.f32 %v5299, %v5300
    %v5302 = vrot.slane %v5301, 2
    %v5303 = vadd.f32 %v5301, %v5302
    %v5304 = vrot.slane %v5303, 1
    %v5305 = vadd.f32 %v5303, %v5304
    %v5306 = vsel %vm166, %v4914, 0.0
    %v5307 = vrot.slane %v5306, 4
    %v5308 = vadd.f32 %v5306, %v5307
    %v5309 = vrot.slane %v5308, 2
    %v5310 = vadd.f32 %v5308, %v5309
    %v5311 = vrot.slane %v5310, 1
    %v5312 = vadd.f32 %v5310, %v5311
    %v5313 = vsel %vm166, %v4915, 0.0
    %v5314 = vrot.slane %v5313, 4
    %v5315 = vadd.f32 %v5313, %v5314
    %v5316 = vrot.slane %v5315, 2
    %v5317 = vadd.f32 %v5315, %v5316
    %v5318 = vrot.slane %v5317, 1
    %v5319 = vadd.f32 %v5317, %v5318
    %v5320 = vsel %vm166, %v4916, 0.0
    %v5321 = vrot.slane %v5320, 4
    %v5322 = vadd.f32 %v5320, %v5321
    %v5323 = vrot.slane %v5322, 2
    %v5324 = vadd.f32 %v5322, %v5323
    %v5325 = vrot.slane %v5324, 1
    %v5326 = vadd.f32 %v5324, %v5325
    %v5327 = vsel %vm166, %v4917, 0.0
    %v5328 = vrot.slane %v5327, 4
    %v5329 = vadd.f32 %v5327, %v5328
    %v5330 = vrot.slane %v5329, 2
    %v5331 = vadd.f32 %v5329, %v5330
    %v5332 = vrot.slane %v5331, 1
    %v5333 = vadd.f32 %v5331, %v5332
    %v5334 = vsel %vm166, %v4918, 0.0
    %v5335 = vrot.slane %v5334, 4
    %v5336 = vadd.f32 %v5334, %v5335
    %v5337 = vrot.slane %v5336, 2
    %v5338 = vadd.f32 %v5336, %v5337
    %v5339 = vrot.slane %v5338, 1
    %v5340 = vadd.f32 %v5338, %v5339
    %v5341 = vsel %vm166, %v4919, 0.0
    %v5342 = vrot.slane %v5341, 4
    %v5343 = vadd.f32 %v5341, %v5342
    %v5344 = vrot.slane %v5343, 2
    %v5345 = vadd.f32 %v5343, %v5344
    %v5346 = vrot.slane %v5345, 1
    %v5347 = vadd.f32 %v5345, %v5346
    %v5348 = vsel %vm166, %v4920, 0.0
    %v5349 = vrot.slane %v5348, 4
    %v5350 = vadd.f32 %v5348, %v5349
    %v5351 = vrot.slane %v5350, 2
    %v5352 = vadd.f32 %v5350, %v5351
    %v5353 = vrot.slane %v5352, 1
    %v5354 = vadd.f32 %v5352, %v5353
    %v5355 = vsel %vm166, %v4921, 0.0
    %v5356 = vrot.slane %v5355, 4
    %v5357 = vadd.f32 %v5355, %v5356
    %v5358 = vrot.slane %v5357, 2
    %v5359 = vadd.f32 %v5357, %v5358
    %v5360 = vrot.slane %v5359, 1
    %v5361 = vadd.f32 %v5359, %v5360
    %v5362 = vsel %vm166, %v4922, 0.0
    %v5363 = vrot.slane %v5362, 4
    %v5364 = vadd.f32 %v5362, %v5363
    %v5365 = vrot.slane %v5364, 2
    %v5366 = vadd.f32 %v5364, %v5365
    %v5367 = vrot.slane %v5366, 1
    %v5368 = vadd.f32 %v5366, %v5367
    %v5369 = vsel %vm166, %v4923, 0.0
    %v5370 = vrot.slane %v5369, 4
    %v5371 = vadd.f32 %v5369, %v5370
    %v5372 = vrot.slane %v5371, 2
    %v5373 = vadd.f32 %v5371, %v5372
    %v5374 = vrot.slane %v5373, 1
    %v5375 = vadd.f32 %v5373, %v5374
    %v5376 = vsel %vm166, %v4924, 0.0
    %v5377 = vrot.slane %v5376, 4
    %v5378 = vadd.f32 %v5376, %v5377
    %v5379 = vrot.slane %v5378, 2
    %v5380 = vadd.f32 %v5378, %v5379
    %v5381 = vrot.slane %v5380, 1
    %v5382 = vadd.f32 %v5380, %v5381
    %v5383 = vsel %vm166, %v4925, 0.0
    %v5384 = vrot.slane %v5383, 4
    %v5385 = vadd.f32 %v5383, %v5384
    %v5386 = vrot.slane %v5385, 2
    %v5387 = vadd.f32 %v5385, %v5386
    %v5388 = vrot.slane %v5387, 1
    %v5389 = vadd.f32 %v5387, %v5388
    %v5390 = vsel %vm166, %v4926, 0.0
    %v5391 = vrot.slane %v5390, 4
    %v5392 = vadd.f32 %v5390, %v5391
    %v5393 = vrot.slane %v5392, 2
    %v5394 = vadd.f32 %v5392, %v5393
    %v5395 = vrot.slane %v5394, 1
    %v5396 = vadd.f32 %v5394, %v5395
    %v5397 = vsel %vm166, %v4927, 0.0
    %v5398 = vrot.slane %v5397, 4
    %v5399 = vadd.f32 %v5397, %v5398
    %v5400 = vrot.slane %v5399, 2
    %v5401 = vadd.f32 %v5399, %v5400
    %v5402 = vrot.slane %v5401, 1
    %v5403 = vadd.f32 %v5401, %v5402
    %v5404 = vsel %vm166, %v4928, 0.0
    %v5405 = vrot.slane %v5404, 4
    %v5406 = vadd.f32 %v5404, %v5405
    %v5407 = vrot.slane %v5406, 2
    %v5408 = vadd.f32 %v5406, %v5407
    %v5409 = vrot.slane %v5408, 1
    %v5410 = vadd.f32 %v5408, %v5409
    %v5411 = vsel %vm166, %v4929, 0.0
    %v5412 = vrot.slane %v5411, 4
    %v5413 = vadd.f32 %v5411, %v5412
    %v5414 = vrot.slane %v5413, 2
    %v5415 = vadd.f32 %v5413, %v5414
    %v5416 = vrot.slane %v5415, 1
    %v5417 = vadd.f32 %v5415, %v5416
    %v5418 = vsel %vm166, %v4930, 0.0
    %v5419 = vrot.slane %v5418, 4
    %v5420 = vadd.f32 %v5418, %v5419
    %v5421 = vrot.slane %v5420, 2
    %v5422 = vadd.f32 %v5420, %v5421
    %v5423 = vrot.slane %v5422, 1
    %v5424 = vadd.f32 %v5422, %v5423
    %v5425 = vsel %vm166, %v4931, 0.0
    %v5426 = vrot.slane %v5425, 4
    %v5427 = vadd.f32 %v5425, %v5426
    %v5428 = vrot.slane %v5427, 2
    %v5429 = vadd.f32 %v5427, %v5428
    %v5430 = vrot.slane %v5429, 1
    %v5431 = vadd.f32 %v5429, %v5430
    %v5432 = vsel %vm166, %v4932, 0.0
    %v5433 = vrot.slane %v5432, 4
    %v5434 = vadd.f32 %v5432, %v5433
    %v5435 = vrot.slane %v5434, 2
    %v5436 = vadd.f32 %v5434, %v5435
    %v5437 = vrot.slane %v5436, 1
    %v5438 = vadd.f32 %v5436, %v5437
    %v5439 = vsel %vm166, %v4933, 0.0
    %v5440 = vrot.slane %v5439, 4
    %v5441 = vadd.f32 %v5439, %v5440
    %v5442 = vrot.slane %v5441, 2
    %v5443 = vadd.f32 %v5441, %v5442
    %v5444 = vrot.slane %v5443, 1
    %v5445 = vadd.f32 %v5443, %v5444
    %v5446 = vsel %vm166, %v4934, 0.0
    %v5447 = vrot.slane %v5446, 4
    %v5448 = vadd.f32 %v5446, %v5447
    %v5449 = vrot.slane %v5448, 2
    %v5450 = vadd.f32 %v5448, %v5449
    %v5451 = vrot.slane %v5450, 1
    %v5452 = vadd.f32 %v5450, %v5451
    %v5453 = vsel %vm166, %v4935, 0.0
    %v5454 = vrot.slane %v5453, 4
    %v5455 = vadd.f32 %v5453, %v5454
    %v5456 = vrot.slane %v5455, 2
    %v5457 = vadd.f32 %v5455, %v5456
    %v5458 = vrot.slane %v5457, 1
    %v5459 = vadd.f32 %v5457, %v5458
    %v5460 = vsel %vm166, %v4936, 0.0
    %v5461 = vrot.slane %v5460, 4
    %v5462 = vadd.f32 %v5460, %v5461
    %v5463 = vrot.slane %v5462, 2
    %v5464 = vadd.f32 %v5462, %v5463
    %v5465 = vrot.slane %v5464, 1
    %v5466 = vadd.f32 %v5464, %v5465
    %v5467 = vsel %vm166, %v4937, 0.0
    %v5468 = vrot.slane %v5467, 4
    %v5469 = vadd.f32 %v5467, %v5468
    %v5470 = vrot.slane %v5469, 2
    %v5471 = vadd.f32 %v5469, %v5470
    %v5472 = vrot.slane %v5471, 1
    %v5473 = vadd.f32 %v5471, %v5472
    %v5474 = vsel %vm166, %v4938, 0.0
    %v5475 = vrot.slane %v5474, 4
    %v5476 = vadd.f32 %v5474, %v5475
    %v5477 = vrot.slane %v5476, 2
    %v5478 = vadd.f32 %v5476, %v5477
    %v5479 = vrot.slane %v5478, 1
    %v5480 = vadd.f32 %v5478, %v5479
    %v5481 = vsel %vm166, %v4939, 0.0
    %v5482 = vrot.slane %v5481, 4
    %v5483 = vadd.f32 %v5481, %v5482
    %v5484 = vrot.slane %v5483, 2
    %v5485 = vadd.f32 %v5483, %v5484
    %v5486 = vrot.slane %v5485, 1
    %v5487 = vadd.f32 %v5485, %v5486
    %v5488 = vsel %vm166, %v4940, 0.0
    %v5489 = vrot.slane %v5488, 4
    %v5490 = vadd.f32 %v5488, %v5489
    %v5491 = vrot.slane %v5490, 2
    %v5492 = vadd.f32 %v5490, %v5491
    %v5493 = vrot.slane %v5492, 1
    %v5494 = vadd.f32 %v5492, %v5493
    %v5495 = vsel %vm166, %v4941, 0.0
    %v5496 = vrot.slane %v5495, 4
    %v5497 = vadd.f32 %v5495, %v5496
    %v5498 = vrot.slane %v5497, 2
    %v5499 = vadd.f32 %v5497, %v5498
    %v5500 = vrot.slane %v5499, 1
    %v5501 = vadd.f32 %v5499, %v5500
    %v5502 = vsel %vm166, %v4942, 0.0
    %v5503 = vrot.slane %v5502, 4
    %v5504 = vadd.f32 %v5502, %v5503
    %v5505 = vrot.slane %v5504, 2
    %v5506 = vadd.f32 %v5504, %v5505
    %v5507 = vrot.slane %v5506, 1
    %v5508 = vadd.f32 %v5506, %v5507
    %v5509 = vsel %vm166, %v4943, 0.0
    %v5510 = vrot.slane %v5509, 4
    %v5511 = vadd.f32 %v5509, %v5510
    %v5512 = vrot.slane %v5511, 2
    %v5513 = vadd.f32 %v5511, %v5512
    %v5514 = vrot.slane %v5513, 1
    %v5515 = vadd.f32 %v5513, %v5514
    %v5516 = vsel %vm166, %v4944, 0.0
    %v5517 = vrot.slane %v5516, 4
    %v5518 = vadd.f32 %v5516, %v5517
    %v5519 = vrot.slane %v5518, 2
    %v5520 = vadd.f32 %v5518, %v5519
    %v5521 = vrot.slane %v5520, 1
    %v5522 = vadd.f32 %v5520, %v5521
    %v5523 = vsel %vm166, %v4945, 0.0
    %v5524 = vrot.slane %v5523, 4
    %v5525 = vadd.f32 %v5523, %v5524
    %v5526 = vrot.slane %v5525, 2
    %v5527 = vadd.f32 %v5525, %v5526
    %v5528 = vrot.slane %v5527, 1
    %v5529 = vadd.f32 %v5527, %v5528
    %v5530 = vsel %vm166, %v4946, 0.0
    %v5531 = vrot.slane %v5530, 4
    %v5532 = vadd.f32 %v5530, %v5531
    %v5533 = vrot.slane %v5532, 2
    %v5534 = vadd.f32 %v5532, %v5533
    %v5535 = vrot.slane %v5534, 1
    %v5536 = vadd.f32 %v5534, %v5535
    %v5537 = vsel %vm166, %v4947, 0.0
    %v5538 = vrot.slane %v5537, 4
    %v5539 = vadd.f32 %v5537, %v5538
    %v5540 = vrot.slane %v5539, 2
    %v5541 = vadd.f32 %v5539, %v5540
    %v5542 = vrot.slane %v5541, 1
    %v5543 = vadd.f32 %v5541, %v5542
    %v5544 = vsel %vm166, %v4948, 0.0
    %v5545 = vrot.slane %v5544, 4
    %v5546 = vadd.f32 %v5544, %v5545
    %v5547 = vrot.slane %v5546, 2
    %v5548 = vadd.f32 %v5546, %v5547
    %v5549 = vrot.slane %v5548, 1
    %v5550 = vadd.f32 %v5548, %v5549
    %v5551 = vsel %vm166, %v4949, 0.0
    %v5552 = vrot.slane %v5551, 4
    %v5553 = vadd.f32 %v5551, %v5552
    %v5554 = vrot.slane %v5553, 2
    %v5555 = vadd.f32 %v5553, %v5554
    %v5556 = vrot.slane %v5555, 1
    %v5557 = vadd.f32 %v5555, %v5556
    %v5558 = vsel %vm166, %v4950, 0.0
    %v5559 = vrot.slane %v5558, 4
    %v5560 = vadd.f32 %v5558, %v5559
    %v5561 = vrot.slane %v5560, 2
    %v5562 = vadd.f32 %v5560, %v5561
    %v5563 = vrot.slane %v5562, 1
    %v5564 = vadd.f32 %v5562, %v5563
    %v5565 = vsel %vm166, %v4951, 0.0
    %v5566 = vrot.slane %v5565, 4
    %v5567 = vadd.f32 %v5565, %v5566
    %v5568 = vrot.slane %v5567, 2
    %v5569 = vadd.f32 %v5567, %v5568
    %v5570 = vrot.slane %v5569, 1
    %v5571 = vadd.f32 %v5569, %v5570
    %v5572 = vsel %vm166, %v4952, 0.0
    %v5573 = vrot.slane %v5572, 4
    %v5574 = vadd.f32 %v5572, %v5573
    %v5575 = vrot.slane %v5574, 2
    %v5576 = vadd.f32 %v5574, %v5575
    %v5577 = vrot.slane %v5576, 1
    %v5578 = vadd.f32 %v5576, %v5577
    %v5579 = vsel %vm166, %v4953, 0.0
    %v5580 = vrot.slane %v5579, 4
    %v5581 = vadd.f32 %v5579, %v5580
    %v5582 = vrot.slane %v5581, 2
    %v5583 = vadd.f32 %v5581, %v5582
    %v5584 = vrot.slane %v5583, 1
    %v5585 = vadd.f32 %v5583, %v5584
    %v5586 = vsel %vm166, %v4954, 0.0
    %v5587 = vrot.slane %v5586, 4
    %v5588 = vadd.f32 %v5586, %v5587
    %v5589 = vrot.slane %v5588, 2
    %v5590 = vadd.f32 %v5588, %v5589
    %v5591 = vrot.slane %v5590, 1
    %v5592 = vadd.f32 %v5590, %v5591
    %v5593 = vsel %vm166, %v4955, 0.0
    %v5594 = vrot.slane %v5593, 4
    %v5595 = vadd.f32 %v5593, %v5594
    %v5596 = vrot.slane %v5595, 2
    %v5597 = vadd.f32 %v5595, %v5596
    %v5598 = vrot.slane %v5597, 1
    %v5599 = vadd.f32 %v5597, %v5598
    %v5600 = vsel %vm166, %v4956, 0.0
    %v5601 = vrot.slane %v5600, 4
    %v5602 = vadd.f32 %v5600, %v5601
    %v5603 = vrot.slane %v5602, 2
    %v5604 = vadd.f32 %v5602, %v5603
    %v5605 = vrot.slane %v5604, 1
    %v5606 = vadd.f32 %v5604, %v5605
    %v5607 = vsel %vm166, %v4957, 0.0
    %v5608 = vrot.slane %v5607, 4
    %v5609 = vadd.f32 %v5607, %v5608
    %v5610 = vrot.slane %v5609, 2
    %v5611 = vadd.f32 %v5609, %v5610
    %v5612 = vrot.slane %v5611, 1
    %v5613 = vadd.f32 %v5611, %v5612
    %v5614 = vsel %vm166, %v4958, 0.0
    %v5615 = vrot.slane %v5614, 4
    %v5616 = vadd.f32 %v5614, %v5615
    %v5617 = vrot.slane %v5616, 2
    %v5618 = vadd.f32 %v5616, %v5617
    %v5619 = vrot.slane %v5618, 1
    %v5620 = vadd.f32 %v5618, %v5619
    %v5621 = vsel %vm166, %v4959, 0.0
    %v5622 = vrot.slane %v5621, 4
    %v5623 = vadd.f32 %v5621, %v5622
    %v5624 = vrot.slane %v5623, 2
    %v5625 = vadd.f32 %v5623, %v5624
    %v5626 = vrot.slane %v5625, 1
    %v5627 = vadd.f32 %v5625, %v5626
    %v5628 = vsel %vm166, %v4960, 0.0
    %v5629 = vrot.slane %v5628, 4
    %v5630 = vadd.f32 %v5628, %v5629
    %v5631 = vrot.slane %v5630, 2
    %v5632 = vadd.f32 %v5630, %v5631
    %v5633 = vrot.slane %v5632, 1
    %v5634 = vadd.f32 %v5632, %v5633
    %v5635 = vsel %vm166, %v4961, 0.0
    %v5636 = vrot.slane %v5635, 4
    %v5637 = vadd.f32 %v5635, %v5636
    %v5638 = vrot.slane %v5637, 2
    %v5639 = vadd.f32 %v5637, %v5638
    %v5640 = vrot.slane %v5639, 1
    %v5641 = vadd.f32 %v5639, %v5640
    %v5642 = vsel %vm166, %v4962, 0.0
    %v5643 = vrot.slane %v5642, 4
    %v5644 = vadd.f32 %v5642, %v5643
    %v5645 = vrot.slane %v5644, 2
    %v5646 = vadd.f32 %v5644, %v5645
    %v5647 = vrot.slane %v5646, 1
    %v5648 = vadd.f32 %v5646, %v5647
    %v5649 = vsel %vm166, %v4963, 0.0
    %v5650 = vrot.slane %v5649, 4
    %v5651 = vadd.f32 %v5649, %v5650
    %v5652 = vrot.slane %v5651, 2
    %v5653 = vadd.f32 %v5651, %v5652
    %v5654 = vrot.slane %v5653, 1
    %v5655 = vadd.f32 %v5653, %v5654
    %v5656 = vsel %vm166, %v4964, 0.0
    %v5657 = vrot.slane %v5656, 4
    %v5658 = vadd.f32 %v5656, %v5657
    %v5659 = vrot.slane %v5658, 2
    %v5660 = vadd.f32 %v5658, %v5659
    %v5661 = vrot.slane %v5660, 1
    %v5662 = vadd.f32 %v5660, %v5661
    %v5663 = vsel %vm166, %v4965, 0.0
    %v5664 = vrot.slane %v5663, 4
    %v5665 = vadd.f32 %v5663, %v5664
    %v5666 = vrot.slane %v5665, 2
    %v5667 = vadd.f32 %v5665, %v5666
    %v5668 = vrot.slane %v5667, 1
    %v5669 = vadd.f32 %v5667, %v5668
    %v5670 = vsel %vm166, %v4966, 0.0
    %v5671 = vrot.slane %v5670, 4
    %v5672 = vadd.f32 %v5670, %v5671
    %v5673 = vrot.slane %v5672, 2
    %v5674 = vadd.f32 %v5672, %v5673
    %v5675 = vrot.slane %v5674, 1
    %v5676 = vadd.f32 %v5674, %v5675
    %v5677 = vsel %vm166, %v4967, 0.0
    %v5678 = vrot.slane %v5677, 4
    %v5679 = vadd.f32 %v5677, %v5678
    %v5680 = vrot.slane %v5679, 2
    %v5681 = vadd.f32 %v5679, %v5680
    %v5682 = vrot.slane %v5681, 1
    %v5683 = vadd.f32 %v5681, %v5682
    %v5684 = vsel %vm166, %v4968, 0.0
    %v5685 = vrot.slane %v5684, 4
    %v5686 = vadd.f32 %v5684, %v5685
    %v5687 = vrot.slane %v5686, 2
    %v5688 = vadd.f32 %v5686, %v5687
    %v5689 = vrot.slane %v5688, 1
    %v5690 = vadd.f32 %v5688, %v5689
    %v5691 = vsel %vm166, %v4969, 0.0
    %v5692 = vrot.slane %v5691, 4
    %v5693 = vadd.f32 %v5691, %v5692
    %v5694 = vrot.slane %v5693, 2
    %v5695 = vadd.f32 %v5693, %v5694
    %v5696 = vrot.slane %v5695, 1
    %v5697 = vadd.f32 %v5695, %v5696
    %v5698 = vsel %vm166, %v4970, 0.0
    %v5699 = vrot.slane %v5698, 4
    %v5700 = vadd.f32 %v5698, %v5699
    %v5701 = vrot.slane %v5700, 2
    %v5702 = vadd.f32 %v5700, %v5701
    %v5703 = vrot.slane %v5702, 1
    %v5704 = vadd.f32 %v5702, %v5703
    %v5705 = vsel %vm166, %v4971, 0.0
    %v5706 = vrot.slane %v5705, 4
    %v5707 = vadd.f32 %v5705, %v5706
    %v5708 = vrot.slane %v5707, 2
    %v5709 = vadd.f32 %v5707, %v5708
    %v5710 = vrot.slane %v5709, 1
    %v5711 = vadd.f32 %v5709, %v5710
    %v5712 = vsel %vm166, %v4972, 0.0
    %v5713 = vrot.slane %v5712, 4
    %v5714 = vadd.f32 %v5712, %v5713
    %v5715 = vrot.slane %v5714, 2
    %v5716 = vadd.f32 %v5714, %v5715
    %v5717 = vrot.slane %v5716, 1
    %v5718 = vadd.f32 %v5716, %v5717
    %v5719 = vsel %vm166, %v4973, 0.0
    %v5720 = vrot.slane %v5719, 4
    %v5721 = vadd.f32 %v5719, %v5720
    %v5722 = vrot.slane %v5721, 2
    %v5723 = vadd.f32 %v5721, %v5722
    %v5724 = vrot.slane %v5723, 1
    %v5725 = vadd.f32 %v5723, %v5724
    %v5726 = vsel %vm166, %v4974, 0.0
    %v5727 = vrot.slane %v5726, 4
    %v5728 = vadd.f32 %v5726, %v5727
    %v5729 = vrot.slane %v5728, 2
    %v5730 = vadd.f32 %v5728, %v5729
    %v5731 = vrot.slane %v5730, 1
    %v5732 = vadd.f32 %v5730, %v5731
    %v5733 = vsel %vm166, %v4975, 0.0
    %v5734 = vrot.slane %v5733, 4
    %v5735 = vadd.f32 %v5733, %v5734
    %v5736 = vrot.slane %v5735, 2
    %v5737 = vadd.f32 %v5735, %v5736
    %v5738 = vrot.slane %v5737, 1
    %v5739 = vadd.f32 %v5737, %v5738
    %v5740 = vsel %vm166, %v4976, 0.0
    %v5741 = vrot.slane %v5740, 4
    %v5742 = vadd.f32 %v5740, %v5741
    %v5743 = vrot.slane %v5742, 2
    %v5744 = vadd.f32 %v5742, %v5743
    %v5745 = vrot.slane %v5744, 1
    %v5746 = vadd.f32 %v5744, %v5745
    %v5747 = vsel %vm166, %v4977, 0.0
    %v5748 = vrot.slane %v5747, 4
    %v5749 = vadd.f32 %v5747, %v5748
    %v5750 = vrot.slane %v5749, 2
    %v5751 = vadd.f32 %v5749, %v5750
    %v5752 = vrot.slane %v5751, 1
    %v5753 = vadd.f32 %v5751, %v5752
    %v5754 = vsel %vm166, %v4978, 0.0
    %v5755 = vrot.slane %v5754, 4
    %v5756 = vadd.f32 %v5754, %v5755
    %v5757 = vrot.slane %v5756, 2
    %v5758 = vadd.f32 %v5756, %v5757
    %v5759 = vrot.slane %v5758, 1
    %v5760 = vadd.f32 %v5758, %v5759
    %v5761 = vsel %vm166, %v4979, 0.0
    %v5762 = vrot.slane %v5761, 4
    %v5763 = vadd.f32 %v5761, %v5762
    %v5764 = vrot.slane %v5763, 2
    %v5765 = vadd.f32 %v5763, %v5764
    %v5766 = vrot.slane %v5765, 1
    %v5767 = vadd.f32 %v5765, %v5766
    %v5768 = vsel %vm166, %v4980, 0.0
    %v5769 = vrot.slane %v5768, 4
    %v5770 = vadd.f32 %v5768, %v5769
    %v5771 = vrot.slane %v5770, 2
    %v5772 = vadd.f32 %v5770, %v5771
    %v5773 = vrot.slane %v5772, 1
    %v5774 = vadd.f32 %v5772, %v5773
    %v5775 = vsel %vm166, %v4981, 0.0
    %v5776 = vrot.slane %v5775, 4
    %v5777 = vadd.f32 %v5775, %v5776
    %v5778 = vrot.slane %v5777, 2
    %v5779 = vadd.f32 %v5777, %v5778
    %v5780 = vrot.slane %v5779, 1
    %v5781 = vadd.f32 %v5779, %v5780
    %v5782 = vsel %vm166, %v4982, 0.0
    %v5783 = vrot.slane %v5782, 4
    %v5784 = vadd.f32 %v5782, %v5783
    %v5785 = vrot.slane %v5784, 2
    %v5786 = vadd.f32 %v5784, %v5785
    %v5787 = vrot.slane %v5786, 1
    %v5788 = vadd.f32 %v5786, %v5787
    %v5789 = vsel %vm166, %v4983, 0.0
    %v5790 = vrot.slane %v5789, 4
    %v5791 = vadd.f32 %v5789, %v5790
    %v5792 = vrot.slane %v5791, 2
    %v5793 = vadd.f32 %v5791, %v5792
    %v5794 = vrot.slane %v5793, 1
    %v5795 = vadd.f32 %v5793, %v5794
    %v5796 = vsel %vm166, %v4984, 0.0
    %v5797 = vrot.slane %v5796, 4
    %v5798 = vadd.f32 %v5796, %v5797
    %v5799 = vrot.slane %v5798, 2
    %v5800 = vadd.f32 %v5798, %v5799
    %v5801 = vrot.slane %v5800, 1
    %v5802 = vadd.f32 %v5800, %v5801
    %v5803 = vsel %vm166, %v4985, 0.0
    %v5804 = vrot.slane %v5803, 4
    %v5805 = vadd.f32 %v5803, %v5804
    %v5806 = vrot.slane %v5805, 2
    %v5807 = vadd.f32 %v5805, %v5806
    %v5808 = vrot.slane %v5807, 1
    %v5809 = vadd.f32 %v5807, %v5808
    %v5810 = vsel %vm166, %v4986, 0.0
    %v5811 = vrot.slane %v5810, 4
    %v5812 = vadd.f32 %v5810, %v5811
    %v5813 = vrot.slane %v5812, 2
    %v5814 = vadd.f32 %v5812, %v5813
    %v5815 = vrot.slane %v5814, 1
    %v5816 = vadd.f32 %v5814, %v5815
    %v5817 = vsel %vm166, %v4987, 0.0
    %v5818 = vrot.slane %v5817, 4
    %v5819 = vadd.f32 %v5817, %v5818
    %v5820 = vrot.slane %v5819, 2
    %v5821 = vadd.f32 %v5819, %v5820
    %v5822 = vrot.slane %v5821, 1
    %v5823 = vadd.f32 %v5821, %v5822
    %v5824 = vsel %vm166, %v4988, 0.0
    %v5825 = vrot.slane %v5824, 4
    %v5826 = vadd.f32 %v5824, %v5825
    %v5827 = vrot.slane %v5826, 2
    %v5828 = vadd.f32 %v5826, %v5827
    %v5829 = vrot.slane %v5828, 1
    %v5830 = vadd.f32 %v5828, %v5829
    %v5831 = vsel %vm166, %v4989, 0.0
    %v5832 = vrot.slane %v5831, 4
    %v5833 = vadd.f32 %v5831, %v5832
    %v5834 = vrot.slane %v5833, 2
    %v5835 = vadd.f32 %v5833, %v5834
    %v5836 = vrot.slane %v5835, 1
    %v5837 = vadd.f32 %v5835, %v5836
    %v5838 = vsel %vm166, %v4990, 0.0
    %v5839 = vrot.slane %v5838, 4
    %v5840 = vadd.f32 %v5838, %v5839
    %v5841 = vrot.slane %v5840, 2
    %v5842 = vadd.f32 %v5840, %v5841
    %v5843 = vrot.slane %v5842, 1
    %v5844 = vadd.f32 %v5842, %v5843
    %v5845 = vsel %vm166, %v4991, 0.0
    %v5846 = vrot.slane %v5845, 4
    %v5847 = vadd.f32 %v5845, %v5846
    %v5848 = vrot.slane %v5847, 2
    %v5849 = vadd.f32 %v5847, %v5848
    %v5850 = vrot.slane %v5849, 1
    %v5851 = vadd.f32 %v5849, %v5850
    %v5852 = vsel %vm166, %v4992, 0.0
    %v5853 = vrot.slane %v5852, 4
    %v5854 = vadd.f32 %v5852, %v5853
    %v5855 = vrot.slane %v5854, 2
    %v5856 = vadd.f32 %v5854, %v5855
    %v5857 = vrot.slane %v5856, 1
    %v5858 = vadd.f32 %v5856, %v5857
    %v5859 = vsel %vm166, %v4993, 0.0
    %v5860 = vrot.slane %v5859, 4
    %v5861 = vadd.f32 %v5859, %v5860
    %v5862 = vrot.slane %v5861, 2
    %v5863 = vadd.f32 %v5861, %v5862
    %v5864 = vrot.slane %v5863, 1
    %v5865 = vadd.f32 %v5863, %v5864
    %v5866 = vsel %vm166, %v4994, 0.0
    %v5867 = vrot.slane %v5866, 4
    %v5868 = vadd.f32 %v5866, %v5867
    %v5869 = vrot.slane %v5868, 2
    %v5870 = vadd.f32 %v5868, %v5869
    %v5871 = vrot.slane %v5870, 1
    %v5872 = vadd.f32 %v5870, %v5871
    %v5873 = vsel %vm166, %v4995, 0.0
    %v5874 = vrot.slane %v5873, 4
    %v5875 = vadd.f32 %v5873, %v5874
    %v5876 = vrot.slane %v5875, 2
    %v5877 = vadd.f32 %v5875, %v5876
    %v5878 = vrot.slane %v5877, 1
    %v5879 = vadd.f32 %v5877, %v5878
    %v5880 = vsel %vm166, %v4996, 0.0
    %v5881 = vrot.slane %v5880, 4
    %v5882 = vadd.f32 %v5880, %v5881
    %v5883 = vrot.slane %v5882, 2
    %v5884 = vadd.f32 %v5882, %v5883
    %v5885 = vrot.slane %v5884, 1
    %v5886 = vadd.f32 %v5884, %v5885
    %v5887 = vsel %vm166, %v4997, 0.0
    %v5888 = vrot.slane %v5887, 4
    %v5889 = vadd.f32 %v5887, %v5888
    %v5890 = vrot.slane %v5889, 2
    %v5891 = vadd.f32 %v5889, %v5890
    %v5892 = vrot.slane %v5891, 1
    %v5893 = vadd.f32 %v5891, %v5892
    %v5894 = vld [vmem:[%s5] sm:$0xff]
    %v5895 = vld [vmem:[%s5 + $0x8] sm:$0xff]
    %v5896 = vld [vmem:[%s5 + $0x10] sm:$0xff]
    %v5897 = vld [vmem:[%s5 + $0x18] sm:$0xff]
    %v5898 = vld [vmem:[%s6] sm:$0x1]
    %v5900 = vlaneseq
    %v5901 = vshrl.u32 %v5900, 7
    %v5902 = vsub.s32 0, %v5901
    %v5903 = vrot.slane %v5898, %v5902
    %v6033 = vsel %vm3582, %v5011, %v5004
    %v6034 = vsel %vm3584, %v5018, %v6033
    %v6035 = vsel %vm3586, %v5025, %v6034
    %v6036 = vsel %vm3588, %v5032, %v6035
    %v6037 = vsel %vm3590, %v5039, %v6036
    %v6038 = vsel %vm3592, %v5046, %v6037
    %v6039 = vsel %vm3594, %v5053, %v6038
    %v6040 = vsel %vm3582, %v5067, %v5060
    %v6041 = vsel %vm3584, %v5074, %v6040
    %v6042 = vsel %vm3586, %v5081, %v6041
    %v6043 = vsel %vm3588, %v5088, %v6042
    %v6044 = vsel %vm3590, %v5095, %v6043
    %v6045 = vsel %vm3592, %v5102, %v6044
    %v6046 = vsel %vm3594, %v5109, %v6045
    %v6047 = vsel %vm3582, %v5123, %v5116
    %v6048 = vsel %vm3584, %v5130, %v6047
    %v6049 = vsel %vm3586, %v5137, %v6048
    %v6050 = vsel %vm3588, %v5144, %v6049
    %v6051 = vsel %vm3590, %v5151, %v6050
    %v6052 = vsel %vm3592, %v5158, %v6051
    %v6053 = vsel %vm3594, %v5165, %v6052
    %v6054 = vsel %vm3582, %v5179, %v5172
    %v6055 = vsel %vm3584, %v5186, %v6054
    %v6056 = vsel %vm3586, %v5193, %v6055
    %v6057 = vsel %vm3588, %v5200, %v6056
    %v6058 = vsel %vm3590, %v5207, %v6057
    %v6059 = vsel %vm3592, %v5214, %v6058
    %v6060 = vsel %vm3594, %v5221, %v6059
    %v6061 = vsel %vm3582, %v5235, %v5228
    %v6062 = vsel %vm3584, %v5242, %v6061
    %v6063 = vsel %vm3586, %v5249, %v6062
    %v6064 = vsel %vm3588, %v5256, %v6063
    %v6065 = vsel %vm3590, %v5263, %v6064
    %v6066 = vsel %vm3592, %v5270, %v6065
    %v6067 = vsel %vm3594, %v5277, %v6066
    %v6068 = vsel %vm3582, %v5291, %v5284
    %v6069 = vsel %vm3584, %v5298, %v6068
    %v6070 = vsel %vm3586, %v5305, %v6069
    %v6071 = vsel %vm3588, %v5312, %v6070
    %v6072 = vsel %vm3590, %v5319, %v6071
    %v6073 = vsel %vm3592, %v5326, %v6072
    %v6074 = vsel %vm3594, %v5333, %v6073
    %v6075 = vsel %vm3582, %v5347, %v5340
    %v6076 = vsel %vm3584, %v5354, %v6075
    %v6077 = vsel %vm3586, %v5361, %v6076
    %v6078 = vsel %vm3588, %v5368, %v6077
    %v6079 = vsel %vm3590, %v5375, %v6078
    %v6080 = vsel %vm3592, %v5382, %v6079
    %v6081 = vsel %vm3594, %v5389, %v6080
    %v6082 = vsel %vm3582, %v5403, %v5396
    %v6083 = vsel %vm3584, %v5410, %v6082
    %v6084 = vsel %vm3586, %v5417, %v6083
    %v6085 = vsel %vm3588, %v5424, %v6084
    %v6086 = vsel %vm3590, %v5431, %v6085
    %v6087 = vsel %vm3592, %v5438, %v6086
    %v6088 = vsel %vm3594, %v5445, %v6087
    %v6089 = vsel %vm3582, %v5459, %v5452
    %v6090 = vsel %vm3584, %v5466, %v6089
    %v6091 = vsel %vm3586, %v5473, %v6090
    %v6092 = vsel %vm3588, %v5480, %v6091
    %v6093 = vsel %vm3590, %v5487, %v6092
    %v6094 = vsel %vm3592, %v5494, %v6093
    %v6095 = vsel %vm3594, %v5501, %v6094
    %v6096 = vsel %vm3582, %v5515, %v5508
    %v6097 = vsel %vm3584, %v5522, %v6096
    %v6098 = vsel %vm3586, %v5529, %v6097
    %v6099 = vsel %vm3588, %v5536, %v6098
    %v6100 = vsel %vm3590, %v5543, %v6099
    %v6101 = vsel %vm3592, %v5550, %v6100
    %v6102 = vsel %vm3594, %v5557, %v6101
    %v6103 = vsel %vm3582, %v5571, %v5564
    %v6104 = vsel %vm3584, %v5578, %v6103
    %v6105 = vsel %vm3586, %v5585, %v6104
    %v6106 = vsel %vm3588, %v5592, %v6105
    %v6107 = vsel %vm3590, %v5599, %v6106
    %v6108 = vsel %vm3592, %v5606, %v6107
    %v6109 = vsel %vm3594, %v5613, %v6108
    %v6110 = vsel %vm3582, %v5627, %v5620
    %v6111 = vsel %vm3584, %v5634, %v6110
    %v6112 = vsel %vm3586, %v5641, %v6111
    %v6113 = vsel %vm3588, %v5648, %v6112
    %v6114 = vsel %vm3590, %v5655, %v6113
    %v6115 = vsel %vm3592, %v5662, %v6114
    %v6116 = vsel %vm3594, %v5669, %v6115
    %v6117 = vsel %vm3582, %v5683, %v5676
    %v6118 = vsel %vm3584, %v5690, %v6117
    %v6119 = vsel %vm3586, %v5697, %v6118
    %v6120 = vsel %vm3588, %v5704, %v6119
    %v6121 = vsel %vm3590, %v5711, %v6120
    %v6122 = vsel %vm3592, %v5718, %v6121
    %v6123 = vsel %vm3594, %v5725, %v6122
    %v6124 = vsel %vm3582, %v5739, %v5732
    %v6125 = vsel %vm3584, %v5746, %v6124
    %v6126 = vsel %vm3586, %v5753, %v6125
    %v6127 = vsel %vm3588, %v5760, %v6126
    %v6128 = vsel %vm3590, %v5767, %v6127
    %v6129 = vsel %vm3592, %v5774, %v6128
    %v6130 = vsel %vm3594, %v5781, %v6129
    %v6131 = vsel %vm3582, %v5795, %v5788
    %v6132 = vsel %vm3584, %v5802, %v6131
    %v6133 = vsel %vm3586, %v5809, %v6132
    %v6134 = vsel %vm3588, %v5816, %v6133
    %v6135 = vsel %vm3590, %v5823, %v6134
    %v6136 = vsel %vm3592, %v5830, %v6135
    %v6137 = vsel %vm3594, %v5837, %v6136
    %v6138 = vsel %vm3582, %v5851, %v5844
    %v6139 = vsel %vm3584, %v5858, %v6138
    %v6140 = vsel %vm3586, %v5865, %v6139
    %v6141 = vsel %vm3588, %v5872, %v6140
    %v6142 = vsel %vm3590, %v5879, %v6141
    %v6143 = vsel %vm3592, %v5886, %v6142
    %v6144 = vsel %vm3594, %v5893, %v6143
    %v6145 = vsel %vm166, %v6039, 0
    %v6147 = vsel %vm166, %v6046, 0
    %v6149 = vsel %vm166, %v6053, 0
    %v6151 = vsel %vm166, %v6060, 0
    %v6153 = vsel %vm166, %v6067, 0
    %v6155 = vsel %vm166, %v6074, 0
    %v6157 = vsel %vm166, %v6081, 0
    %v6159 = vsel %vm166, %v6088, 0
    %v6161 = vsel %vm166, %v6095, 0
    %v6163 = vsel %vm166, %v6102, 0
    %v6165 = vsel %vm166, %v6109, 0
    %v6167 = vsel %vm166, %v6116, 0
    %v6169 = vsel %vm166, %v6123, 0
    %v6171 = vsel %vm166, %v6130, 0
    %v6173 = vsel %vm166, %v6137, 0
    %v6175 = vsel %vm166, %v6144, 0
    %6177 = vmatprep.subr.mxu0 0.0
    %6178 = vmatpush1.msra.mxu0 0.0
    %6179 = vmatprep.subr.mxu0 0.0
    %6180 = vmatpush1.msra.mxu0 0.0
    %6181 = vmatprep.subr.mxu0 0.0
    %6182 = vmatpush1.msra.mxu0 0.0
    %6183 = vmatprep.subr.mxu0 0.0
    %6184 = vmatpush1.msra.mxu0 0.0
    %6185 = vmatprep.subr.mxu0 0.0
    %6186 = vmatpush1.msra.mxu0 0.0
    %6187 = vmatprep.subr.mxu0 0.0
    %6188 = vmatpush1.msra.mxu0 0.0
    %6189 = vmatprep.subr.mxu0 0.0
    %6190 = vmatpush1.msra.mxu0 0.0
    %6191 = vmatprep.subr.mxu0 0.0
    %6192 = vmatpush1.msra.mxu0 0.0
    %6193 = vmatprep.subr.mxu0 0.0
    %6194 = vmatpush1.msra.mxu0 0.0
    %6195 = vmatprep.subr.mxu0 0.0
    %6196 = vmatpush1.msra.mxu0 0.0
    %6197 = vmatprep.subr.mxu0 0.0
    %6198 = vmatpush1.msra.mxu0 0.0
    %6199 = vmatprep.subr.mxu0 0.0
    %6200 = vmatpush1.msra.mxu0 0.0
    %6201 = vmatprep.subr.mxu0 0.0
    %6202 = vmatpush1.msra.mxu0 %v5897
    %6203 = vmatprep.subr.mxu0 0.0
    %6204 = vmatpush1.msra.mxu0 %v5896
    %6205 = vmatprep.subr.mxu0 0.0
    %6206 = vmatpush1.msra.mxu0 %v5895
    %6207 = vmatprep.subr.mxu0 0.0
    %6208 = vmatpush1.msra.mxu0 %v5894
    %6209 = vmatprep.subr.mxu0 0.0
    %6210 = vmatpush2.msra.mxu0 0.0
    %6211 = vmatprep.subr.mxu0 0.0
    %6212 = vmatpush2.msra.mxu0 0.0
    %6213 = vmatprep.subr.mxu0 0.0
    %6214 = vmatpush2.msra.mxu0 0.0
    %6215 = vmatprep.subr.mxu0 0.0
    %6216 = vmatpush2.msra.mxu0 0.0
    %6217 = vmatprep.subr.mxu0 0.0
    %6218 = vmatpush2.msra.mxu0 0.0
    %6219 = vmatprep.subr.mxu0 0.0
    %6220 = vmatpush2.msra.mxu0 0.0
    %6221 = vmatprep.subr.mxu0 0.0
    %6222 = vmatpush2.msra.mxu0 0.0
    %6223 = vmatprep.subr.mxu0 0.0
    %6224 = vmatpush2.msra.mxu0 0.0
    %6225 = vmatprep.subr.mxu0 0.0
    %6226 = vmatpush2.msra.mxu0 0.0
    %6227 = vmatprep.subr.mxu0 0.0
    %6228 = vmatpush2.msra.mxu0 0.0
    %6229 = vmatprep.subr.mxu0 0.0
    %6230 = vmatpush2.msra.mxu0 0.0
    %6231 = vmatprep.subr.mxu0 0.0
    %6232 = vmatpush2.msra.mxu0 0.0
    %6233 = vmatprep.subr.mxu0 0.0
    %6234 = vmatpush2.msra.mxu0 0.0
    %6235 = vmatprep.subr.mxu0 0.0
    %6236 = vmatpush2.msra.mxu0 0.0
    %6237 = vmatprep.subr.mxu0 0.0
    %6238 = vmatpush2.msra.mxu0 0.0
    %6239 = vmatprep.subr.mxu0 0.0
    %6240 = vmatpush2.msra.mxu0 0.0
    %6241 = vmatprep.mubr.f32.mxu0 0.0
    %6242 = vmatmul.mubr.f32.gmra.mxu0 %v6145
    %v6243 = vpop.f32.mrf.mxu0
    %v6244 = vadd.f32 %v5903, %v6243
    %v6245 = vpop.f32.mrf.mxu0
    %6246 = vmatprep.mubr.f32.mxu0 0.0
    %6247 = vmatmul.mubr.f32.gmra.mxu0 %v6147
    %v6248 = vpop.f32.mrf.mxu0
    %v6249 = vadd.f32 %v5903, %v6248
    %v6250 = vpop.f32.mrf.mxu0
    %6251 = vmatprep.mubr.f32.mxu0 0.0
    %6252 = vmatmul.mubr.f32.gmra.mxu0 %v6149
    %v6253 = vpop.f32.mrf.mxu0
    %v6254 = vadd.f32 %v5903, %v6253
    %v6255 = vpop.f32.mrf.mxu0
    %6256 = vmatprep.mubr.f32.mxu0 0.0
    %6257 = vmatmul.mubr.f32.gmra.mxu0 %v6151
    %v6258 = vpop.f32.mrf.mxu0
    %v6259 = vadd.f32 %v5903, %v6258
    %v6260 = vpop.f32.mrf.mxu0
    %6261 = vmatprep.mubr.f32.mxu0 0.0
    %6262 = vmatmul.mubr.f32.gmra.mxu0 %v6153
    %v6263 = vpop.f32.mrf.mxu0
    %v6264 = vadd.f32 %v5903, %v6263
    %v6265 = vpop.f32.mrf.mxu0
    %6266 = vmatprep.mubr.f32.mxu0 0.0
    %6267 = vmatmul.mubr.f32.gmra.mxu0 %v6155
    %v6268 = vpop.f32.mrf.mxu0
    %v6269 = vadd.f32 %v5903, %v6268
    %v6270 = vpop.f32.mrf.mxu0
    %6271 = vmatprep.mubr.f32.mxu0 0.0
    %6272 = vmatmul.mubr.f32.gmra.mxu0 %v6157
    %v6273 = vpop.f32.mrf.mxu0
    %v6274 = vadd.f32 %v5903, %v6273
    %v6275 = vpop.f32.mrf.mxu0
    %6276 = vmatprep.mubr.f32.mxu0 0.0
    %6277 = vmatmul.mubr.f32.gmra.mxu0 %v6159
    %v6278 = vpop.f32.mrf.mxu0
    %v6279 = vadd.f32 %v5903, %v6278
    %v6280 = vpop.f32.mrf.mxu0
    %6281 = vmatprep.mubr.f32.mxu0 0.0
    %6282 = vmatmul.mubr.f32.gmra.mxu0 %v6161
    %v6283 = vpop.f32.mrf.mxu0
    %v6284 = vadd.f32 %v5903, %v6283
    %v6285 = vpop.f32.mrf.mxu0
    %6286 = vmatprep.mubr.f32.mxu0 0.0
    %6287 = vmatmul.mubr.f32.gmra.mxu0 %v6163
    %v6288 = vpop.f32.mrf.mxu0
    %v6289 = vadd.f32 %v5903, %v6288
    %v6290 = vpop.f32.mrf.mxu0
    %6291 = vmatprep.mubr.f32.mxu0 0.0
    %6292 = vmatmul.mubr.f32.gmra.mxu0 %v6165
    %v6293 = vpop.f32.mrf.mxu0
    %v6294 = vadd.f32 %v5903, %v6293
    %v6295 = vpop.f32.mrf.mxu0
    %6296 = vmatprep.mubr.f32.mxu0 0.0
    %6297 = vmatmul.mubr.f32.gmra.mxu0 %v6167
    %v6298 = vpop.f32.mrf.mxu0
    %v6299 = vadd.f32 %v5903, %v6298
    %v6300 = vpop.f32.mrf.mxu0
    %6301 = vmatprep.mubr.f32.mxu0 0.0
    %6302 = vmatmul.mubr.f32.gmra.mxu0 %v6169
    %v6303 = vpop.f32.mrf.mxu0
    %v6304 = vadd.f32 %v5903, %v6303
    %v6305 = vpop.f32.mrf.mxu0
    %6306 = vmatprep.mubr.f32.mxu0 0.0
    %6307 = vmatmul.mubr.f32.gmra.mxu0 %v6171
    %v6308 = vpop.f32.mrf.mxu0
    %v6309 = vadd.f32 %v5903, %v6308
    %v6310 = vpop.f32.mrf.mxu0
    %6311 = vmatprep.mubr.f32.mxu0 0.0
    %6312 = vmatmul.mubr.f32.gmra.mxu0 %v6173
    %v6313 = vpop.f32.mrf.mxu0
    %v6314 = vadd.f32 %v5903, %v6313
    %v6315 = vpop.f32.mrf.mxu0
    %6316 = vmatprep.mubr.f32.mxu0 0.0
    %6317 = vmatmul.mubr.f32.gmra.mxu0 %v6175
    %v6318 = vpop.f32.mrf.mxu0
    %v6319 = vadd.f32 %v5903, %v6318
    %v6320 = vpop.f32.mrf.mxu0
    %6321 = vdwg.mxu0
    %6322 = vxpose.xlu0.b32.start [1/16] %v6244, 128
    %6323 = vxpose.xlu0.b32.cont [2/16] %v6249, 128
    %6324 = vxpose.xlu0.b32.cont [3/16] %v6254, 128
    %6325 = vxpose.xlu0.b32.cont [4/16] %v6259, 128
    %6326 = vxpose.xlu0.b32.cont [5/16] %v6264, 128
    %6327 = vxpose.xlu0.b32.cont [6/16] %v6269, 128
    %6328 = vxpose.xlu0.b32.cont [7/16] %v6274, 128
    %6329 = vxpose.xlu0.b32.cont [8/16] %v6279, 128
    %6330 = vxpose.xlu0.b32.cont [9/16] %v6284, 128
    %6331 = vxpose.xlu0.b32.cont [10/16] %v6289, 128
    %6332 = vxpose.xlu0.b32.cont [11/16] %v6294, 128
    %6333 = vxpose.xlu0.b32.cont [12/16] %v6299, 128
    %6334 = vxpose.xlu0.b32.cont [13/16] %v6304, 128
    %6335 = vxpose.xlu0.b32.cont [14/16] %v6309, 128
    %6336 = vxpose.xlu0.b32.cont [15/16] %v6314, 128
    %6337 = vxpose.xlu0.b32.end [16/16] %v6319, 128
    %v6338 = vpop.trf.xlu0
    %v6339 = vpop.trf.xlu0
    %v6340 = vpop.trf.xlu0
    %v6341 = vpop.trf.xlu0
    %v6342 = vpop.trf.xlu0
    %v6343 = vpop.trf.xlu0
    %v6344 = vpop.trf.xlu0
    %v6345 = vpop.trf.xlu0
    %v6346 = vpop.trf.xlu0
    %v6347 = vpop.trf.xlu0
    %v6348 = vpop.trf.xlu0
    %v6349 = vpop.trf.xlu0
    %v6350 = vpop.trf.xlu0
    %v6351 = vpop.trf.xlu0
    %v6352 = vpop.trf.xlu0
    %v6353 = vpop.trf.xlu0
    %6354 = vst [vmem:[#allocation2] sm:$0xff] %v6338
    %6355 = vst [vmem:[#allocation2 + $0x8] sm:$0xff] %v6339
    // Predicated region
    $region30: #{tpu_custom_call.1} parent=1 // pred_check
      _
    $region31: #{tpu_custom_call.1} parent=1 // pred_check_branch
      %6357 = sbr.rel (0) target = $region33
    $region32: #{tpu_custom_call.1} parent=1 // pred_region
      %s6359 = ssub.s32 256, 256
      %6360 = vsyncadd [#allocation3], %s6359
      %s6361 = sshll.u32 [#allocation2], 4
      %s6362 = int_to_ptr.vmem [resolvable:$true] %s6361
      %6367 = dma.vmem_to_hbm [thread:$0]  %s6362, 256, %s7, [#allocation3], 128, 128, 8
    $region33: #{tpu_custom_call.1} parent=1 // pred_fallthru
      _
    // Predicated region
    $region34: #{tpu_custom_call.1} parent=1 // pred_check
      _
    $region35: #{tpu_custom_call.1} parent=1 // pred_check_branch
      %6369 = sbr.rel (0) target = $region37
    $region36: #{tpu_custom_call.1} parent=1 // pred_region
      %6370 = dma.done [#allocation3], 256
    $region37: #{tpu_custom_call.1} parent=1 // pred_fallthru
      _
    %6371 = vsyncpa [#allocation3], 1

</llo_original>
